<compile_context>
chip_gen: v7x
topology: tpu7x:2x2x1
jax: 0.10.0
libtpu: 0.0.40
codegen_flags: <defaults>
</compile_context>

<pallas_src>
import functools
import math

import jax
import jax.numpy as jnp
from jax import lax
from jax.experimental import pallas as pl
from jax.experimental.pallas import tpu as pltpu


# ----------------------------- fused encoder kernel --------------------------

def _encoder_kernel(
    emb_ref, emb_g_ref, emb_b_ref,
    wqkv_ref, bqkv_ref, wo_ref, bo_ref, ln1_g_ref, ln1_b_ref,
    w1_ref, b1_ref, w2_ref, b2_ref, ln2_g_ref, ln2_b_ref,
    out_ref,
    x_sc,
    *, B, S, num_heads, head_dim,
):
    l = pl.program_id(0)
    L = pl.num_programs(0)
    H = num_heads * head_dim
    BS = B * S
    inv_sqrt_d = 1.0 / math.sqrt(head_dim)

    def layer_norm(h, g, b):
        # LayerNorm over the last axis, eps = 1e-12 (BERT default), f32 math.
        mu = jnp.mean(h, axis=-1, keepdims=True)
        var = jnp.mean(jnp.square(h - mu), axis=-1, keepdims=True)
        return (h - mu) * lax.rsqrt(var + 1e-12) * g + b

    # ---- layer 0: embedding LayerNorm initializes the resident hidden state ----
    @pl.when(l == 0)
    def _():
        x_sc[...] = layer_norm(emb_ref[...], emb_g_ref[...], emb_b_ref[...])

    x = x_sc[...]                                             # [BS, H], f32, VMEM-resident

    # ---- fused Q/K/V projection: one [H, 3H] matmul ----
    qkv = (jnp.dot(x, wqkv_ref[0], preferred_element_type=jnp.float32)
           + bqkv_ref[0])                                     # [BS, 3H]

    # Split Q/K/V once (not per head); fold the attention scale into Q.
    q_all = qkv[:, :H] * inv_sqrt_d                           # [BS, H]
    k_all = qkv[:, H:2 * H]                                   # [BS, H]
    v_all = qkv[:, 2 * H:]                                    # [BS, H]

    # ---- multi-head attention, heads split/merged in VMEM ----
    wo = wo_ref[0]                                            # [H, H]
    attn_out = jnp.zeros((BS, H), jnp.float32) + bo_ref[0]    # seed with output bias
    for h in range(num_heads):
        lo = h * head_dim
        hi = lo + head_dim
        q = q_all[:, lo:hi].reshape(B, S, head_dim)
        k = k_all[:, lo:hi].reshape(B, S, head_dim)
        v = v_all[:, lo:hi].reshape(B, S, head_dim)

        s = jnp.einsum("bqd,bkd->bqk", q, k,
                       preferred_element_type=jnp.float32)    # [B, S, S]
        s = s - jnp.max(s, axis=-1, keepdims=True)
        p = jnp.exp(s)
        p = p * pl.reciprocal(jnp.sum(p, axis=-1, keepdims=True), approx=True)
        ctx = jnp.einsum("bqk,bkd->bqd", p, v,
                         preferred_element_type=jnp.float32)  # [B, S, D]

        # concat-over-heads @ Wo  ==  sum_h ctx_h @ Wo[h*D:(h+1)*D, :]
        attn_out = attn_out + jnp.dot(ctx.reshape(BS, head_dim), wo[lo:hi, :],
                                      preferred_element_type=jnp.float32)

    # ---- residual + LayerNorm 1 ----
    x = layer_norm(x + attn_out, ln1_g_ref[0], ln1_b_ref[0])

    # ---- FFN: gelu(x @ W1 + b1) @ W2 + b2  (exact erf GELU, as in BERT) ----
    h1 = jnp.dot(x, w1_ref[0], preferred_element_type=jnp.float32) + b1_ref[0]
    h1 = 0.5 * h1 * (1.0 + lax.erf(h1 * (1.0 / math.sqrt(2.0))))
    ffn_out = jnp.dot(h1, w2_ref[0], preferred_element_type=jnp.float32) + b2_ref[0]

    # ---- residual + LayerNorm 2 -> write back resident hidden state ----
    x = layer_norm(x + ffn_out, ln2_g_ref[0], ln2_b_ref[0])
    x_sc[...] = x

    # ---- final epilogue: last_hidden_state.mean(dim=1) ----
    @pl.when(l == L - 1)
    def _():
        out_ref[...] = jnp.mean(x.reshape(B, S, H), axis=1)


# ----------------------------- wrapper ---------------------------------------

def text_encoder_forward(params, token_ids, *, num_heads):
    B, S = token_ids.shape
    H = params["word_emb"].shape[1]
    D = H // num_heads
    L = params["wqkv"].shape[0]
    I = params["w1"].shape[2]
    BS = B * S

    # Embedding gather is plain-JAX glue (token-id gather has no clean BlockSpec
    # form at this scale); everything downstream is one fused Pallas kernel.
    emb = (params["word_emb"][token_ids]
           + params["pos_emb"][:S][None, :, :]
           + params["type_emb"][0][None, None, :]).astype(jnp.float32)
    emb = emb.reshape(BS, H)

    kern = functools.partial(_encoder_kernel, B=B, S=S,
                             num_heads=num_heads, head_dim=D)

    def rep(shape):
        # replicated across the layer grid axis (stays resident, DMA'd once)
        return pl.BlockSpec(shape, lambda l: (0,) * len(shape))

    def per_layer(shape):
        # per-layer weight slab: leading dim indexed by the layer grid axis
        return pl.BlockSpec((1,) + shape, lambda l: (l,) + (0,) * len(shape))

    return pl.pallas_call(
        kern,
        out_shape=jax.ShapeDtypeStruct((B, H), jnp.float32),
        grid=(L,),
        in_specs=[
            rep((BS, H)), rep((1, H)), rep((1, H)),            # emb, emb LN gamma/beta
            per_layer((H, 3 * H)), per_layer((1, 3 * H)),      # fused QKV
            per_layer((H, H)), per_layer((1, H)),              # attn output proj
            per_layer((1, H)), per_layer((1, H)),              # LN1
            per_layer((H, I)), per_layer((1, I)),              # FFN up
            per_layer((I, H)), per_layer((1, H)),              # FFN down
            per_layer((1, H)), per_layer((1, H)),              # LN2
        ],
        out_specs=rep((B, H)),
        scratch_shapes=[pltpu.VMEM((BS, H), jnp.float32)],     # resident hidden state
        compiler_params=pltpu.CompilerParams(
            dimension_semantics=("arbitrary",)),               # layers are sequential
    )(
        emb, params["emb_ln_g"].reshape(1, H), params["emb_ln_b"].reshape(1, H),
        params["wqkv"], params["bqkv"], params["wo"], params["bo"],
        params["ln1_g"], params["ln1_b"],
        params["w1"], params["b1"], params["w2"], params["b2"],
        params["ln2_g"], params["ln2_b"],
    )


# ----------------------------- pure-JAX reference ----------------------------

def text_encoder_reference(params, token_ids, *, num_heads):
    B, S = token_ids.shape
    H = params["word_emb"].shape[1]
    D = H // num_heads
    L = params["wqkv"].shape[0]

    def ln(h, g, b):
        mu = jnp.mean(h, axis=-1, keepdims=True)
        var = jnp.mean(jnp.square(h - mu), axis=-1, keepdims=True)
        return (h - mu) * lax.rsqrt(var + 1e-12) * g + b

    x = (params["word_emb"][token_ids]
         + params["pos_emb"][:S][None, :, :]
         + params["type_emb"][0][None, None, :]).astype(jnp.float32)
    x = ln(x, params["emb_ln_g"], params["emb_ln_b"])

    for l in range(L):
        qkv = x @ params["wqkv"][l] + params["bqkv"][l]            # [B, S, 3H]
        q, k, v = jnp.split(qkv, 3, axis=-1)
        q = q.reshape(B, S, num_heads, D).transpose(0, 2, 1, 3)
        k = k.reshape(B, S, num_heads, D).transpose(0, 2, 1, 3)
        v = v.reshape(B, S, num_heads, D).transpose(0, 2, 1, 3)
        s = jnp.einsum("bhqd,bhkd->bhqk", q, k) / math.sqrt(D)
        p = jax.nn.softmax(s, axis=-1)
        ctx = jnp.einsum("bhqk,bhkd->bhqd", p, v)
        ctx = ctx.transpose(0, 2, 1, 3).reshape(B, S, H)
        attn = ctx @ params["wo"][l] + params["bo"][l]
        x = ln(x + attn, params["ln1_g"][l], params["ln1_b"][l])
        h1 = x @ params["w1"][l] + params["b1"][l]
        h1 = 0.5 * h1 * (1.0 + lax.erf(h1 * (1.0 / math.sqrt(2.0))))
        ffn = h1 @ params["w2"][l] + params["b2"][l]
        x = ln(x + ffn, params["ln2_g"][l], params["ln2_b"][l])
    return x.mean(axis=1)


# ----------------------------- parameter init --------------------------------

def init_params(key, vocab, max_pos, H, I, L):
    def nrm(k, shape):
        return (jax.random.normal(k, shape, jnp.float32) * 0.02).astype(jnp.float32)

    keys = jax.random.split(key, 7)
    return {
        "word_emb": nrm(keys[0], (vocab, H)),
        "pos_emb": nrm(keys[1], (max_pos, H)),
        "type_emb": nrm(keys[2], (2, H)),
        "emb_ln_g": jnp.ones((H,), jnp.float32),
        "emb_ln_b": jnp.zeros((H,), jnp.float32),
        # stacked per-layer weights, streamed by the layer grid axis
        "wqkv": nrm(keys[3], (L, H, 3 * H)),
        "bqkv": jnp.zeros((L, 1, 3 * H), jnp.float32),
        "wo": nrm(keys[4], (L, H, H)),
        "bo": jnp.zeros((L, 1, H), jnp.float32),
        "ln1_g": jnp.ones((L, 1, H), jnp.float32),
        "ln1_b": jnp.zeros((L, 1, H), jnp.float32),
        "w1": nrm(keys[5], (L, H, I)),
        "b1": jnp.zeros((L, 1, I), jnp.float32),
        "w2": nrm(keys[6], (L, I, H)),
        "b2": jnp.zeros((L, 1, H), jnp.float32),
        "ln2_g": jnp.ones((L, 1, H), jnp.float32),
        "ln2_b": jnp.zeros((L, 1, H), jnp.float32),
    }


# ---------------------------------- main --------------------------------------

if __name__ == "__main__":
    # Small-shape analogue of bert_uncased_L-4_H-512_A-8:
    # L=4 layers, hidden H=32, heads NH=4, intermediate I=64, batch B=2, seq S=8.
    B, S, H, NH, I, L = 2, 8, 32, 4, 64, 4
    VOCAB, MAX_POS = 100, 64

    key = jax.random.PRNGKey(0)
    kp, kid = jax.random.split(key)
    params = init_params(kp, VOCAB, MAX_POS, H, I, L)

    # deterministic "tokenized" inputs (stand-in for BertTokenizer output)
    token_ids = jax.random.randint(kid, (B, S), 0, VOCAB, dtype=jnp.int32)

    sentence_embeddings = text_encoder_forward(params, token_ids, num_heads=NH)
    sentence_embeddings = jax.block_until_ready(sentence_embeddings)

    assert sentence_embeddings.shape == (B, H)
    assert sentence_embeddings.dtype == jnp.float32
    assert bool(jnp.all(jnp.isfinite(sentence_embeddings)))

    # Correctness against the pure-JAX reference (generous tolerance: the kernel
    # uses the EUP approximate reciprocal in the softmax normalization).
    ref = jax.block_until_ready(
        text_encoder_reference(params, token_ids, num_heads=NH))
    max_err = float(jnp.max(jnp.abs(sentence_embeddings - ref)))
    assert max_err < 1e-2, f"kernel/reference mismatch: max_err={max_err}"

    print("KERNEL_OK")
</pallas_src>

<mosaic_0001>
module attributes {stable_mosaic.version = 11 : i64} {
  func.func @_encoder_kernel(%arg0: i32, %arg1: memref<16x32xf32, #tpu.memory_space<vmem>>, %arg2: memref<1x32xf32, #tpu.memory_space<vmem>>, %arg3: memref<1x32xf32, #tpu.memory_space<vmem>>, %arg4: memref<1x32x96xf32, #tpu.memory_space<vmem>>, %arg5: memref<1x1x96xf32, #tpu.memory_space<vmem>>, %arg6: memref<1x32x32xf32, #tpu.memory_space<vmem>>, %arg7: memref<1x1x32xf32, #tpu.memory_space<vmem>>, %arg8: memref<1x1x32xf32, #tpu.memory_space<vmem>>, %arg9: memref<1x1x32xf32, #tpu.memory_space<vmem>>, %arg10: memref<1x32x64xf32, #tpu.memory_space<vmem>>, %arg11: memref<1x1x64xf32, #tpu.memory_space<vmem>>, %arg12: memref<1x64x32xf32, #tpu.memory_space<vmem>>, %arg13: memref<1x1x32xf32, #tpu.memory_space<vmem>>, %arg14: memref<1x1x32xf32, #tpu.memory_space<vmem>>, %arg15: memref<1x1x32xf32, #tpu.memory_space<vmem>>, %arg16: memref<2x32xf32, #tpu.memory_space<vmem>>, %arg17: memref<16x32xf32, #tpu.memory_space<vmem>>) attributes {dimension_semantics = [#tpu.dimension_semantics<arbitrary>], iteration_bounds = array<i64: 4>, scalar_prefetch = 0 : i64, scratch_operands = 1 : i64, tpu.core_type = #tpu.core_type<tc>, window_params = [{pipeline_mode = #tpu.pipeline_mode<synchronous>, transform_indices = @transform_0, window_bounds = array<i64: 16, 32>}, {pipeline_mode = #tpu.pipeline_mode<synchronous>, transform_indices = @transform_1, window_bounds = array<i64: 1, 32>}, {pipeline_mode = #tpu.pipeline_mode<synchronous>, transform_indices = @transform_2, window_bounds = array<i64: 1, 32>}, {transform_indices = @transform_3, window_bounds = array<i64: 1, 32, 96>}, {transform_indices = @transform_4, window_bounds = array<i64: 1, 1, 96>}, {transform_indices = @transform_5, window_bounds = array<i64: 1, 32, 32>}, {transform_indices = @transform_6, window_bounds = array<i64: 1, 1, 32>}, {transform_indices = @transform_7, window_bounds = array<i64: 1, 1, 32>}, {transform_indices = @transform_8, window_bounds = array<i64: 1, 1, 32>}, {transform_indices = @transform_9, window_bounds = array<i64: 1, 32, 64>}, {transform_indices = @transform_10, window_bounds = array<i64: 1, 1, 64>}, {transform_indices = @transform_11, window_bounds = array<i64: 1, 64, 32>}, {transform_indices = @transform_12, window_bounds = array<i64: 1, 1, 32>}, {transform_indices = @transform_13, window_bounds = array<i64: 1, 1, 32>}, {transform_indices = @transform_14, window_bounds = array<i64: 1, 1, 32>}, {pipeline_mode = #tpu.pipeline_mode<synchronous>, transform_indices = @transform_15, window_bounds = array<i64: 2, 32>}]} {
    %c0_i32 = arith.constant 0 : i32
    %0 = arith.cmpi eq, %arg0, %c0_i32 : i32
    %1 = arith.extui %0 : i1 to i32
    %c0_i32_0 = arith.constant 0 : i32
    %2 = arith.cmpi ne, %1, %c0_i32_0 : i32
    scf.if %2 {
      %c0_78 = arith.constant 0 : index
      %c0_79 = arith.constant 0 : index
      %191 = vector.load %arg1[%c0_78, %c0_79] : memref<16x32xf32, #tpu.memory_space<vmem>>, vector<16x32xf32>
      %c0_80 = arith.constant 0 : index
      %c0_81 = arith.constant 0 : index
      %192 = vector.load %arg2[%c0_80, %c0_81] : memref<1x32xf32, #tpu.memory_space<vmem>>, vector<1x32xf32>
      %c0_82 = arith.constant 0 : index
      %c0_83 = arith.constant 0 : index
      %193 = vector.load %arg3[%c0_82, %c0_83] : memref<1x32xf32, #tpu.memory_space<vmem>>, vector<1x32xf32>
      %cst_84 = arith.constant dense<0.000000e+00> : vector<16xf32>
      %194 = vector.multi_reduction <add>, %191, %cst_84 [1] : vector<16x32xf32> to vector<16xf32>
      %195 = vector.shape_cast %194 : vector<16xf32> to vector<16x1xf32>
      %cst_85 = arith.constant 3.200000e+01 : f32
      %196 = vector.broadcast %cst_85 : f32 to vector<16x1xf32>
      %197 = arith.divf %195, %196 : vector<16x1xf32>
      %198 = vector.broadcast %197 : vector<16x1xf32> to vector<16x32xf32>
      %199 = arith.subf %191, %198 : vector<16x32xf32>
      %200 = arith.mulf %199, %199 : vector<16x32xf32>
      %cst_86 = arith.constant dense<0.000000e+00> : vector<16xf32>
      %201 = vector.multi_reduction <add>, %200, %cst_86 [1] : vector<16x32xf32> to vector<16xf32>
      %202 = vector.shape_cast %201 : vector<16xf32> to vector<16x1xf32>
      %cst_87 = arith.constant 3.200000e+01 : f32
      %203 = vector.broadcast %cst_87 : f32 to vector<16x1xf32>
      %204 = arith.divf %202, %203 : vector<16x1xf32>
      %205 = vector.broadcast %197 : vector<16x1xf32> to vector<16x32xf32>
      %206 = arith.subf %191, %205 : vector<16x32xf32>
      %cst_88 = arith.constant 9.99999996E-13 : f32
      %207 = vector.broadcast %cst_88 : f32 to vector<16x1xf32>
      %208 = arith.addf %204, %207 : vector<16x1xf32>
      %209 = math.rsqrt %208 : vector<16x1xf32>
      %210 = vector.broadcast %209 : vector<16x1xf32> to vector<16x32xf32>
      %211 = arith.mulf %206, %210 : vector<16x32xf32>
      %212 = vector.broadcast %192 : vector<1x32xf32> to vector<16x32xf32>
      %213 = arith.mulf %211, %212 : vector<16x32xf32>
      %214 = vector.broadcast %193 : vector<1x32xf32> to vector<16x32xf32>
      %215 = arith.addf %213, %214 : vector<16x32xf32>
      %c0_89 = arith.constant 0 : index
      %c0_90 = arith.constant 0 : index
      %216 = vector.load %arg17[%c0_89, %c0_90] : memref<16x32xf32, #tpu.memory_space<vmem>>, vector<16x32xf32>
      tpu.vector_store %arg17[%c0_89, %c0_90], %215 {strides = array<i32>} : memref<16x32xf32, #tpu.memory_space<vmem>>, vector<16x32xf32>,
    } else {
    }
    %c0 = arith.constant 0 : index
    %c0_1 = arith.constant 0 : index
    %3 = vector.load %arg17[%c0, %c0_1] : memref<16x32xf32, #tpu.memory_space<vmem>>, vector<16x32xf32>
    %c0_2 = arith.constant 0 : index
    %c0_3 = arith.constant 0 : index
    %c0_4 = arith.constant 0 : index
    %4 = vector.load %arg4[%c0_2, %c0_3, %c0_4] : memref<1x32x96xf32, #tpu.memory_space<vmem>>, vector<1x32x96xf32>
    %5 = vector.shape_cast %4 : vector<1x32x96xf32> to vector<32x96xf32>
    %cst = arith.constant dense<0.000000e+00> : vector<16x96xf32>
    %6 = tpu.matmul %3, %5, %cst {dimension_numbers = #tpu.dot_dimension_numbers<[1], [0], [0], [1], [0, 0, 1, 1], [], []>} : vector<16x32xf32>, vector<32x96xf32>, vector<16x96xf32> -> vector<16x96xf32>
    %c0_5 = arith.constant 0 : index
    %c0_6 = arith.constant 0 : index
    %c0_7 = arith.constant 0 : index
    %7 = vector.load %arg5[%c0_5, %c0_6, %c0_7] : memref<1x1x96xf32, #tpu.memory_space<vmem>>, vector<1x1x96xf32>
    %8 = vector.shape_cast %7 : vector<1x1x96xf32> to vector<1x96xf32>
    %9 = vector.broadcast %8 : vector<1x96xf32> to vector<16x96xf32>
    %10 = arith.addf %6, %9 : vector<16x96xf32>
    %11 = vector.extract_strided_slice %10 {offsets = [0, 0], sizes = [16, 32], strides = [1, 1]} : vector<16x96xf32> to vector<16x32xf32>
    %cst_8 = arith.constant 0.353553385 : f32
    %12 = vector.broadcast %cst_8 : f32 to vector<16x32xf32>
    %13 = arith.mulf %11, %12 : vector<16x32xf32>
    %14 = vector.extract_strided_slice %10 {offsets = [0, 32], sizes = [16, 32], strides = [1, 1]} : vector<16x96xf32> to vector<16x32xf32>
    %15 = vector.extract_strided_slice %10 {offsets = [0, 64], sizes = [16, 32], strides = [1, 1]} : vector<16x96xf32> to vector<16x32xf32>
    %c0_9 = arith.constant 0 : index
    %c0_10 = arith.constant 0 : index
    %c0_11 = arith.constant 0 : index
    %16 = vector.load %arg6[%c0_9, %c0_10, %c0_11] : memref<1x32x32xf32, #tpu.memory_space<vmem>>, vector<1x32x32xf32>
    %17 = vector.shape_cast %16 : vector<1x32x32xf32> to vector<32x32xf32>
    %cst_12 = arith.constant 0.000000e+00 : f32
    %18 = vector.broadcast %cst_12 : f32 to vector<16x32xf32>
    %c0_13 = arith.constant 0 : index
    %c0_14 = arith.constant 0 : index
    %c0_15 = arith.constant 0 : index
    %19 = vector.load %arg7[%c0_13, %c0_14, %c0_15] : memref<1x1x32xf32, #tpu.memory_space<vmem>>, vector<1x1x32xf32>
    %20 = vector.shape_cast %19 : vector<1x1x32xf32> to vector<1x32xf32>
    %21 = vector.broadcast %20 : vector<1x32xf32> to vector<16x32xf32>
    %22 = arith.addf %18, %21 : vector<16x32xf32>
    %23 = vector.extract_strided_slice %13 {offsets = [0, 0], sizes = [16, 8], strides = [1, 1]} : vector<16x32xf32> to vector<16x8xf32>
    %24 = vector.shape_cast %23 : vector<16x8xf32> to vector<2x8x8xf32>
    %25 = vector.extract_strided_slice %14 {offsets = [0, 0], sizes = [16, 8], strides = [1, 1]} : vector<16x32xf32> to vector<16x8xf32>
    %26 = vector.shape_cast %25 : vector<16x8xf32> to vector<2x8x8xf32>
    %27 = vector.extract_strided_slice %15 {offsets = [0, 0], sizes = [16, 8], strides = [1, 1]} : vector<16x32xf32> to vector<16x8xf32>
    %28 = vector.shape_cast %27 : vector<16x8xf32> to vector<2x8x8xf32>
    "tpu.trace_start"() <{level = 10 : i32, message = "bqd,bkd->bqk"}> : () -> ()
    %cst_16 = arith.constant dense<0.000000e+00> : vector<2x8x8xf32>
    %29 = tpu.matmul %24, %26, %cst_16 {dimension_numbers = #tpu.dot_dimension_numbers<[2], [2], [1], [1], [0, 0, 0, 1, 1, 1], [0], [0]>} : vector<2x8x8xf32>, vector<2x8x8xf32>, vector<2x8x8xf32> -> vector<2x8x8xf32>
    "tpu.trace_stop"() : () -> ()
    %cst_17 = arith.constant dense<0xFF800000> : vector<2x8xf32>
    %30 = vector.multi_reduction <maximumf>, %29, %cst_17 [2] : vector<2x8x8xf32> to vector<2x8xf32>
    %31 = vector.shape_cast %30 : vector<2x8xf32> to vector<2x8x1xf32>
    %32 = vector.broadcast %31 : vector<2x8x1xf32> to vector<2x8x8xf32>
    %33 = arith.subf %29, %32 : vector<2x8x8xf32>
    %34 = math.exp %33 : vector<2x8x8xf32>
    %cst_18 = arith.constant dense<0.000000e+00> : vector<2x8xf32>
    %35 = vector.multi_reduction <add>, %34, %cst_18 [2] : vector<2x8x8xf32> to vector<2x8xf32>
    %36 = vector.shape_cast %35 : vector<2x8xf32> to vector<2x8x1xf32>
    %37 = tpu.reciprocal %36 {approx = true} : vector<2x8x1xf32> -> vector<2x8x1xf32>
    %38 = vector.broadcast %37 : vector<2x8x1xf32> to vector<2x8x8xf32>
    %39 = arith.mulf %34, %38 : vector<2x8x8xf32>
    "tpu.trace_start"() <{level = 10 : i32, message = "bqk,bkd->bqd"}> : () -> ()
    %cst_19 = arith.constant dense<0.000000e+00> : vector<2x8x8xf32>
    %40 = tpu.matmul %39, %28, %cst_19 {dimension_numbers = #tpu.dot_dimension_numbers<[2], [1], [1], [2], [0, 0, 0, 1, 1, 2], [0], [0]>} : vector<2x8x8xf32>, vector<2x8x8xf32>, vector<2x8x8xf32> -> vector<2x8x8xf32>
    "tpu.trace_stop"() : () -> ()
    %41 = vector.shape_cast %40 : vector<2x8x8xf32> to vector<16x8xf32>
    %42 = vector.extract_strided_slice %17 {offsets = [0, 0], sizes = [8, 32], strides = [1, 1]} : vector<32x32xf32> to vector<8x32xf32>
    %cst_20 = arith.constant dense<0.000000e+00> : vector<16x32xf32>
    %43 = tpu.matmul %41, %42, %cst_20 {dimension_numbers = #tpu.dot_dimension_numbers<[1], [0], [0], [1], [0, 0, 1, 1], [], []>} : vector<16x8xf32>, vector<8x32xf32>, vector<16x32xf32> -> vector<16x32xf32>
    %44 = arith.addf %22, %43 : vector<16x32xf32>
    %45 = vector.extract_strided_slice %13 {offsets = [0, 8], sizes = [16, 8], strides = [1, 1]} : vector<16x32xf32> to vector<16x8xf32>
    %46 = vector.shape_cast %45 : vector<16x8xf32> to vector<2x8x8xf32>
    %47 = vector.extract_strided_slice %14 {offsets = [0, 8], sizes = [16, 8], strides = [1, 1]} : vector<16x32xf32> to vector<16x8xf32>
    %48 = vector.shape_cast %47 : vector<16x8xf32> to vector<2x8x8xf32>
    %49 = vector.extract_strided_slice %15 {offsets = [0, 8], sizes = [16, 8], strides = [1, 1]} : vector<16x32xf32> to vector<16x8xf32>
    %50 = vector.shape_cast %49 : vector<16x8xf32> to vector<2x8x8xf32>
    "tpu.trace_start"() <{level = 10 : i32, message = "bqd,bkd->bqk"}> : () -> ()
    %cst_21 = arith.constant dense<0.000000e+00> : vector<2x8x8xf32>
    %51 = tpu.matmul %46, %48, %cst_21 {dimension_numbers = #tpu.dot_dimension_numbers<[2], [2], [1], [1], [0, 0, 0, 1, 1, 1], [0], [0]>} : vector<2x8x8xf32>, vector<2x8x8xf32>, vector<2x8x8xf32> -> vector<2x8x8xf32>
    "tpu.trace_stop"() : () -> ()
    %cst_22 = arith.constant dense<0xFF800000> : vector<2x8xf32>
    %52 = vector.multi_reduction <maximumf>, %51, %cst_22 [2] : vector<2x8x8xf32> to vector<2x8xf32>
    %53 = vector.shape_cast %52 : vector<2x8xf32> to vector<2x8x1xf32>
    %54 = vector.broadcast %53 : vector<2x8x1xf32> to vector<2x8x8xf32>
    %55 = arith.subf %51, %54 : vector<2x8x8xf32>
    %56 = math.exp %55 : vector<2x8x8xf32>
    %cst_23 = arith.constant dense<0.000000e+00> : vector<2x8xf32>
    %57 = vector.multi_reduction <add>, %56, %cst_23 [2] : vector<2x8x8xf32> to vector<2x8xf32>
    %58 = vector.shape_cast %57 : vector<2x8xf32> to vector<2x8x1xf32>
    %59 = tpu.reciprocal %58 {approx = true} : vector<2x8x1xf32> -> vector<2x8x1xf32>
    %60 = vector.broadcast %59 : vector<2x8x1xf32> to vector<2x8x8xf32>
    %61 = arith.mulf %56, %60 : vector<2x8x8xf32>
    "tpu.trace_start"() <{level = 10 : i32, message = "bqk,bkd->bqd"}> : () -> ()
    %cst_24 = arith.constant dense<0.000000e+00> : vector<2x8x8xf32>
    %62 = tpu.matmul %61, %50, %cst_24 {dimension_numbers = #tpu.dot_dimension_numbers<[2], [1], [1], [2], [0, 0, 0, 1, 1, 2], [0], [0]>} : vector<2x8x8xf32>, vector<2x8x8xf32>, vector<2x8x8xf32> -> vector<2x8x8xf32>
    "tpu.trace_stop"() : () -> ()
    %63 = vector.shape_cast %62 : vector<2x8x8xf32> to vector<16x8xf32>
    %64 = vector.extract_strided_slice %17 {offsets = [8, 0], sizes = [8, 32], strides = [1, 1]} : vector<32x32xf32> to vector<8x32xf32>
    %cst_25 = arith.constant dense<0.000000e+00> : vector<16x32xf32>
    %65 = tpu.matmul %63, %64, %cst_25 {dimension_numbers = #tpu.dot_dimension_numbers<[1], [0], [0], [1], [0, 0, 1, 1], [], []>} : vector<16x8xf32>, vector<8x32xf32>, vector<16x32xf32> -> vector<16x32xf32>
    %66 = arith.addf %44, %65 : vector<16x32xf32>
    %67 = vector.extract_strided_slice %13 {offsets = [0, 16], sizes = [16, 8], strides = [1, 1]} : vector<16x32xf32> to vector<16x8xf32>
    %68 = vector.shape_cast %67 : vector<16x8xf32> to vector<2x8x8xf32>
    %69 = vector.extract_strided_slice %14 {offsets = [0, 16], sizes = [16, 8], strides = [1, 1]} : vector<16x32xf32> to vector<16x8xf32>
    %70 = vector.shape_cast %69 : vector<16x8xf32> to vector<2x8x8xf32>
    %71 = vector.extract_strided_slice %15 {offsets = [0, 16], sizes = [16, 8], strides = [1, 1]} : vector<16x32xf32> to vector<16x8xf32>
    %72 = vector.shape_cast %71 : vector<16x8xf32> to vector<2x8x8xf32>
    "tpu.trace_start"() <{level = 10 : i32, message = "bqd,bkd->bqk"}> : () -> ()
    %cst_26 = arith.constant dense<0.000000e+00> : vector<2x8x8xf32>
    %73 = tpu.matmul %68, %70, %cst_26 {dimension_numbers = #tpu.dot_dimension_numbers<[2], [2], [1], [1], [0, 0, 0, 1, 1, 1], [0], [0]>} : vector<2x8x8xf32>, vector<2x8x8xf32>, vector<2x8x8xf32> -> vector<2x8x8xf32>
    "tpu.trace_stop"() : () -> ()
    %cst_27 = arith.constant dense<0xFF800000> : vector<2x8xf32>
    %74 = vector.multi_reduction <maximumf>, %73, %cst_27 [2] : vector<2x8x8xf32> to vector<2x8xf32>
    %75 = vector.shape_cast %74 : vector<2x8xf32> to vector<2x8x1xf32>
    %76 = vector.broadcast %75 : vector<2x8x1xf32> to vector<2x8x8xf32>
    %77 = arith.subf %73, %76 : vector<2x8x8xf32>
    %78 = math.exp %77 : vector<2x8x8xf32>
    %cst_28 = arith.constant dense<0.000000e+00> : vector<2x8xf32>
    %79 = vector.multi_reduction <add>, %78, %cst_28 [2] : vector<2x8x8xf32> to vector<2x8xf32>
    %80 = vector.shape_cast %79 : vector<2x8xf32> to vector<2x8x1xf32>
    %81 = tpu.reciprocal %80 {approx = true} : vector<2x8x1xf32> -> vector<2x8x1xf32>
    %82 = vector.broadcast %81 : vector<2x8x1xf32> to vector<2x8x8xf32>
    %83 = arith.mulf %78, %82 : vector<2x8x8xf32>
    "tpu.trace_start"() <{level = 10 : i32, message = "bqk,bkd->bqd"}> : () -> ()
    %cst_29 = arith.constant dense<0.000000e+00> : vector<2x8x8xf32>
    %84 = tpu.matmul %83, %72, %cst_29 {dimension_numbers = #tpu.dot_dimension_numbers<[2], [1], [1], [2], [0, 0, 0, 1, 1, 2], [0], [0]>} : vector<2x8x8xf32>, vector<2x8x8xf32>, vector<2x8x8xf32> -> vector<2x8x8xf32>
    "tpu.trace_stop"() : () -> ()
    %85 = vector.shape_cast %84 : vector<2x8x8xf32> to vector<16x8xf32>
    %86 = vector.extract_strided_slice %17 {offsets = [16, 0], sizes = [8, 32], strides = [1, 1]} : vector<32x32xf32> to vector<8x32xf32>
    %cst_30 = arith.constant dense<0.000000e+00> : vector<16x32xf32>
    %87 = tpu.matmul %85, %86, %cst_30 {dimension_numbers = #tpu.dot_dimension_numbers<[1], [0], [0], [1], [0, 0, 1, 1], [], []>} : vector<16x8xf32>, vector<8x32xf32>, vector<16x32xf32> -> vector<16x32xf32>
    %88 = arith.addf %66, %87 : vector<16x32xf32>
    %89 = vector.extract_strided_slice %13 {offsets = [0, 24], sizes = [16, 8], strides = [1, 1]} : vector<16x32xf32> to vector<16x8xf32>
    %90 = vector.shape_cast %89 : vector<16x8xf32> to vector<2x8x8xf32>
    %91 = vector.extract_strided_slice %14 {offsets = [0, 24], sizes = [16, 8], strides = [1, 1]} : vector<16x32xf32> to vector<16x8xf32>
    %92 = vector.shape_cast %91 : vector<16x8xf32> to vector<2x8x8xf32>
    %93 = vector.extract_strided_slice %15 {offsets = [0, 24], sizes = [16, 8], strides = [1, 1]} : vector<16x32xf32> to vector<16x8xf32>
    %94 = vector.shape_cast %93 : vector<16x8xf32> to vector<2x8x8xf32>
    "tpu.trace_start"() <{level = 10 : i32, message = "bqd,bkd->bqk"}> : () -> ()
    %cst_31 = arith.constant dense<0.000000e+00> : vector<2x8x8xf32>
    %95 = tpu.matmul %90, %92, %cst_31 {dimension_numbers = #tpu.dot_dimension_numbers<[2], [2], [1], [1], [0, 0, 0, 1, 1, 1], [0], [0]>} : vector<2x8x8xf32>, vector<2x8x8xf32>, vector<2x8x8xf32> -> vector<2x8x8xf32>
    "tpu.trace_stop"() : () -> ()
    %cst_32 = arith.constant dense<0xFF800000> : vector<2x8xf32>
    %96 = vector.multi_reduction <maximumf>, %95, %cst_32 [2] : vector<2x8x8xf32> to vector<2x8xf32>
    %97 = vector.shape_cast %96 : vector<2x8xf32> to vector<2x8x1xf32>
    %98 = vector.broadcast %97 : vector<2x8x1xf32> to vector<2x8x8xf32>
    %99 = arith.subf %95, %98 : vector<2x8x8xf32>
    %100 = math.exp %99 : vector<2x8x8xf32>
    %cst_33 = arith.constant dense<0.000000e+00> : vector<2x8xf32>
    %101 = vector.multi_reduction <add>, %100, %cst_33 [2] : vector<2x8x8xf32> to vector<2x8xf32>
    %102 = vector.shape_cast %101 : vector<2x8xf32> to vector<2x8x1xf32>
    %103 = tpu.reciprocal %102 {approx = true} : vector<2x8x1xf32> -> vector<2x8x1xf32>
    %104 = vector.broadcast %103 : vector<2x8x1xf32> to vector<2x8x8xf32>
    %105 = arith.mulf %100, %104 : vector<2x8x8xf32>
    "tpu.trace_start"() <{level = 10 : i32, message = "bqk,bkd->bqd"}> : () -> ()
    %cst_34 = arith.constant dense<0.000000e+00> : vector<2x8x8xf32>
    %106 = tpu.matmul %105, %94, %cst_34 {dimension_numbers = #tpu.dot_dimension_numbers<[2], [1], [1], [2], [0, 0, 0, 1, 1, 2], [0], [0]>} : vector<2x8x8xf32>, vector<2x8x8xf32>, vector<2x8x8xf32> -> vector<2x8x8xf32>
    "tpu.trace_stop"() : () -> ()
    %107 = vector.shape_cast %106 : vector<2x8x8xf32> to vector<16x8xf32>
    %108 = vector.extract_strided_slice %17 {offsets = [24, 0], sizes = [8, 32], strides = [1, 1]} : vector<32x32xf32> to vector<8x32xf32>
    %cst_35 = arith.constant dense<0.000000e+00> : vector<16x32xf32>
    %109 = tpu.matmul %107, %108, %cst_35 {dimension_numbers = #tpu.dot_dimension_numbers<[1], [0], [0], [1], [0, 0, 1, 1], [], []>} : vector<16x8xf32>, vector<8x32xf32>, vector<16x32xf32> -> vector<16x32xf32>
    %110 = arith.addf %88, %109 : vector<16x32xf32>
    %111 = arith.addf %3, %110 : vector<16x32xf32>
    %c0_36 = arith.constant 0 : index
    %c0_37 = arith.constant 0 : index
    %c0_38 = arith.constant 0 : index
    %112 = vector.load %arg8[%c0_36, %c0_37, %c0_38] : memref<1x1x32xf32, #tpu.memory_space<vmem>>, vector<1x1x32xf32>
    %113 = vector.shape_cast %112 : vector<1x1x32xf32> to vector<1x32xf32>
    %c0_39 = arith.constant 0 : index
    %c0_40 = arith.constant 0 : index
    %c0_41 = arith.constant 0 : index
    %114 = vector.load %arg9[%c0_39, %c0_40, %c0_41] : memref<1x1x32xf32, #tpu.memory_space<vmem>>, vector<1x1x32xf32>
    %115 = vector.shape_cast %114 : vector<1x1x32xf32> to vector<1x32xf32>
    %cst_42 = arith.constant dense<0.000000e+00> : vector<16xf32>
    %116 = vector.multi_reduction <add>, %111, %cst_42 [1] : vector<16x32xf32> to vector<16xf32>
    %117 = vector.shape_cast %116 : vector<16xf32> to vector<16x1xf32>
    %cst_43 = arith.constant 3.200000e+01 : f32
    %118 = vector.broadcast %cst_43 : f32 to vector<16x1xf32>
    %119 = arith.divf %117, %118 : vector<16x1xf32>
    %120 = vector.broadcast %119 : vector<16x1xf32> to vector<16x32xf32>
    %121 = arith.subf %111, %120 : vector<16x32xf32>
    %122 = arith.mulf %121, %121 : vector<16x32xf32>
    %cst_44 = arith.constant dense<0.000000e+00> : vector<16xf32>
    %123 = vector.multi_reduction <add>, %122, %cst_44 [1] : vector<16x32xf32> to vector<16xf32>
    %124 = vector.shape_cast %123 : vector<16xf32> to vector<16x1xf32>
    %cst_45 = arith.constant 3.200000e+01 : f32
    %125 = vector.broadcast %cst_45 : f32 to vector<16x1xf32>
    %126 = arith.divf %124, %125 : vector<16x1xf32>
    %127 = vector.broadcast %119 : vector<16x1xf32> to vector<16x32xf32>
    %128 = arith.subf %111, %127 : vector<16x32xf32>
    %cst_46 = arith.constant 9.99999996E-13 : f32
    %129 = vector.broadcast %cst_46 : f32 to vector<16x1xf32>
    %130 = arith.addf %126, %129 : vector<16x1xf32>
    %131 = math.rsqrt %130 : vector<16x1xf32>
    %132 = vector.broadcast %131 : vector<16x1xf32> to vector<16x32xf32>
    %133 = arith.mulf %128, %132 : vector<16x32xf32>
    %134 = vector.broadcast %113 : vector<1x32xf32> to vector<16x32xf32>
    %135 = arith.mulf %133, %134 : vector<16x32xf32>
    %136 = vector.broadcast %115 : vector<1x32xf32> to vector<16x32xf32>
    %137 = arith.addf %135, %136 : vector<16x32xf32>
    %c0_47 = arith.constant 0 : index
    %c0_48 = arith.constant 0 : index
    %c0_49 = arith.constant 0 : index
    %138 = vector.load %arg10[%c0_47, %c0_48, %c0_49] : memref<1x32x64xf32, #tpu.memory_space<vmem>>, vector<1x32x64xf32>
    %139 = vector.shape_cast %138 : vector<1x32x64xf32> to vector<32x64xf32>
    %cst_50 = arith.constant dense<0.000000e+00> : vector<16x64xf32>
    %140 = tpu.matmul %137, %139, %cst_50 {dimension_numbers = #tpu.dot_dimension_numbers<[1], [0], [0], [1], [0, 0, 1, 1], [], []>} : vector<16x32xf32>, vector<32x64xf32>, vector<16x64xf32> -> vector<16x64xf32>
    %c0_51 = arith.constant 0 : index
    %c0_52 = arith.constant 0 : index
    %c0_53 = arith.constant 0 : index
    %141 = vector.load %arg11[%c0_51, %c0_52, %c0_53] : memref<1x1x64xf32, #tpu.memory_space<vmem>>, vector<1x1x64xf32>
    %142 = vector.shape_cast %141 : vector<1x1x64xf32> to vector<1x64xf32>
    %143 = vector.broadcast %142 : vector<1x64xf32> to vector<16x64xf32>
    %144 = arith.addf %140, %143 : vector<16x64xf32>
    %cst_54 = arith.constant 5.000000e-01 : f32
    %145 = vector.broadcast %cst_54 : f32 to vector<16x64xf32>
    %146 = arith.mulf %145, %144 : vector<16x64xf32>
    %cst_55 = arith.constant 0.707106769 : f32
    %147 = vector.broadcast %cst_55 : f32 to vector<16x64xf32>
    %148 = arith.mulf %144, %147 : vector<16x64xf32>
    %149 = math.erf %148 : vector<16x64xf32>
    %cst_56 = arith.constant 1.000000e+00 : f32
    %150 = vector.broadcast %cst_56 : f32 to vector<16x64xf32>
    %151 = arith.addf %150, %149 : vector<16x64xf32>
    %152 = arith.mulf %146, %151 : vector<16x64xf32>
    %c0_57 = arith.constant 0 : index
    %c0_58 = arith.constant 0 : index
    %c0_59 = arith.constant 0 : index
    %153 = vector.load %arg12[%c0_57, %c0_58, %c0_59] : memref<1x64x32xf32, #tpu.memory_space<vmem>>, vector<1x64x32xf32>
    %154 = vector.shape_cast %153 : vector<1x64x32xf32> to vector<64x32xf32>
    %cst_60 = arith.constant dense<0.000000e+00> : vector<16x32xf32>
    %155 = tpu.matmul %152, %154, %cst_60 {dimension_numbers = #tpu.dot_dimension_numbers<[1], [0], [0], [1], [0, 0, 1, 1], [], []>} : vector<16x64xf32>, vector<64x32xf32>, vector<16x32xf32> -> vector<16x32xf32>
    %c0_61 = arith.constant 0 : index
    %c0_62 = arith.constant 0 : index
    %c0_63 = arith.constant 0 : index
    %156 = vector.load %arg13[%c0_61, %c0_62, %c0_63] : memref<1x1x32xf32, #tpu.memory_space<vmem>>, vector<1x1x32xf32>
    %157 = vector.shape_cast %156 : vector<1x1x32xf32> to vector<1x32xf32>
    %158 = vector.broadcast %157 : vector<1x32xf32> to vector<16x32xf32>
    %159 = arith.addf %155, %158 : vector<16x32xf32>
    %160 = arith.addf %137, %159 : vector<16x32xf32>
    %c0_64 = arith.constant 0 : index
    %c0_65 = arith.constant 0 : index
    %c0_66 = arith.constant 0 : index
    %161 = vector.load %arg14[%c0_64, %c0_65, %c0_66] : memref<1x1x32xf32, #tpu.memory_space<vmem>>, vector<1x1x32xf32>
    %162 = vector.shape_cast %161 : vector<1x1x32xf32> to vector<1x32xf32>
    %c0_67 = arith.constant 0 : index
    %c0_68 = arith.constant 0 : index
    %c0_69 = arith.constant 0 : index
    %163 = vector.load %arg15[%c0_67, %c0_68, %c0_69] : memref<1x1x32xf32, #tpu.memory_space<vmem>>, vector<1x1x32xf32>
    %164 = vector.shape_cast %163 : vector<1x1x32xf32> to vector<1x32xf32>
    %cst_70 = arith.constant dense<0.000000e+00> : vector<16xf32>
    %165 = vector.multi_reduction <add>, %160, %cst_70 [1] : vector<16x32xf32> to vector<16xf32>
    %166 = vector.shape_cast %165 : vector<16xf32> to vector<16x1xf32>
    %cst_71 = arith.constant 3.200000e+01 : f32
    %167 = vector.broadcast %cst_71 : f32 to vector<16x1xf32>
    %168 = arith.divf %166, %167 : vector<16x1xf32>
    %169 = vector.broadcast %168 : vector<16x1xf32> to vector<16x32xf32>
    %170 = arith.subf %160, %169 : vector<16x32xf32>
    %171 = arith.mulf %170, %170 : vector<16x32xf32>
    %cst_72 = arith.constant dense<0.000000e+00> : vector<16xf32>
    %172 = vector.multi_reduction <add>, %171, %cst_72 [1] : vector<16x32xf32> to vector<16xf32>
    %173 = vector.shape_cast %172 : vector<16xf32> to vector<16x1xf32>
    %cst_73 = arith.constant 3.200000e+01 : f32
    %174 = vector.broadcast %cst_73 : f32 to vector<16x1xf32>
    %175 = arith.divf %173, %174 : vector<16x1xf32>
    %176 = vector.broadcast %168 : vector<16x1xf32> to vector<16x32xf32>
    %177 = arith.subf %160, %176 : vector<16x32xf32>
    %cst_74 = arith.constant 9.99999996E-13 : f32
    %178 = vector.broadcast %cst_74 : f32 to vector<16x1xf32>
    %179 = arith.addf %175, %178 : vector<16x1xf32>
    %180 = math.rsqrt %179 : vector<16x1xf32>
    %181 = vector.broadcast %180 : vector<16x1xf32> to vector<16x32xf32>
    %182 = arith.mulf %177, %181 : vector<16x32xf32>
    %183 = vector.broadcast %162 : vector<1x32xf32> to vector<16x32xf32>
    %184 = arith.mulf %182, %183 : vector<16x32xf32>
    %185 = vector.broadcast %164 : vector<1x32xf32> to vector<16x32xf32>
    %186 = arith.addf %184, %185 : vector<16x32xf32>
    %c0_75 = arith.constant 0 : index
    %c0_76 = arith.constant 0 : index
    %187 = vector.load %arg17[%c0_75, %c0_76] : memref<16x32xf32, #tpu.memory_space<vmem>>, vector<16x32xf32>
    tpu.vector_store %arg17[%c0_75, %c0_76], %186 {strides = array<i32>} : memref<16x32xf32, #tpu.memory_space<vmem>>, vector<16x32xf32>,
    %c3_i32 = arith.constant 3 : i32
    %188 = arith.cmpi eq, %arg0, %c3_i32 : i32
    %189 = arith.extui %188 : i1 to i32
    %c0_i32_77 = arith.constant 0 : i32
    %190 = arith.cmpi ne, %189, %c0_i32_77 : i32
    scf.if %190 {
      %191 = vector.shape_cast %186 : vector<16x32xf32> to vector<2x8x32xf32>
      %cst_78 = arith.constant dense<0.000000e+00> : vector<2x32xf32>
      %192 = vector.multi_reduction <add>, %191, %cst_78 [1] : vector<2x8x32xf32> to vector<2x32xf32>
      %cst_79 = arith.constant 8.000000e+00 : f32
      %193 = vector.broadcast %cst_79 : f32 to vector<2x32xf32>
      %194 = arith.divf %192, %193 : vector<2x32xf32>
      %c0_80 = arith.constant 0 : index
      %c0_81 = arith.constant 0 : index
      %195 = vector.load %arg16[%c0_80, %c0_81] : memref<2x32xf32, #tpu.memory_space<vmem>>, vector<2x32xf32>
      tpu.vector_store %arg16[%c0_80, %c0_81], %194 {strides = array<i32>} : memref<2x32xf32, #tpu.memory_space<vmem>>, vector<2x32xf32>,
    } else {
    }
    return
  }
  func.func @transform_0(%arg0: i32) -> (i32, i32) {
    %c0_i32 = arith.constant 0 : i32
    %c0_i32_0 = arith.constant 0 : i32
    %c0_i32_1 = arith.constant 0 : i32
    return %c0_i32, %c0_i32_0 : i32, i32
  }
  func.func @transform_1(%arg0: i32) -> (i32, i32) {
    %c0_i32 = arith.constant 0 : i32
    %c0_i32_0 = arith.constant 0 : i32
    %c0_i32_1 = arith.constant 0 : i32
    return %c0_i32, %c0_i32_0 : i32, i32
  }
  func.func @transform_2(%arg0: i32) -> (i32, i32) {
    %c0_i32 = arith.constant 0 : i32
    %c0_i32_0 = arith.constant 0 : i32
    %c0_i32_1 = arith.constant 0 : i32
    return %c0_i32, %c0_i32_0 : i32, i32
  }
  func.func @transform_3(%arg0: i32) -> (i32, i32, i32) {
    %c0_i32 = arith.constant 0 : i32
    %c0_i32_0 = arith.constant 0 : i32
    %c0_i32_1 = arith.constant 0 : i32
    return %arg0, %c0_i32, %c0_i32_0 : i32, i32, i32
  }
  func.func @transform_4(%arg0: i32) -> (i32, i32, i32) {
    %c0_i32 = arith.constant 0 : i32
    %c0_i32_0 = arith.constant 0 : i32
    %c0_i32_1 = arith.constant 0 : i32
    return %arg0, %c0_i32, %c0_i32_0 : i32, i32, i32
  }
  func.func @transform_5(%arg0: i32) -> (i32, i32, i32) {
    %c0_i32 = arith.constant 0 : i32
    %c0_i32_0 = arith.constant 0 : i32
    %c0_i32_1 = arith.constant 0 : i32
    return %arg0, %c0_i32, %c0_i32_0 : i32, i32, i32
  }
  func.func @transform_6(%arg0: i32) -> (i32, i32, i32) {
    %c0_i32 = arith.constant 0 : i32
    %c0_i32_0 = arith.constant 0 : i32
    %c0_i32_1 = arith.constant 0 : i32
    return %arg0, %c0_i32, %c0_i32_0 : i32, i32, i32
  }
  func.func @transform_7(%arg0: i32) -> (i32, i32, i32) {
    %c0_i32 = arith.constant 0 : i32
    %c0_i32_0 = arith.constant 0 : i32
    %c0_i32_1 = arith.constant 0 : i32
    return %arg0, %c0_i32, %c0_i32_0 : i32, i32, i32
  }
  func.func @transform_8(%arg0: i32) -> (i32, i32, i32) {
    %c0_i32 = arith.constant 0 : i32
    %c0_i32_0 = arith.constant 0 : i32
    %c0_i32_1 = arith.constant 0 : i32
    return %arg0, %c0_i32, %c0_i32_0 : i32, i32, i32
  }
  func.func @transform_9(%arg0: i32) -> (i32, i32, i32) {
    %c0_i32 = arith.constant 0 : i32
    %c0_i32_0 = arith.constant 0 : i32
    %c0_i32_1 = arith.constant 0 : i32
    return %arg0, %c0_i32, %c0_i32_0 : i32, i32, i32
  }
  func.func @transform_10(%arg0: i32) -> (i32, i32, i32) {
    %c0_i32 = arith.constant 0 : i32
    %c0_i32_0 = arith.constant 0 : i32
    %c0_i32_1 = arith.constant 0 : i32
    return %arg0, %c0_i32, %c0_i32_0 : i32, i32, i32
  }
  func.func @transform_11(%arg0: i32) -> (i32, i32, i32) {
    %c0_i32 = arith.constant 0 : i32
    %c0_i32_0 = arith.constant 0 : i32
    %c0_i32_1 = arith.constant 0 : i32
    return %arg0, %c0_i32, %c0_i32_0 : i32, i32, i32
  }
  func.func @transform_12(%arg0: i32) -> (i32, i32, i32) {
    %c0_i32 = arith.constant 0 : i32
    %c0_i32_0 = arith.constant 0 : i32
    %c0_i32_1 = arith.constant 0 : i32
    return %arg0, %c0_i32, %c0_i32_0 : i32, i32, i32
  }
  func.func @transform_13(%arg0: i32) -> (i32, i32, i32) {
    %c0_i32 = arith.constant 0 : i32
    %c0_i32_0 = arith.constant 0 : i32
    %c0_i32_1 = arith.constant 0 : i32
    return %arg0, %c0_i32, %c0_i32_0 : i32, i32, i32
  }
  func.func @transform_14(%arg0: i32) -> (i32, i32, i32) {
    %c0_i32 = arith.constant 0 : i32
    %c0_i32_0 = arith.constant 0 : i32
    %c0_i32_1 = arith.constant 0 : i32
    return %arg0, %c0_i32, %c0_i32_0 : i32, i32, i32
  }
  func.func @transform_15(%arg0: i32) -> (i32, i32) {
    %c0_i32 = arith.constant 0 : i32
    %c0_i32_0 = arith.constant 0 : i32
    %c0_i32_1 = arith.constant 0 : i32
    return %c0_i32, %c0_i32_0 : i32, i32
  }
}

</mosaic_0001>

<llo_original>
// kernel: tpu_custom_call.1
$region0: #{tpu_custom_call.1}
  #allocation0 [shape = 'u32[]', space=smem, size = 0x4, offset = 0x4, fixed_abs, tag = 'smem constant byte address 0x4 - core index']
  #allocation1 [shape = 'u32[144,128]{1,0:T(1,128)}', space=vmem, size = 0x12000, scoped, tag = 'internal scratch']
  #allocation2 [shape = 'f32[16,32]{1,0:T(8,128)}', space=vmem, size = 0x2000, scoped, tag = 'scratch operand']
  %s0 = inlined_call_operand.hbm [shape: f32[16,32], index: 0, kind: input, shape index: {}]
  %s1 = inlined_call_operand.hbm [shape: f32[1,32], index: 1, kind: input, shape index: {}]
  %s2 = inlined_call_operand.vmem [shape: f32[1,32], index: 2, kind: input, shape index: {}]
  %s3 = inlined_call_operand.vmem [shape: f32[4,32,96], index: 3, kind: input, shape index: {}]
  %s4 = inlined_call_operand.vmem [shape: f32[4,1,96], index: 4, kind: input, shape index: {}]
  %s5 = inlined_call_operand.vmem [shape: f32[4,32,32], index: 5, kind: input, shape index: {}]
  %s6 = inlined_call_operand.vmem [shape: f32[4,1,32], index: 6, kind: input, shape index: {}]
  %s7 = inlined_call_operand.vmem [shape: f32[4,1,32], index: 7, kind: input, shape index: {}]
  %s8 = inlined_call_operand.vmem [shape: f32[4,1,32], index: 8, kind: input, shape index: {}]
  %s9 = inlined_call_operand.vmem [shape: f32[4,32,64], index: 9, kind: input, shape index: {}]
  %s10 = inlined_call_operand.vmem [shape: f32[4,1,64], index: 10, kind: input, shape index: {}]
  %s11 = inlined_call_operand.vmem [shape: f32[4,64,32], index: 11, kind: input, shape index: {}]
  %s12 = inlined_call_operand.vmem [shape: f32[4,1,32], index: 12, kind: input, shape index: {}]
  %s13 = inlined_call_operand.vmem [shape: f32[4,1,32], index: 13, kind: input, shape index: {}]
  %s14 = inlined_call_operand.vmem [shape: f32[4,1,32], index: 14, kind: input, shape index: {}]
  %s15 = inlined_call_operand.hbm [shape: f32[2,32], index: 15, kind: output, shape index: {}]
  %s16 = sld [smem:[#allocation0]]
  $region109: #{tpu_custom_call.1} parent=0
    _
  %s18 = ssub.s32 1, %s16
  %s19 = scalar_select 0, %s18, %s16
  $region1: #{tpu_custom_call.1} parent=0
    #allocation3 [shape = 'u8[8192]{0}', space=vmem, size = 0x2000, scoped, tag = 'input window, operand 0, single buffered']
    #allocation4 [shape = 's32[2]{0}', space=sflag, size = 0x8, scoped, tag = 'scoped memory for tpu_custom_call.1']
    #allocation5 [shape = 's32[2]{0}', space=sflag, size = 0x8, scoped, tag = 'scoped memory for tpu_custom_call.1']
    #allocation6 [shape = 'u8[512]{0}', space=vmem, size = 0x400, scoped, tag = 'input window, operand 1, single buffered']
    #allocation7 [shape = 's32[1]{0}', space=sflag, size = 0x4, scoped, tag = 'scoped memory for tpu_custom_call.1']
    #allocation8 [shape = 'u8[1024]{0}', space=vmem, size = 0x400, scoped, tag = 'output window, operand 0, single buffered']
    %20 = vsyncpa [#allocation4], 0
    %21 = vsyncpa [#allocation7], 0
    %22 = vsyncpa [#allocation5], 0
    loop: start=0, step=1, limit=6
    $region2: #{tpu_custom_call.1} parent=1 // loop_pre_header
      _
    $region3: #{tpu_custom_call.1} parent=1 // loop_header
      %s24 = sphi 0, %s28
      %p25 = scmp.ge.s32.totalorder %s24, 6
      %s32 = sphi 0, %s32
      %s34 = sphi 0, %s32
      %s35 = sphi 0, %s34
      %s49 = sphi 0, %s35
      %s53 = sphi 0, %s53
      %s55 = sphi 0, %s53
      %s56 = sphi 0, %s55
      %s70 = sphi 0, %s56
      %s74 = sphi 0, %s74
      %s76 = sphi 0, %s74
      %s77 = sphi 0, %s76
      %s91 = sphi 0, %s77
      %s97 = sphi 0, %s99
      %s100 = sphi 0, %s97
      %s101 = sphi 0, %s100
      %s117 = sphi 0, %s101
      %s123 = sphi 0, %s125
      %s126 = sphi 0, %s123
      %s127 = sphi 0, %s126
      %s143 = sphi 0, %s127
      %s149 = sphi 0, %s151
      %s152 = sphi 0, %s149
      %s153 = sphi 0, %s152
      %s169 = sphi 0, %s153
      %s175 = sphi 0, %s177
      %s178 = sphi 0, %s175
      %s179 = sphi 0, %s178
      %s195 = sphi 0, %s179
      %s201 = sphi 0, %s203
      %s204 = sphi 0, %s201
      %s205 = sphi 0, %s204
      %s221 = sphi 0, %s205
      %s227 = sphi 0, %s229
      %s230 = sphi 0, %s227
      %s231 = sphi 0, %s230
      %s247 = sphi 0, %s231
      %s253 = sphi 0, %s255
      %s256 = sphi 0, %s253
      %s257 = sphi 0, %s256
      %s273 = sphi 0, %s257
      %s279 = sphi 0, %s281
      %s282 = sphi 0, %s279
      %s283 = sphi 0, %s282
      %s299 = sphi 0, %s283
      %s305 = sphi 0, %s307
      %s308 = sphi 0, %s305
      %s309 = sphi 0, %s308
      %s325 = sphi 0, %s309
      %s331 = sphi 0, %s333
      %s334 = sphi 0, %s331
      %s335 = sphi 0, %s334
      %s351 = sphi 0, %s335
      %s357 = sphi 0, %s359
      %s360 = sphi 0, %s357
      %s361 = sphi 0, %s360
      %s377 = sphi 0, %s361
      %s383 = sphi 0, %s385
      %s386 = sphi 0, %s383
      %s387 = sphi 0, %s386
      %s403 = sphi 0, %s387
      %s407 = sphi 0, %s407
      %s409 = sphi 0, %s407
      %s410 = sphi 0, %s409
      %s424 = sphi 0, %s410
    $region4: #{tpu_custom_call.1} parent=1 // loop_header_branch
      %27 = sbr.rel (%p25) target = $region8
    $region5: #{tpu_custom_call.1} parent=1 // loop_body
      %s29 = ssub.s32 %s24, 1
      %s30 = ssub.s32 %s24, 2
      %s31 = sadd.s32 %s24, 1
      %s33 = sadd.s32 %s32, 1
      %p36 = scmp.eq.s32.totalorder %s24, 3
      %p37 = scmp.ne.s32.totalorder %s32, %s34
      %p38 = scmp.eq.s32.totalorder %s24, 0
      %p39 = por %p37, %p38
      %p40 = scmp.ne.s32.totalorder %s32, %s34
      %p41 = scmp.eq.s32.totalorder %s29, 3
      %p42 = por %p40, %p41
      %p43 = scmp.ne.s32.totalorder %s34, %s35
      %p44 = scmp.eq.s32.totalorder %s29, 0
      %p45 = por %p43, %p44
      %p46 = scmp.ne.s32.totalorder %s34, %s35
      %p47 = scmp.eq.s32.totalorder %s30, 3
      %p48 = por %p46, %p47
      %p50 = scmp.ne.s32.totalorder %s35, %s49
      %p51 = scmp.eq.s32.totalorder %s30, 0
      %p52 = por %p50, %p51
      %s54 = sadd.s32 %s53, 1
      %p57 = scmp.eq.s32.totalorder %s24, 3
      %p58 = scmp.ne.s32.totalorder %s53, %s55
      %p59 = scmp.eq.s32.totalorder %s24, 0
      %p60 = por %p58, %p59
      %p61 = scmp.ne.s32.totalorder %s53, %s55
      %p62 = scmp.eq.s32.totalorder %s29, 3
      %p63 = por %p61, %p62
      %p64 = scmp.ne.s32.totalorder %s55, %s56
      %p65 = scmp.eq.s32.totalorder %s29, 0
      %p66 = por %p64, %p65
      %p67 = scmp.ne.s32.totalorder %s55, %s56
      %p68 = scmp.eq.s32.totalorder %s30, 3
      %p69 = por %p67, %p68
      %p71 = scmp.ne.s32.totalorder %s56, %s70
      %p72 = scmp.eq.s32.totalorder %s30, 0
      %p73 = por %p71, %p72
      %s75 = sadd.s32 %s74, 1
      %p78 = scmp.eq.s32.totalorder %s24, 3
      %p79 = scmp.ne.s32.totalorder %s74, %s76
      %p80 = scmp.eq.s32.totalorder %s24, 0
      %p81 = por %p79, %p80
      %p82 = scmp.ne.s32.totalorder %s74, %s76
      %p83 = scmp.eq.s32.totalorder %s29, 3
      %p84 = por %p82, %p83
      %p85 = scmp.ne.s32.totalorder %s76, %s77
      %p86 = scmp.eq.s32.totalorder %s29, 0
      %p87 = por %p85, %p86
      %p88 = scmp.ne.s32.totalorder %s76, %s77
      %p89 = scmp.eq.s32.totalorder %s30, 3
      %p90 = por %p88, %p89
      %p92 = scmp.ne.s32.totalorder %s77, %s91
      %p93 = scmp.eq.s32.totalorder %s30, 0
      %p94 = por %p92, %p93
      %s95 = ssub.s32 %s24, %s31
      %p96 = scmp.eq.s32.totalorder %s95, 0
      %s98 = sadd.s32 %s97, 1
      %s99 = scalar_select %p96, %s97, %s98
      %p102 = pneg %p96
      %p103 = scmp.eq.s32.totalorder %s24, 3
      %p104 = por %p102, %p103
      %p105 = scmp.ne.s32.totalorder %s97, %s100
      %p106 = scmp.eq.s32.totalorder %s24, 0
      %p107 = por %p105, %p106
      %p108 = scmp.ne.s32.totalorder %s97, %s100
      %p109 = scmp.eq.s32.totalorder %s29, 3
      %p110 = por %p108, %p109
      %p111 = scmp.ne.s32.totalorder %s100, %s101
      %p112 = scmp.eq.s32.totalorder %s29, 0
      %p113 = por %p111, %p112
      %p114 = scmp.ne.s32.totalorder %s100, %s101
      %p115 = scmp.eq.s32.totalorder %s30, 3
      %p116 = por %p114, %p115
      %p118 = scmp.ne.s32.totalorder %s101, %s117
      %p119 = scmp.eq.s32.totalorder %s30, 0
      %p120 = por %p118, %p119
      %s121 = ssub.s32 %s24, %s31
      %p122 = scmp.eq.s32.totalorder %s121, 0
      %s124 = sadd.s32 %s123, 1
      %s125 = scalar_select %p122, %s123, %s124
      %p128 = pneg %p122
      %p129 = scmp.eq.s32.totalorder %s24, 3
      %p130 = por %p128, %p129
      %p131 = scmp.ne.s32.totalorder %s123, %s126
      %p132 = scmp.eq.s32.totalorder %s24, 0
      %p133 = por %p131, %p132
      %p134 = scmp.ne.s32.totalorder %s123, %s126
      %p135 = scmp.eq.s32.totalorder %s29, 3
      %p136 = por %p134, %p135
      %p137 = scmp.ne.s32.totalorder %s126, %s127
      %p138 = scmp.eq.s32.totalorder %s29, 0
      %p139 = por %p137, %p138
      %p140 = scmp.ne.s32.totalorder %s126, %s127
      %p141 = scmp.eq.s32.totalorder %s30, 3
      %p142 = por %p140, %p141
      %p144 = scmp.ne.s32.totalorder %s127, %s143
      %p145 = scmp.eq.s32.totalorder %s30, 0
      %p146 = por %p144, %p145
      %s147 = ssub.s32 %s24, %s31
      %p148 = scmp.eq.s32.totalorder %s147, 0
      %s150 = sadd.s32 %s149, 1
      %s151 = scalar_select %p148, %s149, %s150
      %p154 = pneg %p148
      %p155 = scmp.eq.s32.totalorder %s24, 3
      %p156 = por %p154, %p155
      %p157 = scmp.ne.s32.totalorder %s149, %s152
      %p158 = scmp.eq.s32.totalorder %s24, 0
      %p159 = por %p157, %p158
      %p160 = scmp.ne.s32.totalorder %s149, %s152
      %p161 = scmp.eq.s32.totalorder %s29, 3
      %p162 = por %p160, %p161
      %p163 = scmp.ne.s32.totalorder %s152, %s153
      %p164 = scmp.eq.s32.totalorder %s29, 0
      %p165 = por %p163, %p164
      %p166 = scmp.ne.s32.totalorder %s152, %s153
      %p167 = scmp.eq.s32.totalorder %s30, 3
      %p168 = por %p166, %p167
      %p170 = scmp.ne.s32.totalorder %s153, %s169
      %p171 = scmp.eq.s32.totalorder %s30, 0
      %p172 = por %p170, %p171
      %s173 = ssub.s32 %s24, %s31
      %p174 = scmp.eq.s32.totalorder %s173, 0
      %s176 = sadd.s32 %s175, 1
      %s177 = scalar_select %p174, %s175, %s176
      %p180 = pneg %p174
      %p181 = scmp.eq.s32.totalorder %s24, 3
      %p182 = por %p180, %p181
      %p183 = scmp.ne.s32.totalorder %s175, %s178
      %p184 = scmp.eq.s32.totalorder %s24, 0
      %p185 = por %p183, %p184
      %p186 = scmp.ne.s32.totalorder %s175, %s178
      %p187 = scmp.eq.s32.totalorder %s29, 3
      %p188 = por %p186, %p187
      %p189 = scmp.ne.s32.totalorder %s178, %s179
      %p190 = scmp.eq.s32.totalorder %s29, 0
      %p191 = por %p189, %p190
      %p192 = scmp.ne.s32.totalorder %s178, %s179
      %p193 = scmp.eq.s32.totalorder %s30, 3
      %p194 = por %p192, %p193
      %p196 = scmp.ne.s32.totalorder %s179, %s195
      %p197 = scmp.eq.s32.totalorder %s30, 0
      %p198 = por %p196, %p197
      %s199 = ssub.s32 %s24, %s31
      %p200 = scmp.eq.s32.totalorder %s199, 0
      %s202 = sadd.s32 %s201, 1
      %s203 = scalar_select %p200, %s201, %s202
      %p206 = pneg %p200
      %p207 = scmp.eq.s32.totalorder %s24, 3
      %p208 = por %p206, %p207
      %p209 = scmp.ne.s32.totalorder %s201, %s204
      %p210 = scmp.eq.s32.totalorder %s24, 0
      %p211 = por %p209, %p210
      %p212 = scmp.ne.s32.totalorder %s201, %s204
      %p213 = scmp.eq.s32.totalorder %s29, 3
      %p214 = por %p212, %p213
      %p215 = scmp.ne.s32.totalorder %s204, %s205
      %p216 = scmp.eq.s32.totalorder %s29, 0
      %p217 = por %p215, %p216
      %p218 = scmp.ne.s32.totalorder %s204, %s205
      %p219 = scmp.eq.s32.totalorder %s30, 3
      %p220 = por %p218, %p219
      %p222 = scmp.ne.s32.totalorder %s205, %s221
      %p223 = scmp.eq.s32.totalorder %s30, 0
      %p224 = por %p222, %p223
      %s225 = ssub.s32 %s24, %s31
      %p226 = scmp.eq.s32.totalorder %s225, 0
      %s228 = sadd.s32 %s227, 1
      %s229 = scalar_select %p226, %s227, %s228
      %p232 = pneg %p226
      %p233 = scmp.eq.s32.totalorder %s24, 3
      %p234 = por %p232, %p233
      %p235 = scmp.ne.s32.totalorder %s227, %s230
      %p236 = scmp.eq.s32.totalorder %s24, 0
      %p237 = por %p235, %p236
      %p238 = scmp.ne.s32.totalorder %s227, %s230
      %p239 = scmp.eq.s32.totalorder %s29, 3
      %p240 = por %p238, %p239
      %p241 = scmp.ne.s32.totalorder %s230, %s231
      %p242 = scmp.eq.s32.totalorder %s29, 0
      %p243 = por %p241, %p242
      %p244 = scmp.ne.s32.totalorder %s230, %s231
      %p245 = scmp.eq.s32.totalorder %s30, 3
      %p246 = por %p244, %p245
      %p248 = scmp.ne.s32.totalorder %s231, %s247
      %p249 = scmp.eq.s32.totalorder %s30, 0
      %p250 = por %p248, %p249
      %s251 = ssub.s32 %s24, %s31
      %p252 = scmp.eq.s32.totalorder %s251, 0
      %s254 = sadd.s32 %s253, 1
      %s255 = scalar_select %p252, %s253, %s254
      %p258 = pneg %p252
      %p259 = scmp.eq.s32.totalorder %s24, 3
      %p260 = por %p258, %p259
      %p261 = scmp.ne.s32.totalorder %s253, %s256
      %p262 = scmp.eq.s32.totalorder %s24, 0
      %p263 = por %p261, %p262
      %p264 = scmp.ne.s32.totalorder %s253, %s256
      %p265 = scmp.eq.s32.totalorder %s29, 3
      %p266 = por %p264, %p265
      %p267 = scmp.ne.s32.totalorder %s256, %s257
      %p268 = scmp.eq.s32.totalorder %s29, 0
      %p269 = por %p267, %p268
      %p270 = scmp.ne.s32.totalorder %s256, %s257
      %p271 = scmp.eq.s32.totalorder %s30, 3
      %p272 = por %p270, %p271
      %p274 = scmp.ne.s32.totalorder %s257, %s273
      %p275 = scmp.eq.s32.totalorder %s30, 0
      %p276 = por %p274, %p275
      %s277 = ssub.s32 %s24, %s31
      %p278 = scmp.eq.s32.totalorder %s277, 0
      %s280 = sadd.s32 %s279, 1
      %s281 = scalar_select %p278, %s279, %s280
      %p284 = pneg %p278
      %p285 = scmp.eq.s32.totalorder %s24, 3
      %p286 = por %p284, %p285
      %p287 = scmp.ne.s32.totalorder %s279, %s282
      %p288 = scmp.eq.s32.totalorder %s24, 0
      %p289 = por %p287, %p288
      %p290 = scmp.ne.s32.totalorder %s279, %s282
      %p291 = scmp.eq.s32.totalorder %s29, 3
      %p292 = por %p290, %p291
      %p293 = scmp.ne.s32.totalorder %s282, %s283
      %p294 = scmp.eq.s32.totalorder %s29, 0
      %p295 = por %p293, %p294
      %p296 = scmp.ne.s32.totalorder %s282, %s283
      %p297 = scmp.eq.s32.totalorder %s30, 3
      %p298 = por %p296, %p297
      %p300 = scmp.ne.s32.totalorder %s283, %s299
      %p301 = scmp.eq.s32.totalorder %s30, 0
      %p302 = por %p300, %p301
      %s303 = ssub.s32 %s24, %s31
      %p304 = scmp.eq.s32.totalorder %s303, 0
      %s306 = sadd.s32 %s305, 1
      %s307 = scalar_select %p304, %s305, %s306
      %p310 = pneg %p304
      %p311 = scmp.eq.s32.totalorder %s24, 3
      %p312 = por %p310, %p311
      %p313 = scmp.ne.s32.totalorder %s305, %s308
      %p314 = scmp.eq.s32.totalorder %s24, 0
      %p315 = por %p313, %p314
      %p316 = scmp.ne.s32.totalorder %s305, %s308
      %p317 = scmp.eq.s32.totalorder %s29, 3
      %p318 = por %p316, %p317
      %p319 = scmp.ne.s32.totalorder %s308, %s309
      %p320 = scmp.eq.s32.totalorder %s29, 0
      %p321 = por %p319, %p320
      %p322 = scmp.ne.s32.totalorder %s308, %s309
      %p323 = scmp.eq.s32.totalorder %s30, 3
      %p324 = por %p322, %p323
      %p326 = scmp.ne.s32.totalorder %s309, %s325
      %p327 = scmp.eq.s32.totalorder %s30, 0
      %p328 = por %p326, %p327
      %s329 = ssub.s32 %s24, %s31
      %p330 = scmp.eq.s32.totalorder %s329, 0
      %s332 = sadd.s32 %s331, 1
      %s333 = scalar_select %p330, %s331, %s332
      %p336 = pneg %p330
      %p337 = scmp.eq.s32.totalorder %s24, 3
      %p338 = por %p336, %p337
      %p339 = scmp.ne.s32.totalorder %s331, %s334
      %p340 = scmp.eq.s32.totalorder %s24, 0
      %p341 = por %p339, %p340
      %p342 = scmp.ne.s32.totalorder %s331, %s334
      %p343 = scmp.eq.s32.totalorder %s29, 3
      %p344 = por %p342, %p343
      %p345 = scmp.ne.s32.totalorder %s334, %s335
      %p346 = scmp.eq.s32.totalorder %s29, 0
      %p347 = por %p345, %p346
      %p348 = scmp.ne.s32.totalorder %s334, %s335
      %p349 = scmp.eq.s32.totalorder %s30, 3
      %p350 = por %p348, %p349
      %p352 = scmp.ne.s32.totalorder %s335, %s351
      %p353 = scmp.eq.s32.totalorder %s30, 0
      %p354 = por %p352, %p353
      %s355 = ssub.s32 %s24, %s31
      %p356 = scmp.eq.s32.totalorder %s355, 0
      %s358 = sadd.s32 %s357, 1
      %s359 = scalar_select %p356, %s357, %s358
      %p362 = pneg %p356
      %p363 = scmp.eq.s32.totalorder %s24, 3
      %p364 = por %p362, %p363
      %p365 = scmp.ne.s32.totalorder %s357, %s360
      %p366 = scmp.eq.s32.totalorder %s24, 0
      %p367 = por %p365, %p366
      %p368 = scmp.ne.s32.totalorder %s357, %s360
      %p369 = scmp.eq.s32.totalorder %s29, 3
      %p370 = por %p368, %p369
      %p371 = scmp.ne.s32.totalorder %s360, %s361
      %p372 = scmp.eq.s32.totalorder %s29, 0
      %p373 = por %p371, %p372
      %p374 = scmp.ne.s32.totalorder %s360, %s361
      %p375 = scmp.eq.s32.totalorder %s30, 3
      %p376 = por %p374, %p375
      %p378 = scmp.ne.s32.totalorder %s361, %s377
      %p379 = scmp.eq.s32.totalorder %s30, 0
      %p380 = por %p378, %p379
      %s381 = ssub.s32 %s24, %s31
      %p382 = scmp.eq.s32.totalorder %s381, 0
      %s384 = sadd.s32 %s383, 1
      %s385 = scalar_select %p382, %s383, %s384
      %p388 = pneg %p382
      %p389 = scmp.eq.s32.totalorder %s24, 3
      %p390 = por %p388, %p389
      %p391 = scmp.ne.s32.totalorder %s383, %s386
      %p392 = scmp.eq.s32.totalorder %s24, 0
      %p393 = por %p391, %p392
      %p394 = scmp.ne.s32.totalorder %s383, %s386
      %p395 = scmp.eq.s32.totalorder %s29, 3
      %p396 = por %p394, %p395
      %p397 = scmp.ne.s32.totalorder %s386, %s387
      %p398 = scmp.eq.s32.totalorder %s29, 0
      %p399 = por %p397, %p398
      %p400 = scmp.ne.s32.totalorder %s386, %s387
      %p401 = scmp.eq.s32.totalorder %s30, 3
      %p402 = por %p400, %p401
      %p404 = scmp.ne.s32.totalorder %s387, %s403
      %p405 = scmp.eq.s32.totalorder %s30, 0
      %p406 = por %p404, %p405
      %s408 = sadd.s32 %s407, 1
      %p411 = scmp.eq.s32.totalorder %s24, 3
      %p412 = scmp.ne.s32.totalorder %s407, %s409
      %p413 = scmp.eq.s32.totalorder %s24, 0
      %p414 = por %p412, %p413
      %p415 = scmp.ne.s32.totalorder %s407, %s409
      %p416 = scmp.eq.s32.totalorder %s29, 3
      %p417 = por %p415, %p416
      %p418 = scmp.ne.s32.totalorder %s409, %s410
      %p419 = scmp.eq.s32.totalorder %s29, 0
      %p420 = por %p418, %p419
      %p421 = scmp.ne.s32.totalorder %s409, %s410
      %p422 = scmp.eq.s32.totalorder %s30, 3
      %p423 = por %p421, %p422
      %p425 = scmp.ne.s32.totalorder %s410, %s424
      %p426 = scmp.eq.s32.totalorder %s30, 0
      %p427 = por %p425, %p426
      %p428 = scmp.le.s32.totalorder 1, %s24
      %p429 = scmp.lt.s32.totalorder %s24, 5
      %p430 = pnand %p428, %p429
      %p431 = pneg %p430
      // Predicated region
      $region9: #{tpu_custom_call.1} parent=5 // pred_check
        _
      $region10: #{tpu_custom_call.1} parent=5 // pred_check_branch
        %433 = sbr.rel (%p430) target = $region12
      $region11: #{tpu_custom_call.1} parent=5 // pred_region
        %s434 = ssub.s32 %s24, 1
        // Predicated region
        $region13: #{tpu_custom_call.1} parent=11 // pred_check
          %p435 = pneg %p45
        $region14: #{tpu_custom_call.1} parent=11 // pred_check_branch
          %437 = sbr.rel (%p435) target = $region16
        $region15: #{tpu_custom_call.1} parent=11 // pred_region
          %s439 = ssub.s32 256, 256
          %440 = vsyncadd [#allocation4], %s439
          %s441 = sshll.u32 [#allocation3], 4
          %s442 = int_to_ptr.vmem [resolvable:$true] %s441
          %447 = dma.hbm_to_vmem [thread:$0]  %s0, 256, %s442, [#allocation4], 128, 128, 8
        $region16: #{tpu_custom_call.1} parent=11 // pred_fallthru
          _
        // Predicated region
        $region17: #{tpu_custom_call.1} parent=11 // pred_check
          %p448 = pneg %p66
        $region18: #{tpu_custom_call.1} parent=11 // pred_check_branch
          %450 = sbr.rel (%p448) target = $region20
        $region19: #{tpu_custom_call.1} parent=11 // pred_region
          %s452 = ssub.s32 16, 16
          %453 = vsyncadd [#allocation7], %s452
          %s455 = sshll.u32 [#allocation6], 4
          %s456 = int_to_ptr.vmem [resolvable:$true] %s455
          %458 = dma.hbm_to_vmem [thread:$0]  %s1, 16, %s456, [#allocation7]
        $region20: #{tpu_custom_call.1} parent=11 // pred_fallthru
          _
        // Predicated region
        $region21: #{tpu_custom_call.1} parent=11 // pred_check
          %p459 = pneg %p87
        $region22: #{tpu_custom_call.1} parent=11 // pred_check_branch
          %461 = sbr.rel (%p459) target = $region24
        $region23: #{tpu_custom_call.1} parent=11 // pred_region
          _
        $region24: #{tpu_custom_call.1} parent=11 // pred_fallthru
          _
      $region12: #{tpu_custom_call.1} parent=5 // pred_fallthru
        _
      %p462 = scmp.lt.s32.totalorder %s24, 4
      // Predicated region
      $region25: #{tpu_custom_call.1} parent=5 // pred_check
        %p463 = pneg %p462
      $region26: #{tpu_custom_call.1} parent=5 // pred_check_branch
        %465 = sbr.rel (%p463) target = $region28
      $region27: #{tpu_custom_call.1} parent=5 // pred_region
        // Predicated region
        $region29: #{tpu_custom_call.1} parent=27 // pred_check
          %p466 = pneg %p107
        $region30: #{tpu_custom_call.1} parent=27 // pred_check_branch
          %468 = sbr.rel (%p466) target = $region32
        $region31: #{tpu_custom_call.1} parent=27 // pred_region
          %p469 = scmp.lt.s32.totalorder %s24, 3
          %s470 = scalar_select %p469, %s24, 3
          %s471 = smul.addr %s470, 4
          %s472 = smul.addr %s471, 8
          %s473 = scalar_lea.vmem %s3, %s472
        $region32: #{tpu_custom_call.1} parent=27 // pred_fallthru
          _
        // Predicated region
        $region33: #{tpu_custom_call.1} parent=27 // pred_check
          %p474 = pneg %p133
        $region34: #{tpu_custom_call.1} parent=27 // pred_check_branch
          %476 = sbr.rel (%p474) target = $region36
        $region35: #{tpu_custom_call.1} parent=27 // pred_region
          %p477 = scmp.lt.s32.totalorder %s24, 3
          %s478 = scalar_select %p477, %s24, 3
          %s479 = scalar_lea.vmem %s4, %s478
        $region36: #{tpu_custom_call.1} parent=27 // pred_fallthru
          _
        // Predicated region
        $region37: #{tpu_custom_call.1} parent=27 // pred_check
          %p480 = pneg %p159
        $region38: #{tpu_custom_call.1} parent=27 // pred_check_branch
          %482 = sbr.rel (%p480) target = $region40
        $region39: #{tpu_custom_call.1} parent=27 // pred_region
          %p483 = scmp.lt.s32.totalorder %s24, 3
          %s484 = scalar_select %p483, %s24, 3
          %s485 = smul.addr %s484, 4
          %s486 = smul.addr %s485, 8
          %s487 = scalar_lea.vmem %s5, %s486
        $region40: #{tpu_custom_call.1} parent=27 // pred_fallthru
          _
        // Predicated region
        $region41: #{tpu_custom_call.1} parent=27 // pred_check
          %p488 = pneg %p185
        $region42: #{tpu_custom_call.1} parent=27 // pred_check_branch
          %490 = sbr.rel (%p488) target = $region44
        $region43: #{tpu_custom_call.1} parent=27 // pred_region
          %p491 = scmp.lt.s32.totalorder %s24, 3
          %s492 = scalar_select %p491, %s24, 3
          %s493 = scalar_lea.vmem %s6, %s492
        $region44: #{tpu_custom_call.1} parent=27 // pred_fallthru
          _
        // Predicated region
        $region45: #{tpu_custom_call.1} parent=27 // pred_check
          %p494 = pneg %p211
        $region46: #{tpu_custom_call.1} parent=27 // pred_check_branch
          %496 = sbr.rel (%p494) target = $region48
        $region47: #{tpu_custom_call.1} parent=27 // pred_region
          %p497 = scmp.lt.s32.totalorder %s24, 3
          %s498 = scalar_select %p497, %s24, 3
          %s499 = scalar_lea.vmem %s7, %s498
        $region48: #{tpu_custom_call.1} parent=27 // pred_fallthru
          _
        // Predicated region
        $region49: #{tpu_custom_call.1} parent=27 // pred_check
          %p500 = pneg %p237
        $region50: #{tpu_custom_call.1} parent=27 // pred_check_branch
          %502 = sbr.rel (%p500) target = $region52
        $region51: #{tpu_custom_call.1} parent=27 // pred_region
          %p503 = scmp.lt.s32.totalorder %s24, 3
          %s504 = scalar_select %p503, %s24, 3
          %s505 = scalar_lea.vmem %s8, %s504
        $region52: #{tpu_custom_call.1} parent=27 // pred_fallthru
          _
        // Predicated region
        $region53: #{tpu_custom_call.1} parent=27 // pred_check
          %p506 = pneg %p263
        $region54: #{tpu_custom_call.1} parent=27 // pred_check_branch
          %508 = sbr.rel (%p506) target = $region56
        $region55: #{tpu_custom_call.1} parent=27 // pred_region
          %p509 = scmp.lt.s32.totalorder %s24, 3
          %s510 = scalar_select %p509, %s24, 3
          %s511 = smul.addr %s510, 4
          %s512 = smul.addr %s511, 8
          %s513 = scalar_lea.vmem %s9, %s512
        $region56: #{tpu_custom_call.1} parent=27 // pred_fallthru
          _
        // Predicated region
        $region57: #{tpu_custom_call.1} parent=27 // pred_check
          %p514 = pneg %p289
        $region58: #{tpu_custom_call.1} parent=27 // pred_check_branch
          %516 = sbr.rel (%p514) target = $region60
        $region59: #{tpu_custom_call.1} parent=27 // pred_region
          %p517 = scmp.lt.s32.totalorder %s24, 3
          %s518 = scalar_select %p517, %s24, 3
          %s519 = scalar_lea.vmem %s10, %s518
        $region60: #{tpu_custom_call.1} parent=27 // pred_fallthru
          _
        // Predicated region
        $region61: #{tpu_custom_call.1} parent=27 // pred_check
          %p520 = pneg %p315
        $region62: #{tpu_custom_call.1} parent=27 // pred_check_branch
          %522 = sbr.rel (%p520) target = $region64
        $region63: #{tpu_custom_call.1} parent=27 // pred_region
          %p523 = scmp.lt.s32.totalorder %s24, 3
          %s524 = scalar_select %p523, %s24, 3
          %s525 = smul.addr %s524, 8
          %s526 = smul.addr %s525, 8
          %s527 = scalar_lea.vmem %s11, %s526
        $region64: #{tpu_custom_call.1} parent=27 // pred_fallthru
          _
        // Predicated region
        $region65: #{tpu_custom_call.1} parent=27 // pred_check
          %p528 = pneg %p341
        $region66: #{tpu_custom_call.1} parent=27 // pred_check_branch
          %530 = sbr.rel (%p528) target = $region68
        $region67: #{tpu_custom_call.1} parent=27 // pred_region
          %p531 = scmp.lt.s32.totalorder %s24, 3
          %s532 = scalar_select %p531, %s24, 3
          %s533 = scalar_lea.vmem %s12, %s532
        $region68: #{tpu_custom_call.1} parent=27 // pred_fallthru
          _
        // Predicated region
        $region69: #{tpu_custom_call.1} parent=27 // pred_check
          %p534 = pneg %p367
        $region70: #{tpu_custom_call.1} parent=27 // pred_check_branch
          %536 = sbr.rel (%p534) target = $region72
        $region71: #{tpu_custom_call.1} parent=27 // pred_region
          %p537 = scmp.lt.s32.totalorder %s24, 3
          %s538 = scalar_select %p537, %s24, 3
          %s539 = scalar_lea.vmem %s13, %s538
        $region72: #{tpu_custom_call.1} parent=27 // pred_fallthru
          _
        // Predicated region
        $region73: #{tpu_custom_call.1} parent=27 // pred_check
          %p540 = pneg %p393
        $region74: #{tpu_custom_call.1} parent=27 // pred_check_branch
          %542 = sbr.rel (%p540) target = $region76
        $region75: #{tpu_custom_call.1} parent=27 // pred_region
          %p543 = scmp.lt.s32.totalorder %s24, 3
          %s544 = scalar_select %p543, %s24, 3
          %s545 = scalar_lea.vmem %s14, %s544
        $region76: #{tpu_custom_call.1} parent=27 // pred_fallthru
          _
      $region28: #{tpu_custom_call.1} parent=5 // pred_fallthru
        _
      %p546 = scmp.le.s32.totalorder 1, %s24
      %p547 = scmp.lt.s32.totalorder %s24, 5
      %p548 = pnand %p546, %p547
      %p549 = pneg %p548
      // Predicated region
      $region77: #{tpu_custom_call.1} parent=5 // pred_check
        _
      $region78: #{tpu_custom_call.1} parent=5 // pred_check_branch
        %551 = sbr.rel (%p548) target = $region80
      $region79: #{tpu_custom_call.1} parent=5 // pred_region
        %s552 = ssub.s32 %s24, 1
        // Predicated region
        $region81: #{tpu_custom_call.1} parent=79 // pred_check
          %p553 = pneg %p45
        $region82: #{tpu_custom_call.1} parent=79 // pred_check_branch
          %555 = sbr.rel (%p553) target = $region84
        $region83: #{tpu_custom_call.1} parent=79 // pred_region
          %556 = dma.done [#allocation4], 256
        $region84: #{tpu_custom_call.1} parent=79 // pred_fallthru
          _
        // Predicated region
        $region85: #{tpu_custom_call.1} parent=79 // pred_check
          %p557 = pneg %p66
        $region86: #{tpu_custom_call.1} parent=79 // pred_check_branch
          %559 = sbr.rel (%p557) target = $region88
        $region87: #{tpu_custom_call.1} parent=79 // pred_region
          %560 = dma.done [#allocation7], 16
        $region88: #{tpu_custom_call.1} parent=79 // pred_fallthru
          _
        %p561 = pneg %p45
        %p562 = pneg %p42
        %p563 = pneg %p66
        %p564 = pneg %p63
        %p565 = pneg %p87
        %p566 = pneg %p84
        %p567 = scmp.lt.s32.totalorder %s29, 3
        %s568 = scalar_select %p567, %s29, 3
        %s569 = smul.addr %s568, 4
        %s570 = smul.addr %s569, 8
        %s571 = scalar_lea.vmem %s3, %s570
        %p572 = pneg %p113
        %p573 = pneg %p110
        %p574 = scmp.lt.s32.totalorder %s29, 3
        %s575 = scalar_select %p574, %s29, 3
        %s576 = scalar_lea.vmem %s4, %s575
        %p577 = pneg %p139
        %p578 = pneg %p136
        %p579 = scmp.lt.s32.totalorder %s29, 3
        %s580 = scalar_select %p579, %s29, 3
        %s581 = smul.addr %s580, 4
        %s582 = smul.addr %s581, 8
        %s583 = scalar_lea.vmem %s5, %s582
        %p584 = pneg %p165
        %p585 = pneg %p162
        %p586 = scmp.lt.s32.totalorder %s29, 3
        %s587 = scalar_select %p586, %s29, 3
        %s588 = scalar_lea.vmem %s6, %s587
        %p589 = pneg %p191
        %p590 = pneg %p188
        %p591 = scmp.lt.s32.totalorder %s29, 3
        %s592 = scalar_select %p591, %s29, 3
        %s593 = scalar_lea.vmem %s7, %s592
        %p594 = pneg %p217
        %p595 = pneg %p214
        %p596 = scmp.lt.s32.totalorder %s29, 3
        %s597 = scalar_select %p596, %s29, 3
        %s598 = scalar_lea.vmem %s8, %s597
        %p599 = pneg %p243
        %p600 = pneg %p240
        %p601 = scmp.lt.s32.totalorder %s29, 3
        %s602 = scalar_select %p601, %s29, 3
        %s603 = smul.addr %s602, 4
        %s604 = smul.addr %s603, 8
        %s605 = scalar_lea.vmem %s9, %s604
        %p606 = pneg %p269
        %p607 = pneg %p266
        %p608 = scmp.lt.s32.totalorder %s29, 3
        %s609 = scalar_select %p608, %s29, 3
        %s610 = scalar_lea.vmem %s10, %s609
        %p611 = pneg %p295
        %p612 = pneg %p292
        %p613 = scmp.lt.s32.totalorder %s29, 3
        %s614 = scalar_select %p613, %s29, 3
        %s615 = smul.addr %s614, 8
        %s616 = smul.addr %s615, 8
        %s617 = scalar_lea.vmem %s11, %s616
        %p618 = pneg %p321
        %p619 = pneg %p318
        %p620 = scmp.lt.s32.totalorder %s29, 3
        %s621 = scalar_select %p620, %s29, 3
        %s622 = scalar_lea.vmem %s12, %s621
        %p623 = pneg %p347
        %p624 = pneg %p344
        %p625 = scmp.lt.s32.totalorder %s29, 3
        %s626 = scalar_select %p625, %s29, 3
        %s627 = scalar_lea.vmem %s13, %s626
        %p628 = pneg %p373
        %p629 = pneg %p370
        %p630 = scmp.lt.s32.totalorder %s29, 3
        %s631 = scalar_select %p630, %s29, 3
        %s632 = scalar_lea.vmem %s14, %s631
        %p633 = pneg %p399
        %p634 = pneg %p396
        %p635 = pneg %p420
        %p636 = pneg %p417
        %p637 = scmp.lt.s32.totalorder %s29, 3
        %s638 = scalar_select %p637, %s29, 3
        %s639 = smul.addr %s638, 4
        %s640 = smul.addr %s639, 8
        %s641 = scalar_lea.vmem %s3, %s640
        %p642 = scmp.lt.s32.totalorder %s29, 3
        %s643 = scalar_select %p642, %s29, 3
        %s644 = scalar_lea.vmem %s4, %s643
        %p645 = scmp.lt.s32.totalorder %s29, 3
        %s646 = scalar_select %p645, %s29, 3
        %s647 = smul.addr %s646, 4
        %s648 = smul.addr %s647, 8
        %s649 = scalar_lea.vmem %s5, %s648
        %p650 = scmp.lt.s32.totalorder %s29, 3
        %s651 = scalar_select %p650, %s29, 3
        %s652 = scalar_lea.vmem %s6, %s651
        %p653 = scmp.lt.s32.totalorder %s29, 3
        %s654 = scalar_select %p653, %s29, 3
        %s655 = scalar_lea.vmem %s7, %s654
        %p656 = scmp.lt.s32.totalorder %s29, 3
        %s657 = scalar_select %p656, %s29, 3
        %s658 = scalar_lea.vmem %s8, %s657
        %p659 = scmp.lt.s32.totalorder %s29, 3
        %s660 = scalar_select %p659, %s29, 3
        %s661 = smul.addr %s660, 4
        %s662 = smul.addr %s661, 8
        %s663 = scalar_lea.vmem %s9, %s662
        %p664 = scmp.lt.s32.totalorder %s29, 3
        %s665 = scalar_select %p664, %s29, 3
        %s666 = scalar_lea.vmem %s10, %s665
        %p667 = scmp.lt.s32.totalorder %s29, 3
        %s668 = scalar_select %p667, %s29, 3
        %s669 = smul.addr %s668, 8
        %s670 = smul.addr %s669, 8
        %s671 = scalar_lea.vmem %s11, %s670
        %p672 = scmp.lt.s32.totalorder %s29, 3
        %s673 = scalar_select %p672, %s29, 3
        %s674 = scalar_lea.vmem %s12, %s673
        %p675 = scmp.lt.s32.totalorder %s29, 3
        %s676 = scalar_select %p675, %s29, 3
        %s677 = scalar_lea.vmem %s13, %s676
        %p678 = scmp.lt.s32.totalorder %s29, 3
        %s679 = scalar_select %p678, %s29, 3
        %s680 = scalar_lea.vmem %s14, %s679
        %p681 = scmp.eq.s32.totalorder %s29, 0
        // Predicated region
        $region89: #{tpu_custom_call.1} parent=79 // pred_check
          %p682 = pneg %p681
        $region90: #{tpu_custom_call.1} parent=79 // pred_check_branch
          %684 = sbr.rel (%p682) target = $region92
        $region91: #{tpu_custom_call.1} parent=79 // pred_region
          %v685 = vld [vmem:[#allocation3] sm:$0xff]
          %v686 = vld [vmem:[#allocation3 + $0x8] sm:$0xff]
          %v687 = vld [vmem:[#allocation6] sm:$0x1]
          %v688 = vld [vmem:[%s2] sm:$0x1]
          %vm689 = vcmask 261120
          %v690 = vsel %vm689, %v685, 0.0
          %691 = vadd.xlane.f32.xlu0 %v690
          %v692 = vpop.xlane.xlu0 %691
          %v693 = vsel %vm689, %v686, 0.0
          %694 = vadd.xlane.f32.xlu0 %v693
          %v695 = vpop.xlane.xlu0 %694
          %v696 = vrcp.pop 32.0
          %v697 = vmul.f32 %v692, %v696
          %v698 = vmul.f32 %v695, %v696
          %v699 = vsub.f32 %v685, %v697
          %v700 = vsub.f32 %v686, %v698
          %v701 = vmul.f32 %v699, %v699
          %v702 = vmul.f32 %v700, %v700
          %v703 = vsel %vm689, %v701, 0.0
          %704 = vadd.xlane.f32.xlu0 %v703
          %v705 = vpop.xlane.xlu0 %704
          %v706 = vsel %vm689, %v702, 0.0
          %707 = vadd.xlane.f32.xlu0 %v706
          %v708 = vpop.xlane.xlu0 %707
          %v709 = vmul.f32 %v705, %v696
          %v710 = vmul.f32 %v708, %v696
          %v711 = vadd.f32 %v709, 1e-12
          %v712 = vadd.f32 %v710, 1e-12
          %v713 = vrsqrt.pop %v711
          %v714 = vrsqrt.pop %v712
          %v715 = vmul.f32 %v699, %v713
          %v716 = vmul.f32 %v700, %v714
          %v718 = vlaneseq
          %v719 = vshrl.u32 %v718, 7
          %v720 = vsub.s32 0, %v719
          %v721 = vrot.slane %v687, %v720
          %v723 = vmul.f32 %v715, %v721
          %v724 = vmul.f32 %v716, %v721
          %v726 = vlaneseq
          %v727 = vshrl.u32 %v726, 7
          %v728 = vsub.s32 0, %v727
          %v729 = vrot.slane %v688, %v728
          %v731 = vadd.f32 %v723, %v729
          %v732 = vadd.f32 %v724, %v729
          %733 = vst.msk [vmem:[#allocation2] sm:$0xff] %vm689, %v731
          %734 = vst.msk [vmem:[#allocation2 + $0x8] sm:$0xff] %vm689, %v732
        $region92: #{tpu_custom_call.1} parent=79 // pred_fallthru
          _
        %v735 = vld [vmem:[#allocation2] sm:$0xff]
        %v736 = vld [vmem:[#allocation2 + $0x8] sm:$0xff]
        %v737 = vld [vmem:[%s641] sm:$0xff]
        %v738 = vld [vmem:[%s641 + $0x8] sm:$0xff]
        %v739 = vld [vmem:[%s641 + $0x10] sm:$0xff]
        %v740 = vld [vmem:[%s641 + $0x18] sm:$0xff]
        %v741 = vld [vmem:[%s644] sm:$0x1]
        %v743 = vlaneseq
        %v744 = vshrl.u32 %v743, 7
        %v745 = vsub.s32 0, %v744
        %v746 = vrot.slane %v741, %v745
        %vm748 = vcmask 261120
        %v750 = vsel %vm748, %v735, 0
        %v753 = vsel %vm748, %v736, 0
        %755 = vmatprep.subr.mxu0 0.0
        %756 = vmatpush1.msra.mxu0 %v737
        %757 = vmatprep.subr.mxu0 0.0
        %758 = vmatpush1.msra.mxu0 %v738
        %759 = vmatprep.subr.mxu0 0.0
        %760 = vmatpush1.msra.mxu0 %v739
        %761 = vmatprep.subr.mxu0 0.0
        %762 = vmatpush1.msra.mxu0 %v740
        %763 = vmatprep.subr.mxu0 0.0
        %764 = vmatpush1.msra.mxu0 0.0
        %765 = vmatprep.subr.mxu0 0.0
        %766 = vmatpush1.msra.mxu0 0.0
        %767 = vmatprep.subr.mxu0 0.0
        %768 = vmatpush1.msra.mxu0 0.0
        %769 = vmatprep.subr.mxu0 0.0
        %770 = vmatpush1.msra.mxu0 0.0
        %771 = vmatprep.subr.mxu0 0.0
        %772 = vmatpush1.msra.mxu0 0.0
        %773 = vmatprep.subr.mxu0 0.0
        %774 = vmatpush1.msra.mxu0 0.0
        %775 = vmatprep.subr.mxu0 0.0
        %776 = vmatpush1.msra.mxu0 0.0
        %777 = vmatprep.subr.mxu0 0.0
        %778 = vmatpush1.msra.mxu0 0.0
        %779 = vmatprep.subr.mxu0 0.0
        %780 = vmatpush1.msra.mxu0 0.0
        %781 = vmatprep.subr.mxu0 0.0
        %782 = vmatpush1.msra.mxu0 0.0
        %783 = vmatprep.subr.mxu0 0.0
        %784 = vmatpush1.msra.mxu0 0.0
        %785 = vmatprep.subr.mxu0 0.0
        %786 = vmatpush1.msra.mxu0 0.0
        %787 = vmatprep.subr.mxu0 0.0
        %788 = vmatpush1.msra.mxu0 0.0
        %789 = vmatprep.subr.mxu0 0.0
        %790 = vmatpush1.msra.mxu0 0.0
        %791 = vmatprep.subr.mxu0 0.0
        %792 = vmatpush1.msra.mxu0 0.0
        %793 = vmatprep.subr.mxu0 0.0
        %794 = vmatpush1.msra.mxu0 0.0
        %795 = vmatprep.subr.mxu0 0.0
        %796 = vmatpush1.msra.mxu0 0.0
        %797 = vmatprep.subr.mxu0 0.0
        %798 = vmatpush1.msra.mxu0 0.0
        %799 = vmatprep.subr.mxu0 0.0
        %800 = vmatpush1.msra.mxu0 0.0
        %801 = vmatprep.subr.mxu0 0.0
        %802 = vmatpush1.msra.mxu0 0.0
        %803 = vmatprep.subr.mxu0 0.0
        %804 = vmatpush1.msra.mxu0 0.0
        %805 = vmatprep.subr.mxu0 0.0
        %806 = vmatpush1.msra.mxu0 0.0
        %807 = vmatprep.subr.mxu0 0.0
        %808 = vmatpush1.msra.mxu0 0.0
        %809 = vmatprep.subr.mxu0 0.0
        %810 = vmatpush1.msra.mxu0 0.0
        %811 = vmatprep.subr.mxu0 0.0
        %812 = vmatpush1.msra.mxu0 0.0
        %813 = vmatprep.subr.mxu0 0.0
        %814 = vmatpush1.msra.mxu0 0.0
        %815 = vmatprep.subr.mxu0 0.0
        %816 = vmatpush1.msra.mxu0 0.0
        %817 = vmatprep.subr.mxu0 0.0
        %818 = vmatpush1.msra.mxu0 0.0
        %819 = vmatprep.mubr.f32.mxu0 0.0
        %820 = vmatmul.mubr.f32.gmra.mrb[0].mxu0 %v750
        %v821 = vpop.f32.mrb[0].mxu0
        %v822 = vadd.f32 %v746, %v821
        %v823 = vpop.f32.mrb[0].mxu0
        %824 = vmatprep.mubr.f32.mxu0 0.0
        %825 = vmatmul.mubr.f32.gmra.mrb[0].mxu0 %v753
        %v826 = vpop.f32.mrb[0].mxu0
        %v827 = vadd.f32 %v746, %v826
        %v828 = vpop.f32.mrb[0].mxu0
        %829 = vdwg.mxu0
        %v830 = vmul.f32 %v822, 0.35355338
        %v831 = vmul.f32 %v827, 0.35355338
        %v832 = vld [vmem:[%s649] sm:$0xff]
        %v833 = vld [vmem:[%s649 + $0x8] sm:$0xff]
        %v834 = vld [vmem:[%s649 + $0x10] sm:$0xff]
        %v835 = vld [vmem:[%s649 + $0x18] sm:$0xff]
        %v836 = vld [vmem:[%s652] sm:$0x1]
        %v838 = vlaneseq
        %v839 = vshrl.u32 %v838, 7
        %v840 = vsub.s32 0, %v839
        %v841 = vrot.slane %v836, %v840
        %v843 = vadd.f32 %v841, 0.0
        %845 = vrot.lane.b32.xlu0 %v822, 96
        %v846 = vpop.permute.xlu0 %845
        %vm847 = vcmask 64512
        %v849 = vsel %vm847, %v830, 0
        %v851 = vsel %vm847, %v846, 0
        %853 = vmatprep.subr.mxu0 0.0
        %854 = vmatpush1.xpose.msra.mxu0 %v851
        %855 = vmatprep.subr.mxu0 0.0
        %856 = vmatpush1.xpose.msra.mxu0 0.0
        %857 = vmatprep.subr.mxu0 0.0
        %858 = vmatpush1.xpose.msra.mxu0 0.0
        %859 = vmatprep.subr.mxu0 0.0
        %860 = vmatpush1.xpose.msra.mxu0 0.0
        %861 = vmatprep.subr.mxu0 0.0
        %862 = vmatpush1.xpose.msra.mxu0 0.0
        %863 = vmatprep.subr.mxu0 0.0
        %864 = vmatpush1.xpose.msra.mxu0 0.0
        %865 = vmatprep.subr.mxu0 0.0
        %866 = vmatpush1.xpose.msra.mxu0 0.0
        %867 = vmatprep.subr.mxu0 0.0
        %868 = vmatpush1.xpose.msra.mxu0 0.0
        %869 = vmatprep.subr.mxu0 0.0
        %870 = vmatpush1.xpose.msra.mxu0 0.0
        %871 = vmatprep.subr.mxu0 0.0
        %872 = vmatpush1.xpose.msra.mxu0 0.0
        %873 = vmatprep.subr.mxu0 0.0
        %874 = vmatpush1.xpose.msra.mxu0 0.0
        %875 = vmatprep.subr.mxu0 0.0
        %876 = vmatpush1.xpose.msra.mxu0 0.0
        %877 = vmatprep.subr.mxu0 0.0
        %878 = vmatpush1.xpose.msra.mxu0 0.0
        %879 = vmatprep.subr.mxu0 0.0
        %880 = vmatpush1.xpose.msra.mxu0 0.0
        %881 = vmatprep.subr.mxu0 0.0
        %882 = vmatpush1.xpose.msra.mxu0 0.0
        %883 = vmatprep.subr.mxu0 0.0
        %884 = vmatpush1.xpose.msra.mxu0 0.0
        %885 = vmatprep.subr.mxu0 0.0
        %886 = vmatpush1.xpose.msra.mxu0 0.0
        %887 = vmatprep.subr.mxu0 0.0
        %888 = vmatpush1.xpose.msra.mxu0 0.0
        %889 = vmatprep.subr.mxu0 0.0
        %890 = vmatpush1.xpose.msra.mxu0 0.0
        %891 = vmatprep.subr.mxu0 0.0
        %892 = vmatpush1.xpose.msra.mxu0 0.0
        %893 = vmatprep.subr.mxu0 0.0
        %894 = vmatpush1.xpose.msra.mxu0 0.0
        %895 = vmatprep.subr.mxu0 0.0
        %896 = vmatpush1.xpose.msra.mxu0 0.0
        %897 = vmatprep.subr.mxu0 0.0
        %898 = vmatpush1.xpose.msra.mxu0 0.0
        %899 = vmatprep.subr.mxu0 0.0
        %900 = vmatpush1.xpose.msra.mxu0 0.0
        %901 = vmatprep.subr.mxu0 0.0
        %902 = vmatpush1.xpose.msra.mxu0 0.0
        %903 = vmatprep.subr.mxu0 0.0
        %904 = vmatpush1.xpose.msra.mxu0 0.0
        %905 = vmatprep.subr.mxu0 0.0
        %906 = vmatpush1.xpose.msra.mxu0 0.0
        %907 = vmatprep.subr.mxu0 0.0
        %908 = vmatpush1.xpose.msra.mxu0 0.0
        %909 = vmatprep.subr.mxu0 0.0
        %910 = vmatpush1.xpose.msra.mxu0 0.0
        %911 = vmatprep.subr.mxu0 0.0
        %912 = vmatpush1.xpose.msra.mxu0 0.0
        %913 = vmatprep.subr.mxu0 0.0
        %914 = vmatpush1.xpose.msra.mxu0 0.0
        %915 = vmatprep.subr.mxu0 0.0
        %916 = vmatpush1.xpose.msra.mxu0 0.0
        %917 = vmatprep.mubr.f32.mxu0 0.0
        %918 = vmatmul.mubr.f32.gmra.mrb[0].mxu0 %v849
        %v919 = vpop.f32.mrb[0].mxu0
        %v920 = vadd.f32 0.0, %v919
        %v921 = vpop.f32.mrb[0].mxu0
        %922 = vdwg.mxu0
        %924 = vrot.lane.b32.xlu0 %v827, 96
        %v925 = vpop.permute.xlu0 %924
        %v927 = vsel %vm847, %v831, 0
        %v929 = vsel %vm847, %v925, 0
        %931 = vmatprep.subr.mxu0 0.0
        %932 = vmatpush1.xpose.msra.mxu0 %v929
        %933 = vmatprep.subr.mxu0 0.0
        %934 = vmatpush1.xpose.msra.mxu0 0.0
        %935 = vmatprep.subr.mxu0 0.0
        %936 = vmatpush1.xpose.msra.mxu0 0.0
        %937 = vmatprep.subr.mxu0 0.0
        %938 = vmatpush1.xpose.msra.mxu0 0.0
        %939 = vmatprep.subr.mxu0 0.0
        %940 = vmatpush1.xpose.msra.mxu0 0.0
        %941 = vmatprep.subr.mxu0 0.0
        %942 = vmatpush1.xpose.msra.mxu0 0.0
        %943 = vmatprep.subr.mxu0 0.0
        %944 = vmatpush1.xpose.msra.mxu0 0.0
        %945 = vmatprep.subr.mxu0 0.0
        %946 = vmatpush1.xpose.msra.mxu0 0.0
        %947 = vmatprep.subr.mxu0 0.0
        %948 = vmatpush1.xpose.msra.mxu0 0.0
        %949 = vmatprep.subr.mxu0 0.0
        %950 = vmatpush1.xpose.msra.mxu0 0.0
        %951 = vmatprep.subr.mxu0 0.0
        %952 = vmatpush1.xpose.msra.mxu0 0.0
        %953 = vmatprep.subr.mxu0 0.0
        %954 = vmatpush1.xpose.msra.mxu0 0.0
        %955 = vmatprep.subr.mxu0 0.0
        %956 = vmatpush1.xpose.msra.mxu0 0.0
        %957 = vmatprep.subr.mxu0 0.0
        %958 = vmatpush1.xpose.msra.mxu0 0.0
        %959 = vmatprep.subr.mxu0 0.0
        %960 = vmatpush1.xpose.msra.mxu0 0.0
        %961 = vmatprep.subr.mxu0 0.0
        %962 = vmatpush1.xpose.msra.mxu0 0.0
        %963 = vmatprep.subr.mxu0 0.0
        %964 = vmatpush1.xpose.msra.mxu0 0.0
        %965 = vmatprep.subr.mxu0 0.0
        %966 = vmatpush1.xpose.msra.mxu0 0.0
        %967 = vmatprep.subr.mxu0 0.0
        %968 = vmatpush1.xpose.msra.mxu0 0.0
        %969 = vmatprep.subr.mxu0 0.0
        %970 = vmatpush1.xpose.msra.mxu0 0.0
        %971 = vmatprep.subr.mxu0 0.0
        %972 = vmatpush1.xpose.msra.mxu0 0.0
        %973 = vmatprep.subr.mxu0 0.0
        %974 = vmatpush1.xpose.msra.mxu0 0.0
        %975 = vmatprep.subr.mxu0 0.0
        %976 = vmatpush1.xpose.msra.mxu0 0.0
        %977 = vmatprep.subr.mxu0 0.0
        %978 = vmatpush1.xpose.msra.mxu0 0.0
        %979 = vmatprep.subr.mxu0 0.0
        %980 = vmatpush1.xpose.msra.mxu0 0.0
        %981 = vmatprep.subr.mxu0 0.0
        %982 = vmatpush1.xpose.msra.mxu0 0.0
        %983 = vmatprep.subr.mxu0 0.0
        %984 = vmatpush1.xpose.msra.mxu0 0.0
        %985 = vmatprep.subr.mxu0 0.0
        %986 = vmatpush1.xpose.msra.mxu0 0.0
        %987 = vmatprep.subr.mxu0 0.0
        %988 = vmatpush1.xpose.msra.mxu0 0.0
        %989 = vmatprep.subr.mxu0 0.0
        %990 = vmatpush1.xpose.msra.mxu0 0.0
        %991 = vmatprep.subr.mxu0 0.0
        %992 = vmatpush1.xpose.msra.mxu0 0.0
        %993 = vmatprep.subr.mxu0 0.0
        %994 = vmatpush1.xpose.msra.mxu0 0.0
        %995 = vmatprep.mubr.f32.mxu0 0.0
        %996 = vmatmul.mubr.f32.gmra.mrb[0].mxu0 %v927
        %v997 = vpop.f32.mrb[0].mxu0
        %v998 = vadd.f32 0.0, %v997
        %v999 = vpop.f32.mrb[0].mxu0
        %1000 = vdwg.mxu0
        %v1001 = vsel %vm847, %v920, -inf
        %1002 = vmax.xlane.f32.xlu0 %v1001
        %v1003 = vpop.xlane.xlu0 %1002
        %v1004 = vsel %vm847, %v998, -inf
        %1005 = vmax.xlane.f32.xlu0 %v1004
        %v1006 = vpop.xlane.xlu0 %1005
        %v1007 = vsub.f32 %v920, %v1003
        %v1008 = vsub.f32 %v998, %v1006
        %v1009 = vmul.f32 %v1007, 1.442695
        %v1010 = vpow.pop %v1009
        %v1011 = vmul.f32 %v1008, 1.442695
        %v1012 = vpow.pop %v1011
        %v1013 = vsel %vm847, %v1010, 0.0
        %1014 = vadd.xlane.f32.xlu0 %v1013
        %v1015 = vpop.xlane.xlu0 %1014
        %v1016 = vsel %vm847, %v1012, 0.0
        %1017 = vadd.xlane.f32.xlu0 %v1016
        %v1018 = vpop.xlane.xlu0 %1017
        %v1019 = vrcp.pop %v1015
        %v1020 = vrcp.pop %v1018
        %v1021 = vmul.f32 %v1010, %v1019
        %v1022 = vmul.f32 %v1012, %v1020
        %1023 = vrot.lane.b32.xlu0 %v822, 64
        %v1024 = vpop.permute.xlu0 %1023
        %v1027 = vsel %vm847, %v1021, 0
        %1029 = vmatprep.subr.mxu0 0.0
        %1030 = vmatpush1.msra.mxu0 %v1024
        %1031 = vmatprep.subr.mxu0 0.0
        %1032 = vmatpush1.msra.mxu0 0.0
        %1033 = vmatprep.subr.mxu0 0.0
        %1034 = vmatpush1.msra.mxu0 0.0
        %1035 = vmatprep.subr.mxu0 0.0
        %1036 = vmatpush1.msra.mxu0 0.0
        %1037 = vmatprep.subr.mxu0 0.0
        %1038 = vmatpush1.msra.mxu0 0.0
        %1039 = vmatprep.subr.mxu0 0.0
        %1040 = vmatpush1.msra.mxu0 0.0
        %1041 = vmatprep.subr.mxu0 0.0
        %1042 = vmatpush1.msra.mxu0 0.0
        %1043 = vmatprep.subr.mxu0 0.0
        %1044 = vmatpush1.msra.mxu0 0.0
        %1045 = vmatprep.subr.mxu0 0.0
        %1046 = vmatpush1.msra.mxu0 0.0
        %1047 = vmatprep.subr.mxu0 0.0
        %1048 = vmatpush1.msra.mxu0 0.0
        %1049 = vmatprep.subr.mxu0 0.0
        %1050 = vmatpush1.msra.mxu0 0.0
        %1051 = vmatprep.subr.mxu0 0.0
        %1052 = vmatpush1.msra.mxu0 0.0
        %1053 = vmatprep.subr.mxu0 0.0
        %1054 = vmatpush1.msra.mxu0 0.0
        %1055 = vmatprep.subr.mxu0 0.0
        %1056 = vmatpush1.msra.mxu0 0.0
        %1057 = vmatprep.subr.mxu0 0.0
        %1058 = vmatpush1.msra.mxu0 0.0
        %1059 = vmatprep.subr.mxu0 0.0
        %1060 = vmatpush1.msra.mxu0 0.0
        %1061 = vmatprep.subr.mxu0 0.0
        %1062 = vmatpush1.msra.mxu0 0.0
        %1063 = vmatprep.subr.mxu0 0.0
        %1064 = vmatpush1.msra.mxu0 0.0
        %1065 = vmatprep.subr.mxu0 0.0
        %1066 = vmatpush1.msra.mxu0 0.0
        %1067 = vmatprep.subr.mxu0 0.0
        %1068 = vmatpush1.msra.mxu0 0.0
        %1069 = vmatprep.subr.mxu0 0.0
        %1070 = vmatpush1.msra.mxu0 0.0
        %1071 = vmatprep.subr.mxu0 0.0
        %1072 = vmatpush1.msra.mxu0 0.0
        %1073 = vmatprep.subr.mxu0 0.0
        %1074 = vmatpush1.msra.mxu0 0.0
        %1075 = vmatprep.subr.mxu0 0.0
        %1076 = vmatpush1.msra.mxu0 0.0
        %1077 = vmatprep.subr.mxu0 0.0
        %1078 = vmatpush1.msra.mxu0 0.0
        %1079 = vmatprep.subr.mxu0 0.0
        %1080 = vmatpush1.msra.mxu0 0.0
        %1081 = vmatprep.subr.mxu0 0.0
        %1082 = vmatpush1.msra.mxu0 0.0
        %1083 = vmatprep.subr.mxu0 0.0
        %1084 = vmatpush1.msra.mxu0 0.0
        %1085 = vmatprep.subr.mxu0 0.0
        %1086 = vmatpush1.msra.mxu0 0.0
        %1087 = vmatprep.subr.mxu0 0.0
        %1088 = vmatpush1.msra.mxu0 0.0
        %1089 = vmatprep.subr.mxu0 0.0
        %1090 = vmatpush1.msra.mxu0 0.0
        %1091 = vmatprep.subr.mxu0 0.0
        %1092 = vmatpush1.msra.mxu0 0.0
        %1093 = vmatprep.mubr.f32.mxu0 0.0
        %1094 = vmatmul.mubr.f32.gmra.mrb[0].mxu0 %v1027
        %v1095 = vpop.f32.mrb[0].mxu0
        %v1096 = vadd.f32 0.0, %v1095
        %v1097 = vpop.f32.mrb[0].mxu0
        %1098 = vdwg.mxu0
        %1099 = vrot.lane.b32.xlu0 %v827, 64
        %v1100 = vpop.permute.xlu0 %1099
        %v1103 = vsel %vm847, %v1022, 0
        %1105 = vmatprep.subr.mxu0 0.0
        %1106 = vmatpush1.msra.mxu0 %v1100
        %1107 = vmatprep.subr.mxu0 0.0
        %1108 = vmatpush1.msra.mxu0 0.0
        %1109 = vmatprep.subr.mxu0 0.0
        %1110 = vmatpush1.msra.mxu0 0.0
        %1111 = vmatprep.subr.mxu0 0.0
        %1112 = vmatpush1.msra.mxu0 0.0
        %1113 = vmatprep.subr.mxu0 0.0
        %1114 = vmatpush1.msra.mxu0 0.0
        %1115 = vmatprep.subr.mxu0 0.0
        %1116 = vmatpush1.msra.mxu0 0.0
        %1117 = vmatprep.subr.mxu0 0.0
        %1118 = vmatpush1.msra.mxu0 0.0
        %1119 = vmatprep.subr.mxu0 0.0
        %1120 = vmatpush1.msra.mxu0 0.0
        %1121 = vmatprep.subr.mxu0 0.0
        %1122 = vmatpush1.msra.mxu0 0.0
        %1123 = vmatprep.subr.mxu0 0.0
        %1124 = vmatpush1.msra.mxu0 0.0
        %1125 = vmatprep.subr.mxu0 0.0
        %1126 = vmatpush1.msra.mxu0 0.0
        %1127 = vmatprep.subr.mxu0 0.0
        %1128 = vmatpush1.msra.mxu0 0.0
        %1129 = vmatprep.subr.mxu0 0.0
        %1130 = vmatpush1.msra.mxu0 0.0
        %1131 = vmatprep.subr.mxu0 0.0
        %1132 = vmatpush1.msra.mxu0 0.0
        %1133 = vmatprep.subr.mxu0 0.0
        %1134 = vmatpush1.msra.mxu0 0.0
        %1135 = vmatprep.subr.mxu0 0.0
        %1136 = vmatpush1.msra.mxu0 0.0
        %1137 = vmatprep.subr.mxu0 0.0
        %1138 = vmatpush1.msra.mxu0 0.0
        %1139 = vmatprep.subr.mxu0 0.0
        %1140 = vmatpush1.msra.mxu0 0.0
        %1141 = vmatprep.subr.mxu0 0.0
        %1142 = vmatpush1.msra.mxu0 0.0
        %1143 = vmatprep.subr.mxu0 0.0
        %1144 = vmatpush1.msra.mxu0 0.0
        %1145 = vmatprep.subr.mxu0 0.0
        %1146 = vmatpush1.msra.mxu0 0.0
        %1147 = vmatprep.subr.mxu0 0.0
        %1148 = vmatpush1.msra.mxu0 0.0
        %1149 = vmatprep.subr.mxu0 0.0
        %1150 = vmatpush1.msra.mxu0 0.0
        %1151 = vmatprep.subr.mxu0 0.0
        %1152 = vmatpush1.msra.mxu0 0.0
        %1153 = vmatprep.subr.mxu0 0.0
        %1154 = vmatpush1.msra.mxu0 0.0
        %1155 = vmatprep.subr.mxu0 0.0
        %1156 = vmatpush1.msra.mxu0 0.0
        %1157 = vmatprep.subr.mxu0 0.0
        %1158 = vmatpush1.msra.mxu0 0.0
        %1159 = vmatprep.subr.mxu0 0.0
        %1160 = vmatpush1.msra.mxu0 0.0
        %1161 = vmatprep.subr.mxu0 0.0
        %1162 = vmatpush1.msra.mxu0 0.0
        %1163 = vmatprep.subr.mxu0 0.0
        %1164 = vmatpush1.msra.mxu0 0.0
        %1165 = vmatprep.subr.mxu0 0.0
        %1166 = vmatpush1.msra.mxu0 0.0
        %1167 = vmatprep.subr.mxu0 0.0
        %1168 = vmatpush1.msra.mxu0 0.0
        %1169 = vmatprep.mubr.f32.mxu0 0.0
        %1170 = vmatmul.mubr.f32.gmra.mrb[0].mxu0 %v1103
        %v1171 = vpop.f32.mrb[0].mxu0
        %v1172 = vadd.f32 0.0, %v1171
        %v1173 = vpop.f32.mrb[0].mxu0
        %1174 = vdwg.mxu0
        %v1176 = vsel %vm847, %v1096, 0
        %v1179 = vsel %vm847, %v1172, 0
        %1181 = vmatprep.subr.mxu0 0.0
        %1182 = vmatpush1.msra.mxu0 %v832
        %1183 = vmatprep.subr.mxu0 0.0
        %1184 = vmatpush1.msra.mxu0 0.0
        %1185 = vmatprep.subr.mxu0 0.0
        %1186 = vmatpush1.msra.mxu0 0.0
        %1187 = vmatprep.subr.mxu0 0.0
        %1188 = vmatpush1.msra.mxu0 0.0
        %1189 = vmatprep.subr.mxu0 0.0
        %1190 = vmatpush1.msra.mxu0 0.0
        %1191 = vmatprep.subr.mxu0 0.0
        %1192 = vmatpush1.msra.mxu0 0.0
        %1193 = vmatprep.subr.mxu0 0.0
        %1194 = vmatpush1.msra.mxu0 0.0
        %1195 = vmatprep.subr.mxu0 0.0
        %1196 = vmatpush1.msra.mxu0 0.0
        %1197 = vmatprep.subr.mxu0 0.0
        %1198 = vmatpush1.msra.mxu0 0.0
        %1199 = vmatprep.subr.mxu0 0.0
        %1200 = vmatpush1.msra.mxu0 0.0
        %1201 = vmatprep.subr.mxu0 0.0
        %1202 = vmatpush1.msra.mxu0 0.0
        %1203 = vmatprep.subr.mxu0 0.0
        %1204 = vmatpush1.msra.mxu0 0.0
        %1205 = vmatprep.subr.mxu0 0.0
        %1206 = vmatpush1.msra.mxu0 0.0
        %1207 = vmatprep.subr.mxu0 0.0
        %1208 = vmatpush1.msra.mxu0 0.0
        %1209 = vmatprep.subr.mxu0 0.0
        %1210 = vmatpush1.msra.mxu0 0.0
        %1211 = vmatprep.subr.mxu0 0.0
        %1212 = vmatpush1.msra.mxu0 0.0
        %1213 = vmatprep.subr.mxu0 0.0
        %1214 = vmatpush1.msra.mxu0 0.0
        %1215 = vmatprep.subr.mxu0 0.0
        %1216 = vmatpush1.msra.mxu0 0.0
        %1217 = vmatprep.subr.mxu0 0.0
        %1218 = vmatpush1.msra.mxu0 0.0
        %1219 = vmatprep.subr.mxu0 0.0
        %1220 = vmatpush1.msra.mxu0 0.0
        %1221 = vmatprep.subr.mxu0 0.0
        %1222 = vmatpush1.msra.mxu0 0.0
        %1223 = vmatprep.subr.mxu0 0.0
        %1224 = vmatpush1.msra.mxu0 0.0
        %1225 = vmatprep.subr.mxu0 0.0
        %1226 = vmatpush1.msra.mxu0 0.0
        %1227 = vmatprep.subr.mxu0 0.0
        %1228 = vmatpush1.msra.mxu0 0.0
        %1229 = vmatprep.subr.mxu0 0.0
        %1230 = vmatpush1.msra.mxu0 0.0
        %1231 = vmatprep.subr.mxu0 0.0
        %1232 = vmatpush1.msra.mxu0 0.0
        %1233 = vmatprep.subr.mxu0 0.0
        %1234 = vmatpush1.msra.mxu0 0.0
        %1235 = vmatprep.subr.mxu0 0.0
        %1236 = vmatpush1.msra.mxu0 0.0
        %1237 = vmatprep.subr.mxu0 0.0
        %1238 = vmatpush1.msra.mxu0 0.0
        %1239 = vmatprep.subr.mxu0 0.0
        %1240 = vmatpush1.msra.mxu0 0.0
        %1241 = vmatprep.subr.mxu0 0.0
        %1242 = vmatpush1.msra.mxu0 0.0
        %1243 = vmatprep.subr.mxu0 0.0
        %1244 = vmatpush1.msra.mxu0 0.0
        %1245 = vmatprep.mubr.f32.mxu0 0.0
        %1246 = vmatmul.mubr.f32.gmra.mrb[0].mxu0 %v1176
        %v1247 = vpop.f32.mrb[0].mxu0
        %v1248 = vadd.f32 0.0, %v1247
        %v1249 = vpop.f32.mrb[0].mxu0
        %1250 = vmatprep.mubr.f32.mxu0 0.0
        %1251 = vmatmul.mubr.f32.gmra.mrb[0].mxu0 %v1179
        %v1252 = vpop.f32.mrb[0].mxu0
        %v1253 = vadd.f32 0.0, %v1252
        %v1254 = vpop.f32.mrb[0].mxu0
        %1255 = vdwg.mxu0
        %v1256 = vadd.f32 %v843, %v1248
        %v1257 = vadd.f32 %v843, %v1253
        %1258 = vrot.lane.b32.xlu0 %v830, 120
        %v1259 = vpop.permute.xlu0 %1258
        %1260 = vrot.lane.b32.xlu0 %v822, 88
        %v1261 = vpop.permute.xlu0 %1260
        %v1262 = vsel %vm847, %v1259, 0
        %v1264 = vsel %vm847, %v1261, 0
        %1266 = vmatprep.subr.mxu0 0.0
        %1267 = vmatpush1.xpose.msra.mxu0 %v1264
        %1268 = vmatprep.subr.mxu0 0.0
        %1269 = vmatpush1.xpose.msra.mxu0 0.0
        %1270 = vmatprep.subr.mxu0 0.0
        %1271 = vmatpush1.xpose.msra.mxu0 0.0
        %1272 = vmatprep.subr.mxu0 0.0
        %1273 = vmatpush1.xpose.msra.mxu0 0.0
        %1274 = vmatprep.subr.mxu0 0.0
        %1275 = vmatpush1.xpose.msra.mxu0 0.0
        %1276 = vmatprep.subr.mxu0 0.0
        %1277 = vmatpush1.xpose.msra.mxu0 0.0
        %1278 = vmatprep.subr.mxu0 0.0
        %1279 = vmatpush1.xpose.msra.mxu0 0.0
        %1280 = vmatprep.subr.mxu0 0.0
        %1281 = vmatpush1.xpose.msra.mxu0 0.0
        %1282 = vmatprep.subr.mxu0 0.0
        %1283 = vmatpush1.xpose.msra.mxu0 0.0
        %1284 = vmatprep.subr.mxu0 0.0
        %1285 = vmatpush1.xpose.msra.mxu0 0.0
        %1286 = vmatprep.subr.mxu0 0.0
        %1287 = vmatpush1.xpose.msra.mxu0 0.0
        %1288 = vmatprep.subr.mxu0 0.0
        %1289 = vmatpush1.xpose.msra.mxu0 0.0
        %1290 = vmatprep.subr.mxu0 0.0
        %1291 = vmatpush1.xpose.msra.mxu0 0.0
        %1292 = vmatprep.subr.mxu0 0.0
        %1293 = vmatpush1.xpose.msra.mxu0 0.0
        %1294 = vmatprep.subr.mxu0 0.0
        %1295 = vmatpush1.xpose.msra.mxu0 0.0
        %1296 = vmatprep.subr.mxu0 0.0
        %1297 = vmatpush1.xpose.msra.mxu0 0.0
        %1298 = vmatprep.subr.mxu0 0.0
        %1299 = vmatpush1.xpose.msra.mxu0 0.0
        %1300 = vmatprep.subr.mxu0 0.0
        %1301 = vmatpush1.xpose.msra.mxu0 0.0
        %1302 = vmatprep.subr.mxu0 0.0
        %1303 = vmatpush1.xpose.msra.mxu0 0.0
        %1304 = vmatprep.subr.mxu0 0.0
        %1305 = vmatpush1.xpose.msra.mxu0 0.0
        %1306 = vmatprep.subr.mxu0 0.0
        %1307 = vmatpush1.xpose.msra.mxu0 0.0
        %1308 = vmatprep.subr.mxu0 0.0
        %1309 = vmatpush1.xpose.msra.mxu0 0.0
        %1310 = vmatprep.subr.mxu0 0.0
        %1311 = vmatpush1.xpose.msra.mxu0 0.0
        %1312 = vmatprep.subr.mxu0 0.0
        %1313 = vmatpush1.xpose.msra.mxu0 0.0
        %1314 = vmatprep.subr.mxu0 0.0
        %1315 = vmatpush1.xpose.msra.mxu0 0.0
        %1316 = vmatprep.subr.mxu0 0.0
        %1317 = vmatpush1.xpose.msra.mxu0 0.0
        %1318 = vmatprep.subr.mxu0 0.0
        %1319 = vmatpush1.xpose.msra.mxu0 0.0
        %1320 = vmatprep.subr.mxu0 0.0
        %1321 = vmatpush1.xpose.msra.mxu0 0.0
        %1322 = vmatprep.subr.mxu0 0.0
        %1323 = vmatpush1.xpose.msra.mxu0 0.0
        %1324 = vmatprep.subr.mxu0 0.0
        %1325 = vmatpush1.xpose.msra.mxu0 0.0
        %1326 = vmatprep.subr.mxu0 0.0
        %1327 = vmatpush1.xpose.msra.mxu0 0.0
        %1328 = vmatprep.subr.mxu0 0.0
        %1329 = vmatpush1.xpose.msra.mxu0 0.0
        %1330 = vmatprep.mubr.f32.mxu0 0.0
        %1331 = vmatmul.mubr.f32.gmra.mrb[0].mxu0 %v1262
        %v1332 = vpop.f32.mrb[0].mxu0
        %v1333 = vadd.f32 0.0, %v1332
        %v1334 = vpop.f32.mrb[0].mxu0
        %1335 = vdwg.mxu0
        %1336 = vrot.lane.b32.xlu0 %v831, 120
        %v1337 = vpop.permute.xlu0 %1336
        %1338 = vrot.lane.b32.xlu0 %v827, 88
        %v1339 = vpop.permute.xlu0 %1338
        %v1340 = vsel %vm847, %v1337, 0
        %v1342 = vsel %vm847, %v1339, 0
        %1344 = vmatprep.subr.mxu0 0.0
        %1345 = vmatpush1.xpose.msra.mxu0 %v1342
        %1346 = vmatprep.subr.mxu0 0.0
        %1347 = vmatpush1.xpose.msra.mxu0 0.0
        %1348 = vmatprep.subr.mxu0 0.0
        %1349 = vmatpush1.xpose.msra.mxu0 0.0
        %1350 = vmatprep.subr.mxu0 0.0
        %1351 = vmatpush1.xpose.msra.mxu0 0.0
        %1352 = vmatprep.subr.mxu0 0.0
        %1353 = vmatpush1.xpose.msra.mxu0 0.0
        %1354 = vmatprep.subr.mxu0 0.0
        %1355 = vmatpush1.xpose.msra.mxu0 0.0
        %1356 = vmatprep.subr.mxu0 0.0
        %1357 = vmatpush1.xpose.msra.mxu0 0.0
        %1358 = vmatprep.subr.mxu0 0.0
        %1359 = vmatpush1.xpose.msra.mxu0 0.0
        %1360 = vmatprep.subr.mxu0 0.0
        %1361 = vmatpush1.xpose.msra.mxu0 0.0
        %1362 = vmatprep.subr.mxu0 0.0
        %1363 = vmatpush1.xpose.msra.mxu0 0.0
        %1364 = vmatprep.subr.mxu0 0.0
        %1365 = vmatpush1.xpose.msra.mxu0 0.0
        %1366 = vmatprep.subr.mxu0 0.0
        %1367 = vmatpush1.xpose.msra.mxu0 0.0
        %1368 = vmatprep.subr.mxu0 0.0
        %1369 = vmatpush1.xpose.msra.mxu0 0.0
        %1370 = vmatprep.subr.mxu0 0.0
        %1371 = vmatpush1.xpose.msra.mxu0 0.0
        %1372 = vmatprep.subr.mxu0 0.0
        %1373 = vmatpush1.xpose.msra.mxu0 0.0
        %1374 = vmatprep.subr.mxu0 0.0
        %1375 = vmatpush1.xpose.msra.mxu0 0.0
        %1376 = vmatprep.subr.mxu0 0.0
        %1377 = vmatpush1.xpose.msra.mxu0 0.0
        %1378 = vmatprep.subr.mxu0 0.0
        %1379 = vmatpush1.xpose.msra.mxu0 0.0
        %1380 = vmatprep.subr.mxu0 0.0
        %1381 = vmatpush1.xpose.msra.mxu0 0.0
        %1382 = vmatprep.subr.mxu0 0.0
        %1383 = vmatpush1.xpose.msra.mxu0 0.0
        %1384 = vmatprep.subr.mxu0 0.0
        %1385 = vmatpush1.xpose.msra.mxu0 0.0
        %1386 = vmatprep.subr.mxu0 0.0
        %1387 = vmatpush1.xpose.msra.mxu0 0.0
        %1388 = vmatprep.subr.mxu0 0.0
        %1389 = vmatpush1.xpose.msra.mxu0 0.0
        %1390 = vmatprep.subr.mxu0 0.0
        %1391 = vmatpush1.xpose.msra.mxu0 0.0
        %1392 = vmatprep.subr.mxu0 0.0
        %1393 = vmatpush1.xpose.msra.mxu0 0.0
        %1394 = vmatprep.subr.mxu0 0.0
        %1395 = vmatpush1.xpose.msra.mxu0 0.0
        %1396 = vmatprep.subr.mxu0 0.0
        %1397 = vmatpush1.xpose.msra.mxu0 0.0
        %1398 = vmatprep.subr.mxu0 0.0
        %1399 = vmatpush1.xpose.msra.mxu0 0.0
        %1400 = vmatprep.subr.mxu0 0.0
        %1401 = vmatpush1.xpose.msra.mxu0 0.0
        %1402 = vmatprep.subr.mxu0 0.0
        %1403 = vmatpush1.xpose.msra.mxu0 0.0
        %1404 = vmatprep.subr.mxu0 0.0
        %1405 = vmatpush1.xpose.msra.mxu0 0.0
        %1406 = vmatprep.subr.mxu0 0.0
        %1407 = vmatpush1.xpose.msra.mxu0 0.0
        %1408 = vmatprep.mubr.f32.mxu0 0.0
        %1409 = vmatmul.mubr.f32.gmra.mrb[0].mxu0 %v1340
        %v1410 = vpop.f32.mrb[0].mxu0
        %v1411 = vadd.f32 0.0, %v1410
        %v1412 = vpop.f32.mrb[0].mxu0
        %1413 = vdwg.mxu0
        %v1414 = vsel %vm847, %v1333, -inf
        %1415 = vmax.xlane.f32.xlu0 %v1414
        %v1416 = vpop.xlane.xlu0 %1415
        %v1417 = vsel %vm847, %v1411, -inf
        %1418 = vmax.xlane.f32.xlu0 %v1417
        %v1419 = vpop.xlane.xlu0 %1418
        %v1420 = vsub.f32 %v1333, %v1416
        %v1421 = vsub.f32 %v1411, %v1419
        %v1422 = vmul.f32 %v1420, 1.442695
        %v1423 = vpow.pop %v1422
        %v1424 = vmul.f32 %v1421, 1.442695
        %v1425 = vpow.pop %v1424
        %v1426 = vsel %vm847, %v1423, 0.0
        %1427 = vadd.xlane.f32.xlu0 %v1426
        %v1428 = vpop.xlane.xlu0 %1427
        %v1429 = vsel %vm847, %v1425, 0.0
        %1430 = vadd.xlane.f32.xlu0 %v1429
        %v1431 = vpop.xlane.xlu0 %1430
        %v1432 = vrcp.pop %v1428
        %v1433 = vrcp.pop %v1431
        %v1434 = vmul.f32 %v1423, %v1432
        %v1435 = vmul.f32 %v1425, %v1433
        %1436 = vrot.lane.b32.xlu0 %v822, 56
        %v1437 = vpop.permute.xlu0 %1436
        %v1440 = vsel %vm847, %v1434, 0
        %1442 = vmatprep.subr.mxu0 0.0
        %1443 = vmatpush1.msra.mxu0 %v1437
        %1444 = vmatprep.subr.mxu0 0.0
        %1445 = vmatpush1.msra.mxu0 0.0
        %1446 = vmatprep.subr.mxu0 0.0
        %1447 = vmatpush1.msra.mxu0 0.0
        %1448 = vmatprep.subr.mxu0 0.0
        %1449 = vmatpush1.msra.mxu0 0.0
        %1450 = vmatprep.subr.mxu0 0.0
        %1451 = vmatpush1.msra.mxu0 0.0
        %1452 = vmatprep.subr.mxu0 0.0
        %1453 = vmatpush1.msra.mxu0 0.0
        %1454 = vmatprep.subr.mxu0 0.0
        %1455 = vmatpush1.msra.mxu0 0.0
        %1456 = vmatprep.subr.mxu0 0.0
        %1457 = vmatpush1.msra.mxu0 0.0
        %1458 = vmatprep.subr.mxu0 0.0
        %1459 = vmatpush1.msra.mxu0 0.0
        %1460 = vmatprep.subr.mxu0 0.0
        %1461 = vmatpush1.msra.mxu0 0.0
        %1462 = vmatprep.subr.mxu0 0.0
        %1463 = vmatpush1.msra.mxu0 0.0
        %1464 = vmatprep.subr.mxu0 0.0
        %1465 = vmatpush1.msra.mxu0 0.0
        %1466 = vmatprep.subr.mxu0 0.0
        %1467 = vmatpush1.msra.mxu0 0.0
        %1468 = vmatprep.subr.mxu0 0.0
        %1469 = vmatpush1.msra.mxu0 0.0
        %1470 = vmatprep.subr.mxu0 0.0
        %1471 = vmatpush1.msra.mxu0 0.0
        %1472 = vmatprep.subr.mxu0 0.0
        %1473 = vmatpush1.msra.mxu0 0.0
        %1474 = vmatprep.subr.mxu0 0.0
        %1475 = vmatpush1.msra.mxu0 0.0
        %1476 = vmatprep.subr.mxu0 0.0
        %1477 = vmatpush1.msra.mxu0 0.0
        %1478 = vmatprep.subr.mxu0 0.0
        %1479 = vmatpush1.msra.mxu0 0.0
        %1480 = vmatprep.subr.mxu0 0.0
        %1481 = vmatpush1.msra.mxu0 0.0
        %1482 = vmatprep.subr.mxu0 0.0
        %1483 = vmatpush1.msra.mxu0 0.0
        %1484 = vmatprep.subr.mxu0 0.0
        %1485 = vmatpush1.msra.mxu0 0.0
        %1486 = vmatprep.subr.mxu0 0.0
        %1487 = vmatpush1.msra.mxu0 0.0
        %1488 = vmatprep.subr.mxu0 0.0
        %1489 = vmatpush1.msra.mxu0 0.0
        %1490 = vmatprep.subr.mxu0 0.0
        %1491 = vmatpush1.msra.mxu0 0.0
        %1492 = vmatprep.subr.mxu0 0.0
        %1493 = vmatpush1.msra.mxu0 0.0
        %1494 = vmatprep.subr.mxu0 0.0
        %1495 = vmatpush1.msra.mxu0 0.0
        %1496 = vmatprep.subr.mxu0 0.0
        %1497 = vmatpush1.msra.mxu0 0.0
        %1498 = vmatprep.subr.mxu0 0.0
        %1499 = vmatpush1.msra.mxu0 0.0
        %1500 = vmatprep.subr.mxu0 0.0
        %1501 = vmatpush1.msra.mxu0 0.0
        %1502 = vmatprep.subr.mxu0 0.0
        %1503 = vmatpush1.msra.mxu0 0.0
        %1504 = vmatprep.subr.mxu0 0.0
        %1505 = vmatpush1.msra.mxu0 0.0
        %1506 = vmatprep.mubr.f32.mxu0 0.0
        %1507 = vmatmul.mubr.f32.gmra.mrb[0].mxu0 %v1440
        %v1508 = vpop.f32.mrb[0].mxu0
        %v1509 = vadd.f32 0.0, %v1508
        %v1510 = vpop.f32.mrb[0].mxu0
        %1511 = vdwg.mxu0
        %1512 = vrot.lane.b32.xlu0 %v827, 56
        %v1513 = vpop.permute.xlu0 %1512
        %v1516 = vsel %vm847, %v1435, 0
        %1518 = vmatprep.subr.mxu0 0.0
        %1519 = vmatpush1.msra.mxu0 %v1513
        %1520 = vmatprep.subr.mxu0 0.0
        %1521 = vmatpush1.msra.mxu0 0.0
        %1522 = vmatprep.subr.mxu0 0.0
        %1523 = vmatpush1.msra.mxu0 0.0
        %1524 = vmatprep.subr.mxu0 0.0
        %1525 = vmatpush1.msra.mxu0 0.0
        %1526 = vmatprep.subr.mxu0 0.0
        %1527 = vmatpush1.msra.mxu0 0.0
        %1528 = vmatprep.subr.mxu0 0.0
        %1529 = vmatpush1.msra.mxu0 0.0
        %1530 = vmatprep.subr.mxu0 0.0
        %1531 = vmatpush1.msra.mxu0 0.0
        %1532 = vmatprep.subr.mxu0 0.0
        %1533 = vmatpush1.msra.mxu0 0.0
        %1534 = vmatprep.subr.mxu0 0.0
        %1535 = vmatpush1.msra.mxu0 0.0
        %1536 = vmatprep.subr.mxu0 0.0
        %1537 = vmatpush1.msra.mxu0 0.0
        %1538 = vmatprep.subr.mxu0 0.0
        %1539 = vmatpush1.msra.mxu0 0.0
        %1540 = vmatprep.subr.mxu0 0.0
        %1541 = vmatpush1.msra.mxu0 0.0
        %1542 = vmatprep.subr.mxu0 0.0
        %1543 = vmatpush1.msra.mxu0 0.0
        %1544 = vmatprep.subr.mxu0 0.0
        %1545 = vmatpush1.msra.mxu0 0.0
        %1546 = vmatprep.subr.mxu0 0.0
        %1547 = vmatpush1.msra.mxu0 0.0
        %1548 = vmatprep.subr.mxu0 0.0
        %1549 = vmatpush1.msra.mxu0 0.0
        %1550 = vmatprep.subr.mxu0 0.0
        %1551 = vmatpush1.msra.mxu0 0.0
        %1552 = vmatprep.subr.mxu0 0.0
        %1553 = vmatpush1.msra.mxu0 0.0
        %1554 = vmatprep.subr.mxu0 0.0
        %1555 = vmatpush1.msra.mxu0 0.0
        %1556 = vmatprep.subr.mxu0 0.0
        %1557 = vmatpush1.msra.mxu0 0.0
        %1558 = vmatprep.subr.mxu0 0.0
        %1559 = vmatpush1.msra.mxu0 0.0
        %1560 = vmatprep.subr.mxu0 0.0
        %1561 = vmatpush1.msra.mxu0 0.0
        %1562 = vmatprep.subr.mxu0 0.0
        %1563 = vmatpush1.msra.mxu0 0.0
        %1564 = vmatprep.subr.mxu0 0.0
        %1565 = vmatpush1.msra.mxu0 0.0
        %1566 = vmatprep.subr.mxu0 0.0
        %1567 = vmatpush1.msra.mxu0 0.0
        %1568 = vmatprep.subr.mxu0 0.0
        %1569 = vmatpush1.msra.mxu0 0.0
        %1570 = vmatprep.subr.mxu0 0.0
        %1571 = vmatpush1.msra.mxu0 0.0
        %1572 = vmatprep.subr.mxu0 0.0
        %1573 = vmatpush1.msra.mxu0 0.0
        %1574 = vmatprep.subr.mxu0 0.0
        %1575 = vmatpush1.msra.mxu0 0.0
        %1576 = vmatprep.subr.mxu0 0.0
        %1577 = vmatpush1.msra.mxu0 0.0
        %1578 = vmatprep.subr.mxu0 0.0
        %1579 = vmatpush1.msra.mxu0 0.0
        %1580 = vmatprep.subr.mxu0 0.0
        %1581 = vmatpush1.msra.mxu0 0.0
        %1582 = vmatprep.mubr.f32.mxu0 0.0
        %1583 = vmatmul.mubr.f32.gmra.mrb[0].mxu0 %v1516
        %v1584 = vpop.f32.mrb[0].mxu0
        %v1585 = vadd.f32 0.0, %v1584
        %v1586 = vpop.f32.mrb[0].mxu0
        %1587 = vdwg.mxu0
        %v1589 = vsel %vm847, %v1509, 0
        %v1592 = vsel %vm847, %v1585, 0
        %1594 = vmatprep.subr.mxu0 0.0
        %1595 = vmatpush1.msra.mxu0 %v833
        %1596 = vmatprep.subr.mxu0 0.0
        %1597 = vmatpush1.msra.mxu0 0.0
        %1598 = vmatprep.subr.mxu0 0.0
        %1599 = vmatpush1.msra.mxu0 0.0
        %1600 = vmatprep.subr.mxu0 0.0
        %1601 = vmatpush1.msra.mxu0 0.0
        %1602 = vmatprep.subr.mxu0 0.0
        %1603 = vmatpush1.msra.mxu0 0.0
        %1604 = vmatprep.subr.mxu0 0.0
        %1605 = vmatpush1.msra.mxu0 0.0
        %1606 = vmatprep.subr.mxu0 0.0
        %1607 = vmatpush1.msra.mxu0 0.0
        %1608 = vmatprep.subr.mxu0 0.0
        %1609 = vmatpush1.msra.mxu0 0.0
        %1610 = vmatprep.subr.mxu0 0.0
        %1611 = vmatpush1.msra.mxu0 0.0
        %1612 = vmatprep.subr.mxu0 0.0
        %1613 = vmatpush1.msra.mxu0 0.0
        %1614 = vmatprep.subr.mxu0 0.0
        %1615 = vmatpush1.msra.mxu0 0.0
        %1616 = vmatprep.subr.mxu0 0.0
        %1617 = vmatpush1.msra.mxu0 0.0
        %1618 = vmatprep.subr.mxu0 0.0
        %1619 = vmatpush1.msra.mxu0 0.0
        %1620 = vmatprep.subr.mxu0 0.0
        %1621 = vmatpush1.msra.mxu0 0.0
        %1622 = vmatprep.subr.mxu0 0.0
        %1623 = vmatpush1.msra.mxu0 0.0
        %1624 = vmatprep.subr.mxu0 0.0
        %1625 = vmatpush1.msra.mxu0 0.0
        %1626 = vmatprep.subr.mxu0 0.0
        %1627 = vmatpush1.msra.mxu0 0.0
        %1628 = vmatprep.subr.mxu0 0.0
        %1629 = vmatpush1.msra.mxu0 0.0
        %1630 = vmatprep.subr.mxu0 0.0
        %1631 = vmatpush1.msra.mxu0 0.0
        %1632 = vmatprep.subr.mxu0 0.0
        %1633 = vmatpush1.msra.mxu0 0.0
        %1634 = vmatprep.subr.mxu0 0.0
        %1635 = vmatpush1.msra.mxu0 0.0
        %1636 = vmatprep.subr.mxu0 0.0
        %1637 = vmatpush1.msra.mxu0 0.0
        %1638 = vmatprep.subr.mxu0 0.0
        %1639 = vmatpush1.msra.mxu0 0.0
        %1640 = vmatprep.subr.mxu0 0.0
        %1641 = vmatpush1.msra.mxu0 0.0
        %1642 = vmatprep.subr.mxu0 0.0
        %1643 = vmatpush1.msra.mxu0 0.0
        %1644 = vmatprep.subr.mxu0 0.0
        %1645 = vmatpush1.msra.mxu0 0.0
        %1646 = vmatprep.subr.mxu0 0.0
        %1647 = vmatpush1.msra.mxu0 0.0
        %1648 = vmatprep.subr.mxu0 0.0
        %1649 = vmatpush1.msra.mxu0 0.0
        %1650 = vmatprep.subr.mxu0 0.0
        %1651 = vmatpush1.msra.mxu0 0.0
        %1652 = vmatprep.subr.mxu0 0.0
        %1653 = vmatpush1.msra.mxu0 0.0
        %1654 = vmatprep.subr.mxu0 0.0
        %1655 = vmatpush1.msra.mxu0 0.0
        %1656 = vmatprep.subr.mxu0 0.0
        %1657 = vmatpush1.msra.mxu0 0.0
        %1658 = vmatprep.mubr.f32.mxu0 0.0
        %1659 = vmatmul.mubr.f32.gmra.mrb[0].mxu0 %v1589
        %v1660 = vpop.f32.mrb[0].mxu0
        %v1661 = vadd.f32 0.0, %v1660
        %v1662 = vpop.f32.mrb[0].mxu0
        %1663 = vmatprep.mubr.f32.mxu0 0.0
        %1664 = vmatmul.mubr.f32.gmra.mrb[0].mxu0 %v1592
        %v1665 = vpop.f32.mrb[0].mxu0
        %v1666 = vadd.f32 0.0, %v1665
        %v1667 = vpop.f32.mrb[0].mxu0
        %1668 = vdwg.mxu0
        %v1669 = vadd.f32 %v1256, %v1661
        %v1670 = vadd.f32 %v1257, %v1666
        %1671 = vrot.lane.b32.xlu0 %v830, 112
        %v1672 = vpop.permute.xlu0 %1671
        %1673 = vrot.lane.b32.xlu0 %v822, 80
        %v1674 = vpop.permute.xlu0 %1673
        %v1675 = vsel %vm847, %v1672, 0
        %v1677 = vsel %vm847, %v1674, 0
        %1679 = vmatprep.subr.mxu0 0.0
        %1680 = vmatpush1.xpose.msra.mxu0 %v1677
        %1681 = vmatprep.subr.mxu0 0.0
        %1682 = vmatpush1.xpose.msra.mxu0 0.0
        %1683 = vmatprep.subr.mxu0 0.0
        %1684 = vmatpush1.xpose.msra.mxu0 0.0
        %1685 = vmatprep.subr.mxu0 0.0
        %1686 = vmatpush1.xpose.msra.mxu0 0.0
        %1687 = vmatprep.subr.mxu0 0.0
        %1688 = vmatpush1.xpose.msra.mxu0 0.0
        %1689 = vmatprep.subr.mxu0 0.0
        %1690 = vmatpush1.xpose.msra.mxu0 0.0
        %1691 = vmatprep.subr.mxu0 0.0
        %1692 = vmatpush1.xpose.msra.mxu0 0.0
        %1693 = vmatprep.subr.mxu0 0.0
        %1694 = vmatpush1.xpose.msra.mxu0 0.0
        %1695 = vmatprep.subr.mxu0 0.0
        %1696 = vmatpush1.xpose.msra.mxu0 0.0
        %1697 = vmatprep.subr.mxu0 0.0
        %1698 = vmatpush1.xpose.msra.mxu0 0.0
        %1699 = vmatprep.subr.mxu0 0.0
        %1700 = vmatpush1.xpose.msra.mxu0 0.0
        %1701 = vmatprep.subr.mxu0 0.0
        %1702 = vmatpush1.xpose.msra.mxu0 0.0
        %1703 = vmatprep.subr.mxu0 0.0
        %1704 = vmatpush1.xpose.msra.mxu0 0.0
        %1705 = vmatprep.subr.mxu0 0.0
        %1706 = vmatpush1.xpose.msra.mxu0 0.0
        %1707 = vmatprep.subr.mxu0 0.0
        %1708 = vmatpush1.xpose.msra.mxu0 0.0
        %1709 = vmatprep.subr.mxu0 0.0
        %1710 = vmatpush1.xpose.msra.mxu0 0.0
        %1711 = vmatprep.subr.mxu0 0.0
        %1712 = vmatpush1.xpose.msra.mxu0 0.0
        %1713 = vmatprep.subr.mxu0 0.0
        %1714 = vmatpush1.xpose.msra.mxu0 0.0
        %1715 = vmatprep.subr.mxu0 0.0
        %1716 = vmatpush1.xpose.msra.mxu0 0.0
        %1717 = vmatprep.subr.mxu0 0.0
        %1718 = vmatpush1.xpose.msra.mxu0 0.0
        %1719 = vmatprep.subr.mxu0 0.0
        %1720 = vmatpush1.xpose.msra.mxu0 0.0
        %1721 = vmatprep.subr.mxu0 0.0
        %1722 = vmatpush1.xpose.msra.mxu0 0.0
        %1723 = vmatprep.subr.mxu0 0.0
        %1724 = vmatpush1.xpose.msra.mxu0 0.0
        %1725 = vmatprep.subr.mxu0 0.0
        %1726 = vmatpush1.xpose.msra.mxu0 0.0
        %1727 = vmatprep.subr.mxu0 0.0
        %1728 = vmatpush1.xpose.msra.mxu0 0.0
        %1729 = vmatprep.subr.mxu0 0.0
        %1730 = vmatpush1.xpose.msra.mxu0 0.0
        %1731 = vmatprep.subr.mxu0 0.0
        %1732 = vmatpush1.xpose.msra.mxu0 0.0
        %1733 = vmatprep.subr.mxu0 0.0
        %1734 = vmatpush1.xpose.msra.mxu0 0.0
        %1735 = vmatprep.subr.mxu0 0.0
        %1736 = vmatpush1.xpose.msra.mxu0 0.0
        %1737 = vmatprep.subr.mxu0 0.0
        %1738 = vmatpush1.xpose.msra.mxu0 0.0
        %1739 = vmatprep.subr.mxu0 0.0
        %1740 = vmatpush1.xpose.msra.mxu0 0.0
        %1741 = vmatprep.subr.mxu0 0.0
        %1742 = vmatpush1.xpose.msra.mxu0 0.0
        %1743 = vmatprep.mubr.f32.mxu0 0.0
        %1744 = vmatmul.mubr.f32.gmra.mrb[0].mxu0 %v1675
        %v1745 = vpop.f32.mrb[0].mxu0
        %v1746 = vadd.f32 0.0, %v1745
        %v1747 = vpop.f32.mrb[0].mxu0
        %1748 = vdwg.mxu0
        %1749 = vrot.lane.b32.xlu0 %v831, 112
        %v1750 = vpop.permute.xlu0 %1749
        %1751 = vrot.lane.b32.xlu0 %v827, 80
        %v1752 = vpop.permute.xlu0 %1751
        %v1753 = vsel %vm847, %v1750, 0
        %v1755 = vsel %vm847, %v1752, 0
        %1757 = vmatprep.subr.mxu0 0.0
        %1758 = vmatpush1.xpose.msra.mxu0 %v1755
        %1759 = vmatprep.subr.mxu0 0.0
        %1760 = vmatpush1.xpose.msra.mxu0 0.0
        %1761 = vmatprep.subr.mxu0 0.0
        %1762 = vmatpush1.xpose.msra.mxu0 0.0
        %1763 = vmatprep.subr.mxu0 0.0
        %1764 = vmatpush1.xpose.msra.mxu0 0.0
        %1765 = vmatprep.subr.mxu0 0.0
        %1766 = vmatpush1.xpose.msra.mxu0 0.0
        %1767 = vmatprep.subr.mxu0 0.0
        %1768 = vmatpush1.xpose.msra.mxu0 0.0
        %1769 = vmatprep.subr.mxu0 0.0
        %1770 = vmatpush1.xpose.msra.mxu0 0.0
        %1771 = vmatprep.subr.mxu0 0.0
        %1772 = vmatpush1.xpose.msra.mxu0 0.0
        %1773 = vmatprep.subr.mxu0 0.0
        %1774 = vmatpush1.xpose.msra.mxu0 0.0
        %1775 = vmatprep.subr.mxu0 0.0
        %1776 = vmatpush1.xpose.msra.mxu0 0.0
        %1777 = vmatprep.subr.mxu0 0.0
        %1778 = vmatpush1.xpose.msra.mxu0 0.0
        %1779 = vmatprep.subr.mxu0 0.0
        %1780 = vmatpush1.xpose.msra.mxu0 0.0
        %1781 = vmatprep.subr.mxu0 0.0
        %1782 = vmatpush1.xpose.msra.mxu0 0.0
        %1783 = vmatprep.subr.mxu0 0.0
        %1784 = vmatpush1.xpose.msra.mxu0 0.0
        %1785 = vmatprep.subr.mxu0 0.0
        %1786 = vmatpush1.xpose.msra.mxu0 0.0
        %1787 = vmatprep.subr.mxu0 0.0
        %1788 = vmatpush1.xpose.msra.mxu0 0.0
        %1789 = vmatprep.subr.mxu0 0.0
        %1790 = vmatpush1.xpose.msra.mxu0 0.0
        %1791 = vmatprep.subr.mxu0 0.0
        %1792 = vmatpush1.xpose.msra.mxu0 0.0
        %1793 = vmatprep.subr.mxu0 0.0
        %1794 = vmatpush1.xpose.msra.mxu0 0.0
        %1795 = vmatprep.subr.mxu0 0.0
        %1796 = vmatpush1.xpose.msra.mxu0 0.0
        %1797 = vmatprep.subr.mxu0 0.0
        %1798 = vmatpush1.xpose.msra.mxu0 0.0
        %1799 = vmatprep.subr.mxu0 0.0
        %1800 = vmatpush1.xpose.msra.mxu0 0.0
        %1801 = vmatprep.subr.mxu0 0.0
        %1802 = vmatpush1.xpose.msra.mxu0 0.0
        %1803 = vmatprep.subr.mxu0 0.0
        %1804 = vmatpush1.xpose.msra.mxu0 0.0
        %1805 = vmatprep.subr.mxu0 0.0
        %1806 = vmatpush1.xpose.msra.mxu0 0.0
        %1807 = vmatprep.subr.mxu0 0.0
        %1808 = vmatpush1.xpose.msra.mxu0 0.0
        %1809 = vmatprep.subr.mxu0 0.0
        %1810 = vmatpush1.xpose.msra.mxu0 0.0
        %1811 = vmatprep.subr.mxu0 0.0
        %1812 = vmatpush1.xpose.msra.mxu0 0.0
        %1813 = vmatprep.subr.mxu0 0.0
        %1814 = vmatpush1.xpose.msra.mxu0 0.0
        %1815 = vmatprep.subr.mxu0 0.0
        %1816 = vmatpush1.xpose.msra.mxu0 0.0
        %1817 = vmatprep.subr.mxu0 0.0
        %1818 = vmatpush1.xpose.msra.mxu0 0.0
        %1819 = vmatprep.subr.mxu0 0.0
        %1820 = vmatpush1.xpose.msra.mxu0 0.0
        %1821 = vmatprep.mubr.f32.mxu0 0.0
        %1822 = vmatmul.mubr.f32.gmra.mrb[0].mxu0 %v1753
        %v1823 = vpop.f32.mrb[0].mxu0
        %v1824 = vadd.f32 0.0, %v1823
        %v1825 = vpop.f32.mrb[0].mxu0
        %1826 = vdwg.mxu0
        %v1827 = vsel %vm847, %v1746, -inf
        %1828 = vmax.xlane.f32.xlu0 %v1827
        %v1829 = vpop.xlane.xlu0 %1828
        %v1830 = vsel %vm847, %v1824, -inf
        %1831 = vmax.xlane.f32.xlu0 %v1830
        %v1832 = vpop.xlane.xlu0 %1831
        %v1833 = vsub.f32 %v1746, %v1829
        %v1834 = vsub.f32 %v1824, %v1832
        %v1835 = vmul.f32 %v1833, 1.442695
        %v1836 = vpow.pop %v1835
        %v1837 = vmul.f32 %v1834, 1.442695
        %v1838 = vpow.pop %v1837
        %v1839 = vsel %vm847, %v1836, 0.0
        %1840 = vadd.xlane.f32.xlu0 %v1839
        %v1841 = vpop.xlane.xlu0 %1840
        %v1842 = vsel %vm847, %v1838, 0.0
        %1843 = vadd.xlane.f32.xlu0 %v1842
        %v1844 = vpop.xlane.xlu0 %1843
        %v1845 = vrcp.pop %v1841
        %v1846 = vrcp.pop %v1844
        %v1847 = vmul.f32 %v1836, %v1845
        %v1848 = vmul.f32 %v1838, %v1846
        %1849 = vrot.lane.b32.xlu0 %v822, 48
        %v1850 = vpop.permute.xlu0 %1849
        %v1853 = vsel %vm847, %v1847, 0
        %1855 = vmatprep.subr.mxu0 0.0
        %1856 = vmatpush1.msra.mxu0 %v1850
        %1857 = vmatprep.subr.mxu0 0.0
        %1858 = vmatpush1.msra.mxu0 0.0
        %1859 = vmatprep.subr.mxu0 0.0
        %1860 = vmatpush1.msra.mxu0 0.0
        %1861 = vmatprep.subr.mxu0 0.0
        %1862 = vmatpush1.msra.mxu0 0.0
        %1863 = vmatprep.subr.mxu0 0.0
        %1864 = vmatpush1.msra.mxu0 0.0
        %1865 = vmatprep.subr.mxu0 0.0
        %1866 = vmatpush1.msra.mxu0 0.0
        %1867 = vmatprep.subr.mxu0 0.0
        %1868 = vmatpush1.msra.mxu0 0.0
        %1869 = vmatprep.subr.mxu0 0.0
        %1870 = vmatpush1.msra.mxu0 0.0
        %1871 = vmatprep.subr.mxu0 0.0
        %1872 = vmatpush1.msra.mxu0 0.0
        %1873 = vmatprep.subr.mxu0 0.0
        %1874 = vmatpush1.msra.mxu0 0.0
        %1875 = vmatprep.subr.mxu0 0.0
        %1876 = vmatpush1.msra.mxu0 0.0
        %1877 = vmatprep.subr.mxu0 0.0
        %1878 = vmatpush1.msra.mxu0 0.0
        %1879 = vmatprep.subr.mxu0 0.0
        %1880 = vmatpush1.msra.mxu0 0.0
        %1881 = vmatprep.subr.mxu0 0.0
        %1882 = vmatpush1.msra.mxu0 0.0
        %1883 = vmatprep.subr.mxu0 0.0
        %1884 = vmatpush1.msra.mxu0 0.0
        %1885 = vmatprep.subr.mxu0 0.0
        %1886 = vmatpush1.msra.mxu0 0.0
        %1887 = vmatprep.subr.mxu0 0.0
        %1888 = vmatpush1.msra.mxu0 0.0
        %1889 = vmatprep.subr.mxu0 0.0
        %1890 = vmatpush1.msra.mxu0 0.0
        %1891 = vmatprep.subr.mxu0 0.0
        %1892 = vmatpush1.msra.mxu0 0.0
        %1893 = vmatprep.subr.mxu0 0.0
        %1894 = vmatpush1.msra.mxu0 0.0
        %1895 = vmatprep.subr.mxu0 0.0
        %1896 = vmatpush1.msra.mxu0 0.0
        %1897 = vmatprep.subr.mxu0 0.0
        %1898 = vmatpush1.msra.mxu0 0.0
        %1899 = vmatprep.subr.mxu0 0.0
        %1900 = vmatpush1.msra.mxu0 0.0
        %1901 = vmatprep.subr.mxu0 0.0
        %1902 = vmatpush1.msra.mxu0 0.0
        %1903 = vmatprep.subr.mxu0 0.0
        %1904 = vmatpush1.msra.mxu0 0.0
        %1905 = vmatprep.subr.mxu0 0.0
        %1906 = vmatpush1.msra.mxu0 0.0
        %1907 = vmatprep.subr.mxu0 0.0
        %1908 = vmatpush1.msra.mxu0 0.0
        %1909 = vmatprep.subr.mxu0 0.0
        %1910 = vmatpush1.msra.mxu0 0.0
        %1911 = vmatprep.subr.mxu0 0.0
        %1912 = vmatpush1.msra.mxu0 0.0
        %1913 = vmatprep.subr.mxu0 0.0
        %1914 = vmatpush1.msra.mxu0 0.0
        %1915 = vmatprep.subr.mxu0 0.0
        %1916 = vmatpush1.msra.mxu0 0.0
        %1917 = vmatprep.subr.mxu0 0.0
        %1918 = vmatpush1.msra.mxu0 0.0
        %1919 = vmatprep.mubr.f32.mxu0 0.0
        %1920 = vmatmul.mubr.f32.gmra.mrb[0].mxu0 %v1853
        %v1921 = vpop.f32.mrb[0].mxu0
        %v1922 = vadd.f32 0.0, %v1921
        %v1923 = vpop.f32.mrb[0].mxu0
        %1924 = vdwg.mxu0
        %1925 = vrot.lane.b32.xlu0 %v827, 48
        %v1926 = vpop.permute.xlu0 %1925
        %v1929 = vsel %vm847, %v1848, 0
        %1931 = vmatprep.subr.mxu0 0.0
        %1932 = vmatpush1.msra.mxu0 %v1926
        %1933 = vmatprep.subr.mxu0 0.0
        %1934 = vmatpush1.msra.mxu0 0.0
        %1935 = vmatprep.subr.mxu0 0.0
        %1936 = vmatpush1.msra.mxu0 0.0
        %1937 = vmatprep.subr.mxu0 0.0
        %1938 = vmatpush1.msra.mxu0 0.0
        %1939 = vmatprep.subr.mxu0 0.0
        %1940 = vmatpush1.msra.mxu0 0.0
        %1941 = vmatprep.subr.mxu0 0.0
        %1942 = vmatpush1.msra.mxu0 0.0
        %1943 = vmatprep.subr.mxu0 0.0
        %1944 = vmatpush1.msra.mxu0 0.0
        %1945 = vmatprep.subr.mxu0 0.0
        %1946 = vmatpush1.msra.mxu0 0.0
        %1947 = vmatprep.subr.mxu0 0.0
        %1948 = vmatpush1.msra.mxu0 0.0
        %1949 = vmatprep.subr.mxu0 0.0
        %1950 = vmatpush1.msra.mxu0 0.0
        %1951 = vmatprep.subr.mxu0 0.0
        %1952 = vmatpush1.msra.mxu0 0.0
        %1953 = vmatprep.subr.mxu0 0.0
        %1954 = vmatpush1.msra.mxu0 0.0
        %1955 = vmatprep.subr.mxu0 0.0
        %1956 = vmatpush1.msra.mxu0 0.0
        %1957 = vmatprep.subr.mxu0 0.0
        %1958 = vmatpush1.msra.mxu0 0.0
        %1959 = vmatprep.subr.mxu0 0.0
        %1960 = vmatpush1.msra.mxu0 0.0
        %1961 = vmatprep.subr.mxu0 0.0
        %1962 = vmatpush1.msra.mxu0 0.0
        %1963 = vmatprep.subr.mxu0 0.0
        %1964 = vmatpush1.msra.mxu0 0.0
        %1965 = vmatprep.subr.mxu0 0.0
        %1966 = vmatpush1.msra.mxu0 0.0
        %1967 = vmatprep.subr.mxu0 0.0
        %1968 = vmatpush1.msra.mxu0 0.0
        %1969 = vmatprep.subr.mxu0 0.0
        %1970 = vmatpush1.msra.mxu0 0.0
        %1971 = vmatprep.subr.mxu0 0.0
        %1972 = vmatpush1.msra.mxu0 0.0
        %1973 = vmatprep.subr.mxu0 0.0
        %1974 = vmatpush1.msra.mxu0 0.0
        %1975 = vmatprep.subr.mxu0 0.0
        %1976 = vmatpush1.msra.mxu0 0.0
        %1977 = vmatprep.subr.mxu0 0.0
        %1978 = vmatpush1.msra.mxu0 0.0
        %1979 = vmatprep.subr.mxu0 0.0
        %1980 = vmatpush1.msra.mxu0 0.0
        %1981 = vmatprep.subr.mxu0 0.0
        %1982 = vmatpush1.msra.mxu0 0.0
        %1983 = vmatprep.subr.mxu0 0.0
        %1984 = vmatpush1.msra.mxu0 0.0
        %1985 = vmatprep.subr.mxu0 0.0
        %1986 = vmatpush1.msra.mxu0 0.0
        %1987 = vmatprep.subr.mxu0 0.0
        %1988 = vmatpush1.msra.mxu0 0.0
        %1989 = vmatprep.subr.mxu0 0.0
        %1990 = vmatpush1.msra.mxu0 0.0
        %1991 = vmatprep.subr.mxu0 0.0
        %1992 = vmatpush1.msra.mxu0 0.0
        %1993 = vmatprep.subr.mxu0 0.0
        %1994 = vmatpush1.msra.mxu0 0.0
        %1995 = vmatprep.mubr.f32.mxu0 0.0
        %1996 = vmatmul.mubr.f32.gmra.mrb[0].mxu0 %v1929
        %v1997 = vpop.f32.mrb[0].mxu0
        %v1998 = vadd.f32 0.0, %v1997
        %v1999 = vpop.f32.mrb[0].mxu0
        %2000 = vdwg.mxu0
        %v2002 = vsel %vm847, %v1922, 0
        %v2005 = vsel %vm847, %v1998, 0
        %2007 = vmatprep.subr.mxu0 0.0
        %2008 = vmatpush1.msra.mxu0 %v834
        %2009 = vmatprep.subr.mxu0 0.0
        %2010 = vmatpush1.msra.mxu0 0.0
        %2011 = vmatprep.subr.mxu0 0.0
        %2012 = vmatpush1.msra.mxu0 0.0
        %2013 = vmatprep.subr.mxu0 0.0
        %2014 = vmatpush1.msra.mxu0 0.0
        %2015 = vmatprep.subr.mxu0 0.0
        %2016 = vmatpush1.msra.mxu0 0.0
        %2017 = vmatprep.subr.mxu0 0.0
        %2018 = vmatpush1.msra.mxu0 0.0
        %2019 = vmatprep.subr.mxu0 0.0
        %2020 = vmatpush1.msra.mxu0 0.0
        %2021 = vmatprep.subr.mxu0 0.0
        %2022 = vmatpush1.msra.mxu0 0.0
        %2023 = vmatprep.subr.mxu0 0.0
        %2024 = vmatpush1.msra.mxu0 0.0
        %2025 = vmatprep.subr.mxu0 0.0
        %2026 = vmatpush1.msra.mxu0 0.0
        %2027 = vmatprep.subr.mxu0 0.0
        %2028 = vmatpush1.msra.mxu0 0.0
        %2029 = vmatprep.subr.mxu0 0.0
        %2030 = vmatpush1.msra.mxu0 0.0
        %2031 = vmatprep.subr.mxu0 0.0
        %2032 = vmatpush1.msra.mxu0 0.0
        %2033 = vmatprep.subr.mxu0 0.0
        %2034 = vmatpush1.msra.mxu0 0.0
        %2035 = vmatprep.subr.mxu0 0.0
        %2036 = vmatpush1.msra.mxu0 0.0
        %2037 = vmatprep.subr.mxu0 0.0
        %2038 = vmatpush1.msra.mxu0 0.0
        %2039 = vmatprep.subr.mxu0 0.0
        %2040 = vmatpush1.msra.mxu0 0.0
        %2041 = vmatprep.subr.mxu0 0.0
        %2042 = vmatpush1.msra.mxu0 0.0
        %2043 = vmatprep.subr.mxu0 0.0
        %2044 = vmatpush1.msra.mxu0 0.0
        %2045 = vmatprep.subr.mxu0 0.0
        %2046 = vmatpush1.msra.mxu0 0.0
        %2047 = vmatprep.subr.mxu0 0.0
        %2048 = vmatpush1.msra.mxu0 0.0
        %2049 = vmatprep.subr.mxu0 0.0
        %2050 = vmatpush1.msra.mxu0 0.0
        %2051 = vmatprep.subr.mxu0 0.0
        %2052 = vmatpush1.msra.mxu0 0.0
        %2053 = vmatprep.subr.mxu0 0.0
        %2054 = vmatpush1.msra.mxu0 0.0
        %2055 = vmatprep.subr.mxu0 0.0
        %2056 = vmatpush1.msra.mxu0 0.0
        %2057 = vmatprep.subr.mxu0 0.0
        %2058 = vmatpush1.msra.mxu0 0.0
        %2059 = vmatprep.subr.mxu0 0.0
        %2060 = vmatpush1.msra.mxu0 0.0
        %2061 = vmatprep.subr.mxu0 0.0
        %2062 = vmatpush1.msra.mxu0 0.0
        %2063 = vmatprep.subr.mxu0 0.0
        %2064 = vmatpush1.msra.mxu0 0.0
        %2065 = vmatprep.subr.mxu0 0.0
        %2066 = vmatpush1.msra.mxu0 0.0
        %2067 = vmatprep.subr.mxu0 0.0
        %2068 = vmatpush1.msra.mxu0 0.0
        %2069 = vmatprep.subr.mxu0 0.0
        %2070 = vmatpush1.msra.mxu0 0.0
        %2071 = vmatprep.mubr.f32.mxu0 0.0
        %2072 = vmatmul.mubr.f32.gmra.mrb[0].mxu0 %v2002
        %v2073 = vpop.f32.mrb[0].mxu0
        %v2074 = vadd.f32 0.0, %v2073
        %v2075 = vpop.f32.mrb[0].mxu0
        %2076 = vmatprep.mubr.f32.mxu0 0.0
        %2077 = vmatmul.mubr.f32.gmra.mrb[0].mxu0 %v2005
        %v2078 = vpop.f32.mrb[0].mxu0
        %v2079 = vadd.f32 0.0, %v2078
        %v2080 = vpop.f32.mrb[0].mxu0
        %2081 = vdwg.mxu0
        %v2082 = vadd.f32 %v1669, %v2074
        %v2083 = vadd.f32 %v1670, %v2079
        %2084 = vrot.lane.b32.xlu0 %v830, 104
        %v2085 = vpop.permute.xlu0 %2084
        %2086 = vrot.lane.b32.xlu0 %v822, 72
        %v2087 = vpop.permute.xlu0 %2086
        %v2088 = vsel %vm847, %v2085, 0
        %v2090 = vsel %vm847, %v2087, 0
        %2092 = vmatprep.subr.mxu0 0.0
        %2093 = vmatpush1.xpose.msra.mxu0 %v2090
        %2094 = vmatprep.subr.mxu0 0.0
        %2095 = vmatpush1.xpose.msra.mxu0 0.0
        %2096 = vmatprep.subr.mxu0 0.0
        %2097 = vmatpush1.xpose.msra.mxu0 0.0
        %2098 = vmatprep.subr.mxu0 0.0
        %2099 = vmatpush1.xpose.msra.mxu0 0.0
        %2100 = vmatprep.subr.mxu0 0.0
        %2101 = vmatpush1.xpose.msra.mxu0 0.0
        %2102 = vmatprep.subr.mxu0 0.0
        %2103 = vmatpush1.xpose.msra.mxu0 0.0
        %2104 = vmatprep.subr.mxu0 0.0
        %2105 = vmatpush1.xpose.msra.mxu0 0.0
        %2106 = vmatprep.subr.mxu0 0.0
        %2107 = vmatpush1.xpose.msra.mxu0 0.0
        %2108 = vmatprep.subr.mxu0 0.0
        %2109 = vmatpush1.xpose.msra.mxu0 0.0
        %2110 = vmatprep.subr.mxu0 0.0
        %2111 = vmatpush1.xpose.msra.mxu0 0.0
        %2112 = vmatprep.subr.mxu0 0.0
        %2113 = vmatpush1.xpose.msra.mxu0 0.0
        %2114 = vmatprep.subr.mxu0 0.0
        %2115 = vmatpush1.xpose.msra.mxu0 0.0
        %2116 = vmatprep.subr.mxu0 0.0
        %2117 = vmatpush1.xpose.msra.mxu0 0.0
        %2118 = vmatprep.subr.mxu0 0.0
        %2119 = vmatpush1.xpose.msra.mxu0 0.0
        %2120 = vmatprep.subr.mxu0 0.0
        %2121 = vmatpush1.xpose.msra.mxu0 0.0
        %2122 = vmatprep.subr.mxu0 0.0
        %2123 = vmatpush1.xpose.msra.mxu0 0.0
        %2124 = vmatprep.subr.mxu0 0.0
        %2125 = vmatpush1.xpose.msra.mxu0 0.0
        %2126 = vmatprep.subr.mxu0 0.0
        %2127 = vmatpush1.xpose.msra.mxu0 0.0
        %2128 = vmatprep.subr.mxu0 0.0
        %2129 = vmatpush1.xpose.msra.mxu0 0.0
        %2130 = vmatprep.subr.mxu0 0.0
        %2131 = vmatpush1.xpose.msra.mxu0 0.0
        %2132 = vmatprep.subr.mxu0 0.0
        %2133 = vmatpush1.xpose.msra.mxu0 0.0
        %2134 = vmatprep.subr.mxu0 0.0
        %2135 = vmatpush1.xpose.msra.mxu0 0.0
        %2136 = vmatprep.subr.mxu0 0.0
        %2137 = vmatpush1.xpose.msra.mxu0 0.0
        %2138 = vmatprep.subr.mxu0 0.0
        %2139 = vmatpush1.xpose.msra.mxu0 0.0
        %2140 = vmatprep.subr.mxu0 0.0
        %2141 = vmatpush1.xpose.msra.mxu0 0.0
        %2142 = vmatprep.subr.mxu0 0.0
        %2143 = vmatpush1.xpose.msra.mxu0 0.0
        %2144 = vmatprep.subr.mxu0 0.0
        %2145 = vmatpush1.xpose.msra.mxu0 0.0
        %2146 = vmatprep.subr.mxu0 0.0
        %2147 = vmatpush1.xpose.msra.mxu0 0.0
        %2148 = vmatprep.subr.mxu0 0.0
        %2149 = vmatpush1.xpose.msra.mxu0 0.0
        %2150 = vmatprep.subr.mxu0 0.0
        %2151 = vmatpush1.xpose.msra.mxu0 0.0
        %2152 = vmatprep.subr.mxu0 0.0
        %2153 = vmatpush1.xpose.msra.mxu0 0.0
        %2154 = vmatprep.subr.mxu0 0.0
        %2155 = vmatpush1.xpose.msra.mxu0 0.0
        %2156 = vmatprep.mubr.f32.mxu0 0.0
        %2157 = vmatmul.mubr.f32.gmra.mrb[0].mxu0 %v2088
        %v2158 = vpop.f32.mrb[0].mxu0
        %v2159 = vadd.f32 0.0, %v2158
        %v2160 = vpop.f32.mrb[0].mxu0
        %2161 = vdwg.mxu0
        %2162 = vrot.lane.b32.xlu0 %v831, 104
        %v2163 = vpop.permute.xlu0 %2162
        %2164 = vrot.lane.b32.xlu0 %v827, 72
        %v2165 = vpop.permute.xlu0 %2164
        %v2166 = vsel %vm847, %v2163, 0
        %v2168 = vsel %vm847, %v2165, 0
        %2170 = vmatprep.subr.mxu0 0.0
        %2171 = vmatpush1.xpose.msra.mxu0 %v2168
        %2172 = vmatprep.subr.mxu0 0.0
        %2173 = vmatpush1.xpose.msra.mxu0 0.0
        %2174 = vmatprep.subr.mxu0 0.0
        %2175 = vmatpush1.xpose.msra.mxu0 0.0
        %2176 = vmatprep.subr.mxu0 0.0
        %2177 = vmatpush1.xpose.msra.mxu0 0.0
        %2178 = vmatprep.subr.mxu0 0.0
        %2179 = vmatpush1.xpose.msra.mxu0 0.0
        %2180 = vmatprep.subr.mxu0 0.0
        %2181 = vmatpush1.xpose.msra.mxu0 0.0
        %2182 = vmatprep.subr.mxu0 0.0
        %2183 = vmatpush1.xpose.msra.mxu0 0.0
        %2184 = vmatprep.subr.mxu0 0.0
        %2185 = vmatpush1.xpose.msra.mxu0 0.0
        %2186 = vmatprep.subr.mxu0 0.0
        %2187 = vmatpush1.xpose.msra.mxu0 0.0
        %2188 = vmatprep.subr.mxu0 0.0
        %2189 = vmatpush1.xpose.msra.mxu0 0.0
        %2190 = vmatprep.subr.mxu0 0.0
        %2191 = vmatpush1.xpose.msra.mxu0 0.0
        %2192 = vmatprep.subr.mxu0 0.0
        %2193 = vmatpush1.xpose.msra.mxu0 0.0
        %2194 = vmatprep.subr.mxu0 0.0
        %2195 = vmatpush1.xpose.msra.mxu0 0.0
        %2196 = vmatprep.subr.mxu0 0.0
        %2197 = vmatpush1.xpose.msra.mxu0 0.0
        %2198 = vmatprep.subr.mxu0 0.0
        %2199 = vmatpush1.xpose.msra.mxu0 0.0
        %2200 = vmatprep.subr.mxu0 0.0
        %2201 = vmatpush1.xpose.msra.mxu0 0.0
        %2202 = vmatprep.subr.mxu0 0.0
        %2203 = vmatpush1.xpose.msra.mxu0 0.0
        %2204 = vmatprep.subr.mxu0 0.0
        %2205 = vmatpush1.xpose.msra.mxu0 0.0
        %2206 = vmatprep.subr.mxu0 0.0
        %2207 = vmatpush1.xpose.msra.mxu0 0.0
        %2208 = vmatprep.subr.mxu0 0.0
        %2209 = vmatpush1.xpose.msra.mxu0 0.0
        %2210 = vmatprep.subr.mxu0 0.0
        %2211 = vmatpush1.xpose.msra.mxu0 0.0
        %2212 = vmatprep.subr.mxu0 0.0
        %2213 = vmatpush1.xpose.msra.mxu0 0.0
        %2214 = vmatprep.subr.mxu0 0.0
        %2215 = vmatpush1.xpose.msra.mxu0 0.0
        %2216 = vmatprep.subr.mxu0 0.0
        %2217 = vmatpush1.xpose.msra.mxu0 0.0
        %2218 = vmatprep.subr.mxu0 0.0
        %2219 = vmatpush1.xpose.msra.mxu0 0.0
        %2220 = vmatprep.subr.mxu0 0.0
        %2221 = vmatpush1.xpose.msra.mxu0 0.0
        %2222 = vmatprep.subr.mxu0 0.0
        %2223 = vmatpush1.xpose.msra.mxu0 0.0
        %2224 = vmatprep.subr.mxu0 0.0
        %2225 = vmatpush1.xpose.msra.mxu0 0.0
        %2226 = vmatprep.subr.mxu0 0.0
        %2227 = vmatpush1.xpose.msra.mxu0 0.0
        %2228 = vmatprep.subr.mxu0 0.0
        %2229 = vmatpush1.xpose.msra.mxu0 0.0
        %2230 = vmatprep.subr.mxu0 0.0
        %2231 = vmatpush1.xpose.msra.mxu0 0.0
        %2232 = vmatprep.subr.mxu0 0.0
        %2233 = vmatpush1.xpose.msra.mxu0 0.0
        %2234 = vmatprep.mubr.f32.mxu0 0.0
        %2235 = vmatmul.mubr.f32.gmra.mrb[0].mxu0 %v2166
        %v2236 = vpop.f32.mrb[0].mxu0
        %v2237 = vadd.f32 0.0, %v2236
        %v2238 = vpop.f32.mrb[0].mxu0
        %2239 = vdwg.mxu0
        %v2240 = vsel %vm847, %v2159, -inf
        %2241 = vmax.xlane.f32.xlu0 %v2240
        %v2242 = vpop.xlane.xlu0 %2241
        %v2243 = vsel %vm847, %v2237, -inf
        %2244 = vmax.xlane.f32.xlu0 %v2243
        %v2245 = vpop.xlane.xlu0 %2244
        %v2246 = vsub.f32 %v2159, %v2242
        %v2247 = vsub.f32 %v2237, %v2245
        %v2248 = vmul.f32 %v2246, 1.442695
        %v2249 = vpow.pop %v2248
        %v2250 = vmul.f32 %v2247, 1.442695
        %v2251 = vpow.pop %v2250
        %v2252 = vsel %vm847, %v2249, 0.0
        %2253 = vadd.xlane.f32.xlu0 %v2252
        %v2254 = vpop.xlane.xlu0 %2253
        %v2255 = vsel %vm847, %v2251, 0.0
        %2256 = vadd.xlane.f32.xlu0 %v2255
        %v2257 = vpop.xlane.xlu0 %2256
        %v2258 = vrcp.pop %v2254
        %v2259 = vrcp.pop %v2257
        %v2260 = vmul.f32 %v2249, %v2258
        %v2261 = vmul.f32 %v2251, %v2259
        %2262 = vrot.lane.b32.xlu0 %v822, 40
        %v2263 = vpop.permute.xlu0 %2262
        %v2266 = vsel %vm847, %v2260, 0
        %2268 = vmatprep.subr.mxu0 0.0
        %2269 = vmatpush1.msra.mxu0 %v2263
        %2270 = vmatprep.subr.mxu0 0.0
        %2271 = vmatpush1.msra.mxu0 0.0
        %2272 = vmatprep.subr.mxu0 0.0
        %2273 = vmatpush1.msra.mxu0 0.0
        %2274 = vmatprep.subr.mxu0 0.0
        %2275 = vmatpush1.msra.mxu0 0.0
        %2276 = vmatprep.subr.mxu0 0.0
        %2277 = vmatpush1.msra.mxu0 0.0
        %2278 = vmatprep.subr.mxu0 0.0
        %2279 = vmatpush1.msra.mxu0 0.0
        %2280 = vmatprep.subr.mxu0 0.0
        %2281 = vmatpush1.msra.mxu0 0.0
        %2282 = vmatprep.subr.mxu0 0.0
        %2283 = vmatpush1.msra.mxu0 0.0
        %2284 = vmatprep.subr.mxu0 0.0
        %2285 = vmatpush1.msra.mxu0 0.0
        %2286 = vmatprep.subr.mxu0 0.0
        %2287 = vmatpush1.msra.mxu0 0.0
        %2288 = vmatprep.subr.mxu0 0.0
        %2289 = vmatpush1.msra.mxu0 0.0
        %2290 = vmatprep.subr.mxu0 0.0
        %2291 = vmatpush1.msra.mxu0 0.0
        %2292 = vmatprep.subr.mxu0 0.0
        %2293 = vmatpush1.msra.mxu0 0.0
        %2294 = vmatprep.subr.mxu0 0.0
        %2295 = vmatpush1.msra.mxu0 0.0
        %2296 = vmatprep.subr.mxu0 0.0
        %2297 = vmatpush1.msra.mxu0 0.0
        %2298 = vmatprep.subr.mxu0 0.0
        %2299 = vmatpush1.msra.mxu0 0.0
        %2300 = vmatprep.subr.mxu0 0.0
        %2301 = vmatpush1.msra.mxu0 0.0
        %2302 = vmatprep.subr.mxu0 0.0
        %2303 = vmatpush1.msra.mxu0 0.0
        %2304 = vmatprep.subr.mxu0 0.0
        %2305 = vmatpush1.msra.mxu0 0.0
        %2306 = vmatprep.subr.mxu0 0.0
        %2307 = vmatpush1.msra.mxu0 0.0
        %2308 = vmatprep.subr.mxu0 0.0
        %2309 = vmatpush1.msra.mxu0 0.0
        %2310 = vmatprep.subr.mxu0 0.0
        %2311 = vmatpush1.msra.mxu0 0.0
        %2312 = vmatprep.subr.mxu0 0.0
        %2313 = vmatpush1.msra.mxu0 0.0
        %2314 = vmatprep.subr.mxu0 0.0
        %2315 = vmatpush1.msra.mxu0 0.0
        %2316 = vmatprep.subr.mxu0 0.0
        %2317 = vmatpush1.msra.mxu0 0.0
        %2318 = vmatprep.subr.mxu0 0.0
        %2319 = vmatpush1.msra.mxu0 0.0
        %2320 = vmatprep.subr.mxu0 0.0
        %2321 = vmatpush1.msra.mxu0 0.0
        %2322 = vmatprep.subr.mxu0 0.0
        %2323 = vmatpush1.msra.mxu0 0.0
        %2324 = vmatprep.subr.mxu0 0.0
        %2325 = vmatpush1.msra.mxu0 0.0
        %2326 = vmatprep.subr.mxu0 0.0
        %2327 = vmatpush1.msra.mxu0 0.0
        %2328 = vmatprep.subr.mxu0 0.0
        %2329 = vmatpush1.msra.mxu0 0.0
        %2330 = vmatprep.subr.mxu0 0.0
        %2331 = vmatpush1.msra.mxu0 0.0
        %2332 = vmatprep.mubr.f32.mxu0 0.0
        %2333 = vmatmul.mubr.f32.gmra.mrb[0].mxu0 %v2266
        %v2334 = vpop.f32.mrb[0].mxu0
        %v2335 = vadd.f32 0.0, %v2334
        %v2336 = vpop.f32.mrb[0].mxu0
        %2337 = vdwg.mxu0
        %2338 = vrot.lane.b32.xlu0 %v827, 40
        %v2339 = vpop.permute.xlu0 %2338
        %v2342 = vsel %vm847, %v2261, 0
        %2344 = vmatprep.subr.mxu0 0.0
        %2345 = vmatpush1.msra.mxu0 %v2339
        %2346 = vmatprep.subr.mxu0 0.0
        %2347 = vmatpush1.msra.mxu0 0.0
        %2348 = vmatprep.subr.mxu0 0.0
        %2349 = vmatpush1.msra.mxu0 0.0
        %2350 = vmatprep.subr.mxu0 0.0
        %2351 = vmatpush1.msra.mxu0 0.0
        %2352 = vmatprep.subr.mxu0 0.0
        %2353 = vmatpush1.msra.mxu0 0.0
        %2354 = vmatprep.subr.mxu0 0.0
        %2355 = vmatpush1.msra.mxu0 0.0
        %2356 = vmatprep.subr.mxu0 0.0
        %2357 = vmatpush1.msra.mxu0 0.0
        %2358 = vmatprep.subr.mxu0 0.0
        %2359 = vmatpush1.msra.mxu0 0.0
        %2360 = vmatprep.subr.mxu0 0.0
        %2361 = vmatpush1.msra.mxu0 0.0
        %2362 = vmatprep.subr.mxu0 0.0
        %2363 = vmatpush1.msra.mxu0 0.0
        %2364 = vmatprep.subr.mxu0 0.0
        %2365 = vmatpush1.msra.mxu0 0.0
        %2366 = vmatprep.subr.mxu0 0.0
        %2367 = vmatpush1.msra.mxu0 0.0
        %2368 = vmatprep.subr.mxu0 0.0
        %2369 = vmatpush1.msra.mxu0 0.0
        %2370 = vmatprep.subr.mxu0 0.0
        %2371 = vmatpush1.msra.mxu0 0.0
        %2372 = vmatprep.subr.mxu0 0.0
        %2373 = vmatpush1.msra.mxu0 0.0
        %2374 = vmatprep.subr.mxu0 0.0
        %2375 = vmatpush1.msra.mxu0 0.0
        %2376 = vmatprep.subr.mxu0 0.0
        %2377 = vmatpush1.msra.mxu0 0.0
        %2378 = vmatprep.subr.mxu0 0.0
        %2379 = vmatpush1.msra.mxu0 0.0
        %2380 = vmatprep.subr.mxu0 0.0
        %2381 = vmatpush1.msra.mxu0 0.0
        %2382 = vmatprep.subr.mxu0 0.0
        %2383 = vmatpush1.msra.mxu0 0.0
        %2384 = vmatprep.subr.mxu0 0.0
        %2385 = vmatpush1.msra.mxu0 0.0
        %2386 = vmatprep.subr.mxu0 0.0
        %2387 = vmatpush1.msra.mxu0 0.0
        %2388 = vmatprep.subr.mxu0 0.0
        %2389 = vmatpush1.msra.mxu0 0.0
        %2390 = vmatprep.subr.mxu0 0.0
        %2391 = vmatpush1.msra.mxu0 0.0
        %2392 = vmatprep.subr.mxu0 0.0
        %2393 = vmatpush1.msra.mxu0 0.0
        %2394 = vmatprep.subr.mxu0 0.0
        %2395 = vmatpush1.msra.mxu0 0.0
        %2396 = vmatprep.subr.mxu0 0.0
        %2397 = vmatpush1.msra.mxu0 0.0
        %2398 = vmatprep.subr.mxu0 0.0
        %2399 = vmatpush1.msra.mxu0 0.0
        %2400 = vmatprep.subr.mxu0 0.0
        %2401 = vmatpush1.msra.mxu0 0.0
        %2402 = vmatprep.subr.mxu0 0.0
        %2403 = vmatpush1.msra.mxu0 0.0
        %2404 = vmatprep.subr.mxu0 0.0
        %2405 = vmatpush1.msra.mxu0 0.0
        %2406 = vmatprep.subr.mxu0 0.0
        %2407 = vmatpush1.msra.mxu0 0.0
        %2408 = vmatprep.mubr.f32.mxu0 0.0
        %2409 = vmatmul.mubr.f32.gmra.mrb[0].mxu0 %v2342
        %v2410 = vpop.f32.mrb[0].mxu0
        %v2411 = vadd.f32 0.0, %v2410
        %v2412 = vpop.f32.mrb[0].mxu0
        %2413 = vdwg.mxu0
        %v2415 = vsel %vm847, %v2335, 0
        %v2418 = vsel %vm847, %v2411, 0
        %2420 = vmatprep.subr.mxu0 0.0
        %2421 = vmatpush1.msra.mxu0 %v835
        %2422 = vmatprep.subr.mxu0 0.0
        %2423 = vmatpush1.msra.mxu0 0.0
        %2424 = vmatprep.subr.mxu0 0.0
        %2425 = vmatpush1.msra.mxu0 0.0
        %2426 = vmatprep.subr.mxu0 0.0
        %2427 = vmatpush1.msra.mxu0 0.0
        %2428 = vmatprep.subr.mxu0 0.0
        %2429 = vmatpush1.msra.mxu0 0.0
        %2430 = vmatprep.subr.mxu0 0.0
        %2431 = vmatpush1.msra.mxu0 0.0
        %2432 = vmatprep.subr.mxu0 0.0
        %2433 = vmatpush1.msra.mxu0 0.0
        %2434 = vmatprep.subr.mxu0 0.0
        %2435 = vmatpush1.msra.mxu0 0.0
        %2436 = vmatprep.subr.mxu0 0.0
        %2437 = vmatpush1.msra.mxu0 0.0
        %2438 = vmatprep.subr.mxu0 0.0
        %2439 = vmatpush1.msra.mxu0 0.0
        %2440 = vmatprep.subr.mxu0 0.0
        %2441 = vmatpush1.msra.mxu0 0.0
        %2442 = vmatprep.subr.mxu0 0.0
        %2443 = vmatpush1.msra.mxu0 0.0
        %2444 = vmatprep.subr.mxu0 0.0
        %2445 = vmatpush1.msra.mxu0 0.0
        %2446 = vmatprep.subr.mxu0 0.0
        %2447 = vmatpush1.msra.mxu0 0.0
        %2448 = vmatprep.subr.mxu0 0.0
        %2449 = vmatpush1.msra.mxu0 0.0
        %2450 = vmatprep.subr.mxu0 0.0
        %2451 = vmatpush1.msra.mxu0 0.0
        %2452 = vmatprep.subr.mxu0 0.0
        %2453 = vmatpush1.msra.mxu0 0.0
        %2454 = vmatprep.subr.mxu0 0.0
        %2455 = vmatpush1.msra.mxu0 0.0
        %2456 = vmatprep.subr.mxu0 0.0
        %2457 = vmatpush1.msra.mxu0 0.0
        %2458 = vmatprep.subr.mxu0 0.0
        %2459 = vmatpush1.msra.mxu0 0.0
        %2460 = vmatprep.subr.mxu0 0.0
        %2461 = vmatpush1.msra.mxu0 0.0
        %2462 = vmatprep.subr.mxu0 0.0
        %2463 = vmatpush1.msra.mxu0 0.0
        %2464 = vmatprep.subr.mxu0 0.0
        %2465 = vmatpush1.msra.mxu0 0.0
        %2466 = vmatprep.subr.mxu0 0.0
        %2467 = vmatpush1.msra.mxu0 0.0
        %2468 = vmatprep.subr.mxu0 0.0
        %2469 = vmatpush1.msra.mxu0 0.0
        %2470 = vmatprep.subr.mxu0 0.0
        %2471 = vmatpush1.msra.mxu0 0.0
        %2472 = vmatprep.subr.mxu0 0.0
        %2473 = vmatpush1.msra.mxu0 0.0
        %2474 = vmatprep.subr.mxu0 0.0
        %2475 = vmatpush1.msra.mxu0 0.0
        %2476 = vmatprep.subr.mxu0 0.0
        %2477 = vmatpush1.msra.mxu0 0.0
        %2478 = vmatprep.subr.mxu0 0.0
        %2479 = vmatpush1.msra.mxu0 0.0
        %2480 = vmatprep.subr.mxu0 0.0
        %2481 = vmatpush1.msra.mxu0 0.0
        %2482 = vmatprep.subr.mxu0 0.0
        %2483 = vmatpush1.msra.mxu0 0.0
        %2484 = vmatprep.mubr.f32.mxu0 0.0
        %2485 = vmatmul.mubr.f32.gmra.mrb[0].mxu0 %v2415
        %v2486 = vpop.f32.mrb[0].mxu0
        %v2487 = vadd.f32 0.0, %v2486
        %v2488 = vpop.f32.mrb[0].mxu0
        %2489 = vmatprep.mubr.f32.mxu0 0.0
        %2490 = vmatmul.mubr.f32.gmra.mrb[0].mxu0 %v2418
        %v2491 = vpop.f32.mrb[0].mxu0
        %v2492 = vadd.f32 0.0, %v2491
        %v2493 = vpop.f32.mrb[0].mxu0
        %2494 = vdwg.mxu0
        %v2495 = vadd.f32 %v2082, %v2487
        %v2496 = vadd.f32 %v2083, %v2492
        %v2497 = vadd.f32 %v735, %v2495
        %v2498 = vadd.f32 %v736, %v2496
        %v2499 = vld [vmem:[%s655] sm:$0x1]
        %v2500 = vld [vmem:[%s658] sm:$0x1]
        %v2501 = vsel %vm748, %v2497, 0.0
        %2502 = vadd.xlane.f32.xlu0 %v2501
        %v2503 = vpop.xlane.xlu0 %2502
        %v2504 = vsel %vm748, %v2498, 0.0
        %2505 = vadd.xlane.f32.xlu0 %v2504
        %v2506 = vpop.xlane.xlu0 %2505
        %v2507 = vrcp.pop 32.0
        %v2508 = vmul.f32 %v2503, %v2507
        %v2509 = vmul.f32 %v2506, %v2507
        %v2510 = vsub.f32 %v2497, %v2508
        %v2511 = vsub.f32 %v2498, %v2509
        %v2512 = vmul.f32 %v2510, %v2510
        %v2513 = vmul.f32 %v2511, %v2511
        %v2514 = vsel %vm748, %v2512, 0.0
        %2515 = vadd.xlane.f32.xlu0 %v2514
        %v2516 = vpop.xlane.xlu0 %2515
        %v2517 = vsel %vm748, %v2513, 0.0
        %2518 = vadd.xlane.f32.xlu0 %v2517
        %v2519 = vpop.xlane.xlu0 %2518
        %v2520 = vmul.f32 %v2516, %v2507
        %v2521 = vmul.f32 %v2519, %v2507
        %v2522 = vadd.f32 %v2520, 1e-12
        %v2523 = vadd.f32 %v2521, 1e-12
        %v2524 = vrsqrt.pop %v2522
        %v2525 = vrsqrt.pop %v2523
        %v2526 = vmul.f32 %v2510, %v2524
        %v2527 = vmul.f32 %v2511, %v2525
        %v2529 = vlaneseq
        %v2530 = vshrl.u32 %v2529, 7
        %v2531 = vsub.s32 0, %v2530
        %v2532 = vrot.slane %v2499, %v2531
        %v2534 = vmul.f32 %v2526, %v2532
        %v2535 = vmul.f32 %v2527, %v2532
        %v2537 = vlaneseq
        %v2538 = vshrl.u32 %v2537, 7
        %v2539 = vsub.s32 0, %v2538
        %v2540 = vrot.slane %v2500, %v2539
        %v2542 = vadd.f32 %v2534, %v2540
        %v2543 = vadd.f32 %v2535, %v2540
        %v2544 = vld [vmem:[%s663] sm:$0xff]
        %v2545 = vld [vmem:[%s663 + $0x8] sm:$0xff]
        %v2546 = vld [vmem:[%s663 + $0x10] sm:$0xff]
        %v2547 = vld [vmem:[%s663 + $0x18] sm:$0xff]
        %v2548 = vld [vmem:[%s666] sm:$0x1]
        %v2550 = vlaneseq
        %v2551 = vshrl.u32 %v2550, 7
        %v2552 = vsub.s32 0, %v2551
        %v2553 = vrot.slane %v2548, %v2552
        %v2556 = vsel %vm748, %v2542, 0
        %v2559 = vsel %vm748, %v2543, 0
        %2561 = vmatprep.subr.mxu0 0.0
        %2562 = vmatpush1.msra.mxu0 %v2544
        %2563 = vmatprep.subr.mxu0 0.0
        %2564 = vmatpush1.msra.mxu0 %v2545
        %2565 = vmatprep.subr.mxu0 0.0
        %2566 = vmatpush1.msra.mxu0 %v2546
        %2567 = vmatprep.subr.mxu0 0.0
        %2568 = vmatpush1.msra.mxu0 %v2547
        %2569 = vmatprep.subr.mxu0 0.0
        %2570 = vmatpush1.msra.mxu0 0.0
        %2571 = vmatprep.subr.mxu0 0.0
        %2572 = vmatpush1.msra.mxu0 0.0
        %2573 = vmatprep.subr.mxu0 0.0
        %2574 = vmatpush1.msra.mxu0 0.0
        %2575 = vmatprep.subr.mxu0 0.0
        %2576 = vmatpush1.msra.mxu0 0.0
        %2577 = vmatprep.subr.mxu0 0.0
        %2578 = vmatpush1.msra.mxu0 0.0
        %2579 = vmatprep.subr.mxu0 0.0
        %2580 = vmatpush1.msra.mxu0 0.0
        %2581 = vmatprep.subr.mxu0 0.0
        %2582 = vmatpush1.msra.mxu0 0.0
        %2583 = vmatprep.subr.mxu0 0.0
        %2584 = vmatpush1.msra.mxu0 0.0
        %2585 = vmatprep.subr.mxu0 0.0
        %2586 = vmatpush1.msra.mxu0 0.0
        %2587 = vmatprep.subr.mxu0 0.0
        %2588 = vmatpush1.msra.mxu0 0.0
        %2589 = vmatprep.subr.mxu0 0.0
        %2590 = vmatpush1.msra.mxu0 0.0
        %2591 = vmatprep.subr.mxu0 0.0
        %2592 = vmatpush1.msra.mxu0 0.0
        %2593 = vmatprep.subr.mxu0 0.0
        %2594 = vmatpush1.msra.mxu0 0.0
        %2595 = vmatprep.subr.mxu0 0.0
        %2596 = vmatpush1.msra.mxu0 0.0
        %2597 = vmatprep.subr.mxu0 0.0
        %2598 = vmatpush1.msra.mxu0 0.0
        %2599 = vmatprep.subr.mxu0 0.0
        %2600 = vmatpush1.msra.mxu0 0.0
        %2601 = vmatprep.subr.mxu0 0.0
        %2602 = vmatpush1.msra.mxu0 0.0
        %2603 = vmatprep.subr.mxu0 0.0
        %2604 = vmatpush1.msra.mxu0 0.0
        %2605 = vmatprep.subr.mxu0 0.0
        %2606 = vmatpush1.msra.mxu0 0.0
        %2607 = vmatprep.subr.mxu0 0.0
        %2608 = vmatpush1.msra.mxu0 0.0
        %2609 = vmatprep.subr.mxu0 0.0
        %2610 = vmatpush1.msra.mxu0 0.0
        %2611 = vmatprep.subr.mxu0 0.0
        %2612 = vmatpush1.msra.mxu0 0.0
        %2613 = vmatprep.subr.mxu0 0.0
        %2614 = vmatpush1.msra.mxu0 0.0
        %2615 = vmatprep.subr.mxu0 0.0
        %2616 = vmatpush1.msra.mxu0 0.0
        %2617 = vmatprep.subr.mxu0 0.0
        %2618 = vmatpush1.msra.mxu0 0.0
        %2619 = vmatprep.subr.mxu0 0.0
        %2620 = vmatpush1.msra.mxu0 0.0
        %2621 = vmatprep.subr.mxu0 0.0
        %2622 = vmatpush1.msra.mxu0 0.0
        %2623 = vmatprep.subr.mxu0 0.0
        %2624 = vmatpush1.msra.mxu0 0.0
        %2625 = vmatprep.mubr.f32.mxu0 0.0
        %2626 = vmatmul.mubr.f32.gmra.mrb[0].mxu0 %v2556
        %v2627 = vpop.f32.mrb[0].mxu0
        %v2628 = vadd.f32 %v2553, %v2627
        %v2629 = vpop.f32.mrb[0].mxu0
        %2630 = vmatprep.mubr.f32.mxu0 0.0
        %2631 = vmatmul.mubr.f32.gmra.mrb[0].mxu0 %v2559
        %v2632 = vpop.f32.mrb[0].mxu0
        %v2633 = vadd.f32 %v2553, %v2632
        %v2634 = vpop.f32.mrb[0].mxu0
        %2635 = vdwg.mxu0
        %v2636 = vmul.f32 %v2628, 0.5
        %v2637 = vmul.f32 %v2633, 0.5
        %v2638 = vmul.f32 %v2628, 0.70710677
        %v2639 = vmul.f32 %v2633, 0.70710677
        %v2640 = verf.f32.pop %v2638
        %v2641 = verf.f32.pop %v2639
        %v2642 = vadd.f32 %v2640, 1.0
        %v2643 = vadd.f32 %v2641, 1.0
        %v2644 = vmul.f32 %v2636, %v2642
        %v2645 = vmul.f32 %v2637, %v2643
        %v2646 = vld [vmem:[%s671] sm:$0xff]
        %v2647 = vld [vmem:[%s671 + $0x8] sm:$0xff]
        %v2648 = vld [vmem:[%s671 + $0x10] sm:$0xff]
        %v2649 = vld [vmem:[%s671 + $0x18] sm:$0xff]
        %v2650 = vld [vmem:[%s671 + $0x20] sm:$0xff]
        %v2651 = vld [vmem:[%s671 + $0x28] sm:$0xff]
        %v2652 = vld [vmem:[%s671 + $0x30] sm:$0xff]
        %v2653 = vld [vmem:[%s671 + $0x38] sm:$0xff]
        %v2654 = vld [vmem:[%s674] sm:$0x1]
        %v2656 = vlaneseq
        %v2657 = vshrl.u32 %v2656, 7
        %v2658 = vsub.s32 0, %v2657
        %v2659 = vrot.slane %v2654, %v2658
        %vm2661 = vcmask 523264
        %v2663 = vsel %vm2661, %v2644, 0
        %v2666 = vsel %vm2661, %v2645, 0
        %2668 = vmatprep.subr.mxu0 0.0
        %2669 = vmatpush1.msra.mxu0 %v2646
        %2670 = vmatprep.subr.mxu0 0.0
        %2671 = vmatpush1.msra.mxu0 %v2647
        %2672 = vmatprep.subr.mxu0 0.0
        %2673 = vmatpush1.msra.mxu0 %v2648
        %2674 = vmatprep.subr.mxu0 0.0
        %2675 = vmatpush1.msra.mxu0 %v2649
        %2676 = vmatprep.subr.mxu0 0.0
        %2677 = vmatpush1.msra.mxu0 %v2650
        %2678 = vmatprep.subr.mxu0 0.0
        %2679 = vmatpush1.msra.mxu0 %v2651
        %2680 = vmatprep.subr.mxu0 0.0
        %2681 = vmatpush1.msra.mxu0 %v2652
        %2682 = vmatprep.subr.mxu0 0.0
        %2683 = vmatpush1.msra.mxu0 %v2653
        %2684 = vmatprep.subr.mxu0 0.0
        %2685 = vmatpush1.msra.mxu0 0.0
        %2686 = vmatprep.subr.mxu0 0.0
        %2687 = vmatpush1.msra.mxu0 0.0
        %2688 = vmatprep.subr.mxu0 0.0
        %2689 = vmatpush1.msra.mxu0 0.0
        %2690 = vmatprep.subr.mxu0 0.0
        %2691 = vmatpush1.msra.mxu0 0.0
        %2692 = vmatprep.subr.mxu0 0.0
        %2693 = vmatpush1.msra.mxu0 0.0
        %2694 = vmatprep.subr.mxu0 0.0
        %2695 = vmatpush1.msra.mxu0 0.0
        %2696 = vmatprep.subr.mxu0 0.0
        %2697 = vmatpush1.msra.mxu0 0.0
        %2698 = vmatprep.subr.mxu0 0.0
        %2699 = vmatpush1.msra.mxu0 0.0
        %2700 = vmatprep.subr.mxu0 0.0
        %2701 = vmatpush1.msra.mxu0 0.0
        %2702 = vmatprep.subr.mxu0 0.0
        %2703 = vmatpush1.msra.mxu0 0.0
        %2704 = vmatprep.subr.mxu0 0.0
        %2705 = vmatpush1.msra.mxu0 0.0
        %2706 = vmatprep.subr.mxu0 0.0
        %2707 = vmatpush1.msra.mxu0 0.0
        %2708 = vmatprep.subr.mxu0 0.0
        %2709 = vmatpush1.msra.mxu0 0.0
        %2710 = vmatprep.subr.mxu0 0.0
        %2711 = vmatpush1.msra.mxu0 0.0
        %2712 = vmatprep.subr.mxu0 0.0
        %2713 = vmatpush1.msra.mxu0 0.0
        %2714 = vmatprep.subr.mxu0 0.0
        %2715 = vmatpush1.msra.mxu0 0.0
        %2716 = vmatprep.subr.mxu0 0.0
        %2717 = vmatpush1.msra.mxu0 0.0
        %2718 = vmatprep.subr.mxu0 0.0
        %2719 = vmatpush1.msra.mxu0 0.0
        %2720 = vmatprep.subr.mxu0 0.0
        %2721 = vmatpush1.msra.mxu0 0.0
        %2722 = vmatprep.subr.mxu0 0.0
        %2723 = vmatpush1.msra.mxu0 0.0
        %2724 = vmatprep.subr.mxu0 0.0
        %2725 = vmatpush1.msra.mxu0 0.0
        %2726 = vmatprep.subr.mxu0 0.0
        %2727 = vmatpush1.msra.mxu0 0.0
        %2728 = vmatprep.subr.mxu0 0.0
        %2729 = vmatpush1.msra.mxu0 0.0
        %2730 = vmatprep.subr.mxu0 0.0
        %2731 = vmatpush1.msra.mxu0 0.0
        %2732 = vmatprep.mubr.f32.mxu0 0.0
        %2733 = vmatmul.mubr.f32.gmra.mrb[0].mxu0 %v2663
        %v2734 = vpop.f32.mrb[0].mxu0
        %v2735 = vadd.f32 %v2659, %v2734
        %v2736 = vpop.f32.mrb[0].mxu0
        %2737 = vmatprep.mubr.f32.mxu0 0.0
        %2738 = vmatmul.mubr.f32.gmra.mrb[0].mxu0 %v2666
        %v2739 = vpop.f32.mrb[0].mxu0
        %v2740 = vadd.f32 %v2659, %v2739
        %v2741 = vpop.f32.mrb[0].mxu0
        %2742 = vdwg.mxu0
        %v2743 = vadd.f32 %v2542, %v2735
        %v2744 = vadd.f32 %v2543, %v2740
        %v2745 = vld [vmem:[%s677] sm:$0x1]
        %v2746 = vld [vmem:[%s680] sm:$0x1]
        %v2747 = vsel %vm748, %v2743, 0.0
        %2748 = vadd.xlane.f32.xlu0 %v2747
        %v2749 = vpop.xlane.xlu0 %2748
        %v2750 = vsel %vm748, %v2744, 0.0
        %2751 = vadd.xlane.f32.xlu0 %v2750
        %v2752 = vpop.xlane.xlu0 %2751
        %v2753 = vmul.f32 %v2749, %v2507
        %v2754 = vmul.f32 %v2752, %v2507
        %v2755 = vsub.f32 %v2743, %v2753
        %v2756 = vsub.f32 %v2744, %v2754
        %v2757 = vmul.f32 %v2755, %v2755
        %v2758 = vmul.f32 %v2756, %v2756
        %v2759 = vsel %vm748, %v2757, 0.0
        %2760 = vadd.xlane.f32.xlu0 %v2759
        %v2761 = vpop.xlane.xlu0 %2760
        %v2762 = vsel %vm748, %v2758, 0.0
        %2763 = vadd.xlane.f32.xlu0 %v2762
        %v2764 = vpop.xlane.xlu0 %2763
        %v2765 = vmul.f32 %v2761, %v2507
        %v2766 = vmul.f32 %v2764, %v2507
        %v2767 = vadd.f32 %v2765, 1e-12
        %v2768 = vadd.f32 %v2766, 1e-12
        %v2769 = vrsqrt.pop %v2767
        %v2770 = vrsqrt.pop %v2768
        %v2771 = vmul.f32 %v2755, %v2769
        %v2772 = vmul.f32 %v2756, %v2770
        %v2774 = vlaneseq
        %v2775 = vshrl.u32 %v2774, 7
        %v2776 = vsub.s32 0, %v2775
        %v2777 = vrot.slane %v2745, %v2776
        %v2779 = vmul.f32 %v2771, %v2777
        %v2780 = vmul.f32 %v2772, %v2777
        %v2782 = vlaneseq
        %v2783 = vshrl.u32 %v2782, 7
        %v2784 = vsub.s32 0, %v2783
        %v2785 = vrot.slane %v2746, %v2784
        %v2787 = vadd.f32 %v2779, %v2785
        %v2788 = vadd.f32 %v2780, %v2785
        %2789 = vst.msk [vmem:[#allocation2] sm:$0xff] %vm748, %v2787
        %2790 = vst.msk [vmem:[#allocation2 + $0x8] sm:$0xff] %vm748, %v2788
        %p2791 = scmp.eq.s32.totalorder %s29, 3
        // Predicated region
        $region93: #{tpu_custom_call.1} parent=79 // pred_check
          %p2792 = pneg %p2791
        $region94: #{tpu_custom_call.1} parent=79 // pred_check_branch
          %2794 = sbr.rel (%p2792) target = $region96
        $region95: #{tpu_custom_call.1} parent=79 // pred_region
          %v2795 = vsel %vm748, %v2787, 0.0
          %v2796 = vrot.slane %v2795, 4
          %v2797 = vadd.f32 %v2795, %v2796
          %v2798 = vrot.slane %v2797, 2
          %v2799 = vadd.f32 %v2797, %v2798
          %v2800 = vrot.slane %v2799, 1
          %v2801 = vadd.f32 %v2799, %v2800
          %v2802 = vsel %vm748, %v2788, 0.0
          %v2803 = vrot.slane %v2802, 4
          %v2804 = vadd.f32 %v2802, %v2803
          %v2805 = vrot.slane %v2804, 2
          %v2806 = vadd.f32 %v2804, %v2805
          %v2807 = vrot.slane %v2806, 1
          %v2808 = vadd.f32 %v2806, %v2807
          %v2809 = vrcp.pop 8.0
          %v2810 = vmul.f32 %v2801, %v2809
          %v2811 = vmul.f32 %v2808, %v2809
          %vm2814 = vcmask 1041409
          %v2815 = vsel %vm2814, %v2811, %v2810
          %vm2817 = vcmask 254976
          %2818 = vst.msk [vmem:[#allocation8] sm:$0x3] %vm2817, %v2815
        $region96: #{tpu_custom_call.1} parent=79 // pred_fallthru
          _
        // Predicated region
        $region97: #{tpu_custom_call.1} parent=79 // pred_check
          %p2819 = pneg %p417
        $region98: #{tpu_custom_call.1} parent=79 // pred_check_branch
          %2821 = sbr.rel (%p2819) target = $region100
        $region99: #{tpu_custom_call.1} parent=79 // pred_region
          %s2823 = ssub.s32 32, 32
          %2824 = vsyncadd [#allocation5], %s2823
          %s2826 = sshll.u32 [#allocation8], 4
          %s2827 = int_to_ptr.vmem [resolvable:$true] %s2826
          %2829 = dma.vmem_to_hbm [thread:$0]  %s2827, 32, %s15, [#allocation5]
        $region100: #{tpu_custom_call.1} parent=79 // pred_fallthru
          _
        // Predicated region
        $region101: #{tpu_custom_call.1} parent=79 // pred_check
          %p2830 = pneg %p417
        $region102: #{tpu_custom_call.1} parent=79 // pred_check_branch
          %2832 = sbr.rel (%p2830) target = $region104
        $region103: #{tpu_custom_call.1} parent=79 // pred_region
          %2833 = dma.done [#allocation5], 32
        $region104: #{tpu_custom_call.1} parent=79 // pred_fallthru
          _
      $region80: #{tpu_custom_call.1} parent=5 // pred_fallthru
        _
      %p2834 = scmp.le.s32.totalorder 2, %s24
      // Predicated region
      $region105: #{tpu_custom_call.1} parent=5 // pred_check
        %p2835 = pneg %p2834
      $region106: #{tpu_custom_call.1} parent=5 // pred_check_branch
        %2837 = sbr.rel (%p2835) target = $region108
      $region107: #{tpu_custom_call.1} parent=5 // pred_region
        %s2838 = ssub.s32 %s24, 2
      $region108: #{tpu_custom_call.1} parent=5 // pred_fallthru
        _
    $region6: #{tpu_custom_call.1} parent=1 // loop_footer
      %s28 = sadd.s32 1, %s24
    $region7: #{tpu_custom_call.1} parent=1 // loop_footer_branch
      %23 = sbr.rel target = $region3
    $region8: #{tpu_custom_call.1} parent=1 // loop_exit
      _
    %2839 = vsyncpa [#allocation4], 1
    %s2840 = scalar_lea.sflag [#allocation4], 1
    %2841 = vsyncpa %s2840, 1
    %2842 = vsyncpa [#allocation7], 1
    %2843 = vsyncpa [#allocation5], 1
    %s2844 = scalar_lea.sflag [#allocation5], 1
    %2845 = vsyncpa %s2844, 1

</llo_original>
